<compile_context>
chip_gen: v7x
topology: tpu7x:2x2x1
jax: 0.10.0
libtpu: 0.0.40
codegen_flags: <defaults>
</compile_context>

<pallas_src>
from functools import partial

import jax
import jax.numpy as jnp
from jax.experimental import pallas as pl
from jax.experimental.pallas import tpu as pltpu


def _upblock_kernel(zp_ref, w1_ref, b1_ref, w2_ref, b2_ref, wup_ref, bup_ref,
                    o_ref, h1p_ref):
    # zp_ref : (H+2, W+2, 2*Cin)   spatially padded cat([skip, x], C)  (NHWC)
    # w1_ref : (9*2*Cin, Cmid)     conv1 weights, row order (ky, kx, cin)
    # w2_ref : (9*Cmid,  Cmid)     conv2 weights, row order (ky, kx, cin)
    # wup_ref: (2, Cmid, 2*Cout)   upconv weights, [ky][cin][(kx, cout)]
    # b*_ref : (1, C) f32 biases (bup tiled over kx)
    # o_ref  : (H, 2, W, 2*Cout)   out[h, ky, w, kx*Cout+o] = y[2h+ky, 2w+kx, o]
    # h1p_ref: VMEM scratch (H+2, W+2, Cmid) for conv2's padded input
    Hp, Wp, _ = zp_ref.shape
    H, W = Hp - 2, Wp - 2
    Cmid = w1_ref.shape[1]
    M = H * W
    cdt = zp_ref.dtype                      # MXU operand dtype (f32 or bf16)

    zp = zp_ref[...]

    # ---- conv1: im2col over the 3x3 taps -> single large-K matmul ----
    patches1 = jnp.concatenate(
        [zp[dy:dy + H, dx:dx + W, :].reshape(M, zp.shape[-1])
         for dy in range(3) for dx in range(3)], axis=1)        # (M, 9*2Cin)
    acc1 = jnp.dot(patches1, w1_ref[...], preferred_element_type=jnp.float32)
    h1 = jnp.maximum(acc1 + b1_ref[...], 0.0)                   # (M, Cmid) f32

    # ---- stage conv1 output into the padded scratch ----
    # Zero only the 1-pixel border ring (cheap), interior is fully rewritten.
    h1p_ref[0, :, :] = jnp.zeros((Wp, Cmid), cdt)
    h1p_ref[Hp - 1, :, :] = jnp.zeros((Wp, Cmid), cdt)
    h1p_ref[:, 0, :] = jnp.zeros((Hp, Cmid), cdt)
    h1p_ref[:, Wp - 1, :] = jnp.zeros((Hp, Cmid), cdt)
    h1p_ref[1:1 + H, 1:1 + W, :] = h1.reshape(H, W, Cmid).astype(cdt)

    # ---- conv2: same im2col trick -> single matmul ----
    h1p = h1p_ref[...]
    patches2 = jnp.concatenate(
        [h1p[dy:dy + H, dx:dx + W, :].reshape(M, Cmid)
         for dy in range(3) for dx in range(3)], axis=1)        # (M, 9*Cmid)
    acc2 = jnp.dot(patches2, w2_ref[...], preferred_element_type=jnp.float32)
    h2 = jnp.maximum(acc2 + b2_ref[...], 0.0).astype(cdt)       # (M, Cmid)

    # ---- ConvTranspose2d(k=2, s=2): one dot per output-row parity ky ----
    # y[m, kx*Cout+o] -> out[2h+ky, 2w+kx, o]; stored as a contiguous
    # (kx, Cout) block so the wrapper interleave is a pure reshape.
    for ky in range(2):
        yk = jnp.dot(h2, wup_ref[ky],
                     preferred_element_type=jnp.float32) + bup_ref[...]
        o_ref[:, ky, :, :] = yk.reshape(H, W, yk.shape[1])


@partial(jax.jit, static_argnames=("compute_dtype",))
def upblock_forward(x_nchw, skip_nchw, W1, b1, W2, b2, Wup, bup,
                    *, compute_dtype=jnp.float32):
    """x/skip: (N, Cin, H, W) NCHW.  Returns (N, Cout, 2H, 2W) NCHW (f32)."""
    N, Cin, H, W = x_nchw.shape
    Cmid = W1.shape[0]            # == in_channels
    Cout = Wup.shape[1]
    Hp, Wp = H + 2, W + 2

    # NCHW -> NHWC, channel concat (skip first, like torch.cat((skip, x), 1)),
    # then zero-pad spatially for the two 3x3 "same" convolutions.
    x = jnp.transpose(x_nchw, (0, 2, 3, 1))
    s = jnp.transpose(skip_nchw, (0, 2, 3, 1))
    z = jnp.concatenate([s, x], axis=-1).astype(compute_dtype)
    zp = jnp.pad(z, ((0, 0), (1, 1), (1, 1), (0, 0)))

    # Conv weights (O, I, 3, 3) -> (9*I, O), row order (ky, kx, cin).
    w1 = jnp.transpose(W1, (2, 3, 1, 0)).reshape(9 * 2 * Cin, Cmid).astype(compute_dtype)
    w2 = jnp.transpose(W2, (2, 3, 1, 0)).reshape(9 * Cmid, Cmid).astype(compute_dtype)
    # ConvTranspose2d weight (Cin, Cout, ky, kx) -> (ky, Cin, kx*Cout).
    wup = jnp.transpose(Wup, (2, 0, 3, 1)).reshape(2, Cmid, 2 * Cout).astype(compute_dtype)
    b1r = b1.reshape(1, Cmid).astype(jnp.float32)
    b2r = b2.reshape(1, Cmid).astype(jnp.float32)
    bupr = jnp.tile(bup.reshape(1, Cout), (1, 2)).astype(jnp.float32)   # (1, 2*Cout)

    itemsize = jnp.dtype(compute_dtype).itemsize
    flops = 2 * N * H * W * Cmid * (9 * 2 * Cin + 9 * Cmid + 4 * Cout)
    bytes_accessed = (
        (N * Hp * Wp * 2 * Cin + 9 * 2 * Cin * Cmid + 9 * Cmid * Cmid
         + 2 * Cmid * 2 * Cout) * itemsize
        + (Cmid + Cmid + 2 * Cout) * 4
        + N * H * 2 * W * 2 * Cout * 4)

    out = pl.pallas_call(
        _upblock_kernel,
        out_shape=jax.ShapeDtypeStruct((N, H, 2, W, 2 * Cout), jnp.float32),
        grid_spec=pltpu.PrefetchScalarGridSpec(
            num_scalar_prefetch=0,
            grid=(N,),
            in_specs=[
                pl.BlockSpec((None, Hp, Wp, 2 * Cin), lambda n: (n, 0, 0, 0)),
                pl.BlockSpec((9 * 2 * Cin, Cmid), lambda n: (0, 0)),
                pl.BlockSpec((1, Cmid), lambda n: (0, 0)),
                pl.BlockSpec((9 * Cmid, Cmid), lambda n: (0, 0)),
                pl.BlockSpec((1, Cmid), lambda n: (0, 0)),
                pl.BlockSpec((2, Cmid, 2 * Cout), lambda n: (0, 0, 0)),
                pl.BlockSpec((1, 2 * Cout), lambda n: (0, 0)),
            ],
            out_specs=pl.BlockSpec((None, H, 2, W, 2 * Cout),
                                   lambda n: (n, 0, 0, 0, 0)),
            scratch_shapes=[pltpu.VMEM((Hp, Wp, Cmid), compute_dtype)],
        ),
        compiler_params=pltpu.CompilerParams(
            dimension_semantics=("parallel",),          # megacore batch split
            vmem_limit_bytes=64 * 1024 * 1024,          # headroom for big tiles
        ),
        cost_estimate=pl.CostEstimate(
            flops=flops, transcendentals=0, bytes_accessed=bytes_accessed),
    )(zp, w1, b1r, w2, b2r, wup, bupr)

    # (N, H, 2, W, 2*Cout) is already (N, 2H, 2W, Cout) in row-major order:
    # a pure reshape (no transpose / no extra HBM pass), then back to NCHW.
    out = out.reshape(N, 2 * H, 2 * W, Cout)
    return jnp.transpose(out, (0, 3, 1, 2))


def ref_forward(x, skip, W1, b1, W2, b2, Wup, bup):
    """Pure-JAX reference matching PyTorch _UpBlock semantics (NCHW)."""
    hi = jax.lax.Precision.HIGHEST
    dn = ('NCHW', 'OIHW', 'NCHW')
    z = jnp.concatenate([skip, x], axis=1)
    h = jax.lax.conv_general_dilated(z, W1, (1, 1), ((1, 1), (1, 1)),
                                     dimension_numbers=dn, precision=hi)
    h = jax.nn.relu(h + b1[None, :, None, None])
    h = jax.lax.conv_general_dilated(h, W2, (1, 1), ((1, 1), (1, 1)),
                                     dimension_numbers=dn, precision=hi)
    h = jax.nn.relu(h + b2[None, :, None, None])
    y = jnp.einsum('nchw,cokl->nohkwl', h, Wup, precision=hi)
    N, Co, H, _, W, _ = y.shape
    return y.reshape(N, Co, 2 * H, 2 * W) + bup[None, :, None, None]


if __name__ == "__main__":
    key = jax.random.PRNGKey(0)
    keys = jax.random.split(key, 8)
    N, Cin, Cout, H, W = 2, 8, 4, 16, 16   # in_channels=8, out_channels=4

    x = jax.random.normal(keys[0], (N, Cin, H, W), jnp.float32)
    skip = jax.random.normal(keys[1], (N, Cin, H, W), jnp.float32)
    W1 = jax.random.normal(keys[2], (Cin, 2 * Cin, 3, 3), jnp.float32) * 0.1
    b1 = jax.random.normal(keys[3], (Cin,), jnp.float32) * 0.1
    W2 = jax.random.normal(keys[4], (Cin, Cin, 3, 3), jnp.float32) * 0.1
    b2 = jax.random.normal(keys[5], (Cin,), jnp.float32) * 0.1
    Wup = jax.random.normal(keys[6], (Cin, Cout, 2, 2), jnp.float32) * 0.1
    bup = jax.random.normal(keys[7], (Cout,), jnp.float32) * 0.1

    ref = jax.block_until_ready(ref_forward(x, skip, W1, b1, W2, b2, Wup, bup))

    # f32 MXU operands (default): tight tolerance.
    out = jax.block_until_ready(upblock_forward(x, skip, W1, b1, W2, b2, Wup, bup))
    assert out.shape == (N, Cout, 2 * H, 2 * W), out.shape
    err = float(jnp.max(jnp.abs(out - ref)))
    assert err < 2e-3, f"f32 max abs err {err}"

    # bf16 MXU operands with f32 accumulation (v5e/v6e/v7x throughput path).
    out_bf16 = jax.block_until_ready(
        upblock_forward(x, skip, W1, b1, W2, b2, Wup, bup,
                        compute_dtype=jnp.bfloat16))
    err_bf16 = float(jnp.max(jnp.abs(out_bf16 - ref)))
    assert err_bf16 < 1e-1, f"bf16 max abs err {err_bf16}"

    print("KERNEL_OK")
</pallas_src>

<mosaic_0001>
module attributes {stable_mosaic.version = 11 : i64} {
  func.func @_upblock_kernel(%arg0: i32, %arg1: memref<1x18x18x16xf32, #tpu.memory_space<vmem>>, %arg2: memref<144x8xf32, #tpu.memory_space<vmem>>, %arg3: memref<1x8xf32, #tpu.memory_space<vmem>>, %arg4: memref<72x8xf32, #tpu.memory_space<vmem>>, %arg5: memref<1x8xf32, #tpu.memory_space<vmem>>, %arg6: memref<2x8x8xf32, #tpu.memory_space<vmem>>, %arg7: memref<1x8xf32, #tpu.memory_space<vmem>>, %arg8: memref<1x16x2x16x8xf32, #tpu.memory_space<vmem>>, %arg9: memref<18x18x8xf32, #tpu.memory_space<vmem>>) attributes {dimension_semantics = [#tpu.dimension_semantics<parallel>], iteration_bounds = array<i64: 2>, scalar_prefetch = 0 : i64, scratch_operands = 1 : i64, tpu.core_type = #tpu.core_type<tc>, window_params = [{transform_indices = @transform_0, window_bounds = array<i64: 1, 18, 18, 16>}, {pipeline_mode = #tpu.pipeline_mode<synchronous>, transform_indices = @transform_1, window_bounds = array<i64: 144, 8>}, {pipeline_mode = #tpu.pipeline_mode<synchronous>, transform_indices = @transform_2, window_bounds = array<i64: 1, 8>}, {pipeline_mode = #tpu.pipeline_mode<synchronous>, transform_indices = @transform_3, window_bounds = array<i64: 72, 8>}, {pipeline_mode = #tpu.pipeline_mode<synchronous>, transform_indices = @transform_4, window_bounds = array<i64: 1, 8>}, {pipeline_mode = #tpu.pipeline_mode<synchronous>, transform_indices = @transform_5, window_bounds = array<i64: 2, 8, 8>}, {pipeline_mode = #tpu.pipeline_mode<synchronous>, transform_indices = @transform_6, window_bounds = array<i64: 1, 8>}, {transform_indices = @transform_7, window_bounds = array<i64: 1, 16, 2, 16, 8>}]} {
    %c0 = arith.constant 0 : index
    %c0_0 = arith.constant 0 : index
    %c0_1 = arith.constant 0 : index
    %c0_2 = arith.constant 0 : index
    %0 = vector.load %arg1[%c0, %c0_0, %c0_1, %c0_2] : memref<1x18x18x16xf32, #tpu.memory_space<vmem>>, vector<1x18x18x16xf32>
    %1 = vector.shape_cast %0 : vector<1x18x18x16xf32> to vector<18x18x16xf32>
    %2 = vector.extract_strided_slice %1 {offsets = [0, 0, 0], sizes = [16, 16, 16], strides = [1, 1, 1]} : vector<18x18x16xf32> to vector<16x16x16xf32>
    %3 = vector.shape_cast %2 : vector<16x16x16xf32> to vector<256x16xf32>
    %4 = vector.extract_strided_slice %1 {offsets = [0, 1, 0], sizes = [16, 16, 16], strides = [1, 1, 1]} : vector<18x18x16xf32> to vector<16x16x16xf32>
    %5 = vector.shape_cast %4 : vector<16x16x16xf32> to vector<256x16xf32>
    %6 = vector.extract_strided_slice %1 {offsets = [0, 2, 0], sizes = [16, 16, 16], strides = [1, 1, 1]} : vector<18x18x16xf32> to vector<16x16x16xf32>
    %7 = vector.shape_cast %6 : vector<16x16x16xf32> to vector<256x16xf32>
    %8 = vector.extract_strided_slice %1 {offsets = [1, 0, 0], sizes = [16, 16, 16], strides = [1, 1, 1]} : vector<18x18x16xf32> to vector<16x16x16xf32>
    %9 = vector.shape_cast %8 : vector<16x16x16xf32> to vector<256x16xf32>
    %10 = vector.extract_strided_slice %1 {offsets = [1, 1, 0], sizes = [16, 16, 16], strides = [1, 1, 1]} : vector<18x18x16xf32> to vector<16x16x16xf32>
    %11 = vector.shape_cast %10 : vector<16x16x16xf32> to vector<256x16xf32>
    %12 = vector.extract_strided_slice %1 {offsets = [1, 2, 0], sizes = [16, 16, 16], strides = [1, 1, 1]} : vector<18x18x16xf32> to vector<16x16x16xf32>
    %13 = vector.shape_cast %12 : vector<16x16x16xf32> to vector<256x16xf32>
    %14 = vector.extract_strided_slice %1 {offsets = [2, 0, 0], sizes = [16, 16, 16], strides = [1, 1, 1]} : vector<18x18x16xf32> to vector<16x16x16xf32>
    %15 = vector.shape_cast %14 : vector<16x16x16xf32> to vector<256x16xf32>
    %16 = vector.extract_strided_slice %1 {offsets = [2, 1, 0], sizes = [16, 16, 16], strides = [1, 1, 1]} : vector<18x18x16xf32> to vector<16x16x16xf32>
    %17 = vector.shape_cast %16 : vector<16x16x16xf32> to vector<256x16xf32>
    %18 = vector.extract_strided_slice %1 {offsets = [2, 2, 0], sizes = [16, 16, 16], strides = [1, 1, 1]} : vector<18x18x16xf32> to vector<16x16x16xf32>
    %19 = vector.shape_cast %18 : vector<16x16x16xf32> to vector<256x16xf32>
    %20 = tpu.concatenate %3, %5, %7, %9, %11, %13, %15, %17, %19 in 1 : vector<256x16xf32>, vector<256x16xf32>, vector<256x16xf32>, vector<256x16xf32>, vector<256x16xf32>, vector<256x16xf32>, vector<256x16xf32>, vector<256x16xf32>, vector<256x16xf32> -> vector<256x144xf32>
    %c0_3 = arith.constant 0 : index
    %c0_4 = arith.constant 0 : index
    %21 = vector.load %arg2[%c0_3, %c0_4] : memref<144x8xf32, #tpu.memory_space<vmem>>, vector<144x8xf32>
    %cst = arith.constant dense<0.000000e+00> : vector<256x8xf32>
    %22 = tpu.matmul %20, %21, %cst {dimension_numbers = #tpu.dot_dimension_numbers<[1], [0], [0], [1], [0, 0, 1, 1], [], []>} : vector<256x144xf32>, vector<144x8xf32>, vector<256x8xf32> -> vector<256x8xf32>
    %c0_5 = arith.constant 0 : index
    %c0_6 = arith.constant 0 : index
    %23 = vector.load %arg3[%c0_5, %c0_6] : memref<1x8xf32, #tpu.memory_space<vmem>>, vector<1x8xf32>
    %24 = vector.broadcast %23 : vector<1x8xf32> to vector<256x8xf32>
    %25 = arith.addf %22, %24 : vector<256x8xf32>
    %cst_7 = arith.constant 0.000000e+00 : f32
    %26 = vector.broadcast %cst_7 : f32 to vector<256x8xf32>
    %27 = arith.maximumf %25, %26 : vector<256x8xf32>
    %cst_8 = arith.constant 0.000000e+00 : f32
    %28 = vector.broadcast %cst_8 : f32 to vector<18x8xf32>
    %c0_9 = arith.constant 0 : index
    %c0_10 = arith.constant 0 : index
    %c0_11 = arith.constant 0 : index
    %29 = vector.load %arg9[%c0_9, %c0_10, %c0_11] : memref<18x18x8xf32, #tpu.memory_space<vmem>>, vector<1x18x8xf32>
    %30 = vector.shape_cast %29 : vector<1x18x8xf32> to vector<18x8xf32>
    %31 = vector.shape_cast %28 : vector<18x8xf32> to vector<1x18x8xf32>
    tpu.vector_store %arg9[%c0_9, %c0_10, %c0_11], %31 {strides = array<i32>} : memref<18x18x8xf32, #tpu.memory_space<vmem>>, vector<1x18x8xf32>,
    %cst_12 = arith.constant 0.000000e+00 : f32
    %32 = vector.broadcast %cst_12 : f32 to vector<18x8xf32>
    %c17 = arith.constant 17 : index
    %c0_13 = arith.constant 0 : index
    %c0_14 = arith.constant 0 : index
    %33 = vector.load %arg9[%c17, %c0_13, %c0_14] : memref<18x18x8xf32, #tpu.memory_space<vmem>>, vector<1x18x8xf32>
    %34 = vector.shape_cast %33 : vector<1x18x8xf32> to vector<18x8xf32>
    %35 = vector.shape_cast %32 : vector<18x8xf32> to vector<1x18x8xf32>
    tpu.vector_store %arg9[%c17, %c0_13, %c0_14], %35 {strides = array<i32>} : memref<18x18x8xf32, #tpu.memory_space<vmem>>, vector<1x18x8xf32>,
    %cst_15 = arith.constant 0.000000e+00 : f32
    %36 = vector.broadcast %cst_15 : f32 to vector<18x8xf32>
    %c0_16 = arith.constant 0 : index
    %c0_17 = arith.constant 0 : index
    %c0_18 = arith.constant 0 : index
    %37 = vector.load %arg9[%c0_16, %c0_17, %c0_18] : memref<18x18x8xf32, #tpu.memory_space<vmem>>, vector<18x1x8xf32>
    %38 = vector.shape_cast %37 : vector<18x1x8xf32> to vector<18x8xf32>
    %39 = vector.shape_cast %36 : vector<18x8xf32> to vector<18x1x8xf32>
    tpu.vector_store %arg9[%c0_16, %c0_17, %c0_18], %39 {strides = array<i32>} : memref<18x18x8xf32, #tpu.memory_space<vmem>>, vector<18x1x8xf32>,
    %cst_19 = arith.constant 0.000000e+00 : f32
    %40 = vector.broadcast %cst_19 : f32 to vector<18x8xf32>
    %c0_20 = arith.constant 0 : index
    %c17_21 = arith.constant 17 : index
    %c0_22 = arith.constant 0 : index
    %41 = vector.load %arg9[%c0_20, %c17_21, %c0_22] : memref<18x18x8xf32, #tpu.memory_space<vmem>>, vector<18x1x8xf32>
    %42 = vector.shape_cast %41 : vector<18x1x8xf32> to vector<18x8xf32>
    %43 = vector.shape_cast %40 : vector<18x8xf32> to vector<18x1x8xf32>
    tpu.vector_store %arg9[%c0_20, %c17_21, %c0_22], %43 {strides = array<i32>} : memref<18x18x8xf32, #tpu.memory_space<vmem>>, vector<18x1x8xf32>,
    %44 = vector.shape_cast %27 : vector<256x8xf32> to vector<16x16x8xf32>
    %c1 = arith.constant 1 : index
    %c1_23 = arith.constant 1 : index
    %c0_24 = arith.constant 0 : index
    %45 = vector.load %arg9[%c1, %c1_23, %c0_24] : memref<18x18x8xf32, #tpu.memory_space<vmem>>, vector<16x16x8xf32>
    tpu.vector_store %arg9[%c1, %c1_23, %c0_24], %44 {strides = array<i32>} : memref<18x18x8xf32, #tpu.memory_space<vmem>>, vector<16x16x8xf32>,
    %c0_25 = arith.constant 0 : index
    %c0_26 = arith.constant 0 : index
    %c0_27 = arith.constant 0 : index
    %46 = vector.load %arg9[%c0_25, %c0_26, %c0_27] : memref<18x18x8xf32, #tpu.memory_space<vmem>>, vector<18x18x8xf32>
    %47 = vector.extract_strided_slice %46 {offsets = [0, 0, 0], sizes = [16, 16, 8], strides = [1, 1, 1]} : vector<18x18x8xf32> to vector<16x16x8xf32>
    %48 = vector.shape_cast %47 : vector<16x16x8xf32> to vector<256x8xf32>
    %49 = vector.extract_strided_slice %46 {offsets = [0, 1, 0], sizes = [16, 16, 8], strides = [1, 1, 1]} : vector<18x18x8xf32> to vector<16x16x8xf32>
    %50 = vector.shape_cast %49 : vector<16x16x8xf32> to vector<256x8xf32>
    %51 = vector.extract_strided_slice %46 {offsets = [0, 2, 0], sizes = [16, 16, 8], strides = [1, 1, 1]} : vector<18x18x8xf32> to vector<16x16x8xf32>
    %52 = vector.shape_cast %51 : vector<16x16x8xf32> to vector<256x8xf32>
    %53 = vector.extract_strided_slice %46 {offsets = [1, 0, 0], sizes = [16, 16, 8], strides = [1, 1, 1]} : vector<18x18x8xf32> to vector<16x16x8xf32>
    %54 = vector.shape_cast %53 : vector<16x16x8xf32> to vector<256x8xf32>
    %55 = vector.extract_strided_slice %46 {offsets = [1, 1, 0], sizes = [16, 16, 8], strides = [1, 1, 1]} : vector<18x18x8xf32> to vector<16x16x8xf32>
    %56 = vector.shape_cast %55 : vector<16x16x8xf32> to vector<256x8xf32>
    %57 = vector.extract_strided_slice %46 {offsets = [1, 2, 0], sizes = [16, 16, 8], strides = [1, 1, 1]} : vector<18x18x8xf32> to vector<16x16x8xf32>
    %58 = vector.shape_cast %57 : vector<16x16x8xf32> to vector<256x8xf32>
    %59 = vector.extract_strided_slice %46 {offsets = [2, 0, 0], sizes = [16, 16, 8], strides = [1, 1, 1]} : vector<18x18x8xf32> to vector<16x16x8xf32>
    %60 = vector.shape_cast %59 : vector<16x16x8xf32> to vector<256x8xf32>
    %61 = vector.extract_strided_slice %46 {offsets = [2, 1, 0], sizes = [16, 16, 8], strides = [1, 1, 1]} : vector<18x18x8xf32> to vector<16x16x8xf32>
    %62 = vector.shape_cast %61 : vector<16x16x8xf32> to vector<256x8xf32>
    %63 = vector.extract_strided_slice %46 {offsets = [2, 2, 0], sizes = [16, 16, 8], strides = [1, 1, 1]} : vector<18x18x8xf32> to vector<16x16x8xf32>
    %64 = vector.shape_cast %63 : vector<16x16x8xf32> to vector<256x8xf32>
    %65 = tpu.concatenate %48, %50, %52, %54, %56, %58, %60, %62, %64 in 1 : vector<256x8xf32>, vector<256x8xf32>, vector<256x8xf32>, vector<256x8xf32>, vector<256x8xf32>, vector<256x8xf32>, vector<256x8xf32>, vector<256x8xf32>, vector<256x8xf32> -> vector<256x72xf32>
    %c0_28 = arith.constant 0 : index
    %c0_29 = arith.constant 0 : index
    %66 = vector.load %arg4[%c0_28, %c0_29] : memref<72x8xf32, #tpu.memory_space<vmem>>, vector<72x8xf32>
    %cst_30 = arith.constant dense<0.000000e+00> : vector<256x8xf32>
    %67 = tpu.matmul %65, %66, %cst_30 {dimension_numbers = #tpu.dot_dimension_numbers<[1], [0], [0], [1], [0, 0, 1, 1], [], []>} : vector<256x72xf32>, vector<72x8xf32>, vector<256x8xf32> -> vector<256x8xf32>
    %c0_31 = arith.constant 0 : index
    %c0_32 = arith.constant 0 : index
    %68 = vector.load %arg5[%c0_31, %c0_32] : memref<1x8xf32, #tpu.memory_space<vmem>>, vector<1x8xf32>
    %69 = vector.broadcast %68 : vector<1x8xf32> to vector<256x8xf32>
    %70 = arith.addf %67, %69 : vector<256x8xf32>
    %cst_33 = arith.constant 0.000000e+00 : f32
    %71 = vector.broadcast %cst_33 : f32 to vector<256x8xf32>
    %72 = arith.maximumf %70, %71 : vector<256x8xf32>
    %c0_34 = arith.constant 0 : index
    %c0_35 = arith.constant 0 : index
    %c0_36 = arith.constant 0 : index
    %73 = vector.load %arg6[%c0_34, %c0_35, %c0_36] : memref<2x8x8xf32, #tpu.memory_space<vmem>>, vector<1x8x8xf32>
    %74 = vector.shape_cast %73 : vector<1x8x8xf32> to vector<8x8xf32>
    %cst_37 = arith.constant dense<0.000000e+00> : vector<256x8xf32>
    %75 = tpu.matmul %72, %74, %cst_37 {dimension_numbers = #tpu.dot_dimension_numbers<[1], [0], [0], [1], [0, 0, 1, 1], [], []>} : vector<256x8xf32>, vector<8x8xf32>, vector<256x8xf32> -> vector<256x8xf32>
    %c0_38 = arith.constant 0 : index
    %c0_39 = arith.constant 0 : index
    %76 = vector.load %arg7[%c0_38, %c0_39] : memref<1x8xf32, #tpu.memory_space<vmem>>, vector<1x8xf32>
    %77 = vector.broadcast %76 : vector<1x8xf32> to vector<256x8xf32>
    %78 = arith.addf %75, %77 : vector<256x8xf32>
    %79 = vector.shape_cast %78 : vector<256x8xf32> to vector<16x16x8xf32>
    %c0_40 = arith.constant 0 : index
    %c0_41 = arith.constant 0 : index
    %c0_42 = arith.constant 0 : index
    %c0_43 = arith.constant 0 : index
    %c0_44 = arith.constant 0 : index
    %80 = vector.load %arg8[%c0_40, %c0_41, %c0_42, %c0_43, %c0_44] : memref<1x16x2x16x8xf32, #tpu.memory_space<vmem>>, vector<1x16x1x16x8xf32>
    %81 = vector.shape_cast %80 : vector<1x16x1x16x8xf32> to vector<16x16x8xf32>
    %82 = vector.shape_cast %79 : vector<16x16x8xf32> to vector<1x16x1x16x8xf32>
    tpu.vector_store %arg8[%c0_40, %c0_41, %c0_42, %c0_43, %c0_44], %82 {strides = array<i32>} : memref<1x16x2x16x8xf32, #tpu.memory_space<vmem>>, vector<1x16x1x16x8xf32>,
    %c1_45 = arith.constant 1 : index
    %c0_46 = arith.constant 0 : index
    %c0_47 = arith.constant 0 : index
    %83 = vector.load %arg6[%c1_45, %c0_46, %c0_47] : memref<2x8x8xf32, #tpu.memory_space<vmem>>, vector<1x8x8xf32>
    %84 = vector.shape_cast %83 : vector<1x8x8xf32> to vector<8x8xf32>
    %cst_48 = arith.constant dense<0.000000e+00> : vector<256x8xf32>
    %85 = tpu.matmul %72, %84, %cst_48 {dimension_numbers = #tpu.dot_dimension_numbers<[1], [0], [0], [1], [0, 0, 1, 1], [], []>} : vector<256x8xf32>, vector<8x8xf32>, vector<256x8xf32> -> vector<256x8xf32>
    %c0_49 = arith.constant 0 : index
    %c0_50 = arith.constant 0 : index
    %86 = vector.load %arg7[%c0_49, %c0_50] : memref<1x8xf32, #tpu.memory_space<vmem>>, vector<1x8xf32>
    %87 = vector.broadcast %86 : vector<1x8xf32> to vector<256x8xf32>
    %88 = arith.addf %85, %87 : vector<256x8xf32>
    %89 = vector.shape_cast %88 : vector<256x8xf32> to vector<16x16x8xf32>
    %c0_51 = arith.constant 0 : index
    %c0_52 = arith.constant 0 : index
    %c1_53 = arith.constant 1 : index
    %c0_54 = arith.constant 0 : index
    %c0_55 = arith.constant 0 : index
    %90 = vector.load %arg8[%c0_51, %c0_52, %c1_53, %c0_54, %c0_55] : memref<1x16x2x16x8xf32, #tpu.memory_space<vmem>>, vector<1x16x1x16x8xf32>
    %91 = vector.shape_cast %90 : vector<1x16x1x16x8xf32> to vector<16x16x8xf32>
    %92 = vector.shape_cast %89 : vector<16x16x8xf32> to vector<1x16x1x16x8xf32>
    tpu.vector_store %arg8[%c0_51, %c0_52, %c1_53, %c0_54, %c0_55], %92 {strides = array<i32>} : memref<1x16x2x16x8xf32, #tpu.memory_space<vmem>>, vector<1x16x1x16x8xf32>,
    return
  }
  func.func @transform_0(%arg0: i32) -> (i32, i32, i32, i32) {
    %c0_i32 = arith.constant 0 : i32
    %c0_i32_0 = arith.constant 0 : i32
    %c0_i32_1 = arith.constant 0 : i32
    %c0_i32_2 = arith.constant 0 : i32
    return %arg0, %c0_i32, %c0_i32_0, %c0_i32_1 : i32, i32, i32, i32
  }
  func.func @transform_1(%arg0: i32) -> (i32, i32) {
    %c0_i32 = arith.constant 0 : i32
    %c0_i32_0 = arith.constant 0 : i32
    %c0_i32_1 = arith.constant 0 : i32
    return %c0_i32, %c0_i32_0 : i32, i32
  }
  func.func @transform_2(%arg0: i32) -> (i32, i32) {
    %c0_i32 = arith.constant 0 : i32
    %c0_i32_0 = arith.constant 0 : i32
    %c0_i32_1 = arith.constant 0 : i32
    return %c0_i32, %c0_i32_0 : i32, i32
  }
  func.func @transform_3(%arg0: i32) -> (i32, i32) {
    %c0_i32 = arith.constant 0 : i32
    %c0_i32_0 = arith.constant 0 : i32
    %c0_i32_1 = arith.constant 0 : i32
    return %c0_i32, %c0_i32_0 : i32, i32
  }
  func.func @transform_4(%arg0: i32) -> (i32, i32) {
    %c0_i32 = arith.constant 0 : i32
    %c0_i32_0 = arith.constant 0 : i32
    %c0_i32_1 = arith.constant 0 : i32
    return %c0_i32, %c0_i32_0 : i32, i32
  }
  func.func @transform_5(%arg0: i32) -> (i32, i32, i32) {
    %c0_i32 = arith.constant 0 : i32
    %c0_i32_0 = arith.constant 0 : i32
    %c0_i32_1 = arith.constant 0 : i32
    %c0_i32_2 = arith.constant 0 : i32
    return %c0_i32, %c0_i32_0, %c0_i32_1 : i32, i32, i32
  }
  func.func @transform_6(%arg0: i32) -> (i32, i32) {
    %c0_i32 = arith.constant 0 : i32
    %c0_i32_0 = arith.constant 0 : i32
    %c0_i32_1 = arith.constant 0 : i32
    return %c0_i32, %c0_i32_0 : i32, i32
  }
  func.func @transform_7(%arg0: i32) -> (i32, i32, i32, i32, i32) {
    %c0_i32 = arith.constant 0 : i32
    %c0_i32_0 = arith.constant 0 : i32
    %c0_i32_1 = arith.constant 0 : i32
    %c0_i32_2 = arith.constant 0 : i32
    %c0_i32_3 = arith.constant 0 : i32
    return %arg0, %c0_i32, %c0_i32_0, %c0_i32_1, %c0_i32_2 : i32, i32, i32, i32, i32
  }
}

</mosaic_0001>

<llo_original>
// kernel: upblock_forward.1
$region0: #{upblock_forward.1}
  #allocation0 [shape = 'u32[]', space=smem, size = 0x4, offset = 0x4, fixed_abs, tag = 'smem constant byte address 0x4 - core index']
  #allocation1 [shape = 'u32[144,128]{1,0:T(1,128)}', space=vmem, size = 0x12000, scoped, tag = 'internal scratch']
  #allocation2 [shape = 'f32[18,18,8]{2,1,0:T(8,128)}', space=vmem, size = 0x36000, scoped, tag = 'scratch operand']
  %s0 = inlined_call_operand.hbm [shape: f32[2,18,18,16], index: 0, kind: input, shape index: {}]
  %s1 = inlined_call_operand.hbm [shape: f32[144,8], index: 1, kind: input, shape index: {}]
  %s2 = inlined_call_operand.hbm [shape: f32[1,8], index: 2, kind: input, shape index: {}]
  %s3 = inlined_call_operand.hbm [shape: f32[72,8], index: 3, kind: input, shape index: {}]
  %s4 = inlined_call_operand.hbm [shape: f32[1,8], index: 4, kind: input, shape index: {}]
  %s5 = inlined_call_operand.hbm [shape: f32[2,8,8], index: 5, kind: input, shape index: {}]
  %s6 = inlined_call_operand.hbm [shape: f32[1,8], index: 6, kind: input, shape index: {}]
  %s7 = inlined_call_operand.hbm [shape: f32[2,16,2,16,8], index: 7, kind: output, shape index: {}]
  %s8 = sld [smem:[#allocation0]]
  $region89: #{upblock_forward.1} parent=0
    _
  %s10 = ssub.s32 1, %s8
  %s11 = scalar_select 0, %s10, %s8
  $region1: #{upblock_forward.1} parent=0
    #allocation3 [shape = 'u8[442368]{0}', space=vmem, size = 0x6c000, scoped, tag = 'input window, operand 0']
    #allocation4 [shape = 's32[2]{0}', space=sflag, size = 0x8, scoped, tag = 'scoped memory for upblock_forward.1']
    #allocation5 [shape = 's32[2]{0}', space=sflag, size = 0x8, scoped, tag = 'scoped memory for upblock_forward.1']
    #allocation6 [shape = 'u8[73728]{0}', space=vmem, size = 0x12000, scoped, tag = 'input window, operand 1, single buffered']
    #allocation7 [shape = 's32[1]{0}', space=sflag, size = 0x4, scoped, tag = 'scoped memory for upblock_forward.1']
    #allocation8 [shape = 'u8[512]{0}', space=vmem, size = 0x400, scoped, tag = 'input window, operand 2, single buffered']
    #allocation9 [shape = 'u8[36864]{0}', space=vmem, size = 0x9000, scoped, tag = 'input window, operand 3, single buffered']
    #allocation10 [shape = 's32[1]{0}', space=sflag, size = 0x4, scoped, tag = 'scoped memory for upblock_forward.1']
    #allocation11 [shape = 'u8[512]{0}', space=vmem, size = 0x400, scoped, tag = 'input window, operand 4, single buffered']
    #allocation12 [shape = 'u8[8192]{0}', space=vmem, size = 0x2000, scoped, tag = 'input window, operand 5, single buffered']
    #allocation13 [shape = 's32[1]{0}', space=sflag, size = 0x4, scoped, tag = 'scoped memory for upblock_forward.1']
    #allocation14 [shape = 'u8[512]{0}', space=vmem, size = 0x400, scoped, tag = 'input window, operand 6, single buffered']
    #allocation15 [shape = 'u8[524288]{0}', space=vmem, size = 0x80000, scoped, tag = 'output window, operand 0']
    %12 = vsyncpa [#allocation4], 0
    %s13 = scalar_lea.sflag [#allocation4], 1
    %14 = vsyncpa %s13, 0
    %15 = vsyncpa [#allocation7], 0
    %16 = vsyncpa [#allocation10], 0
    %17 = vsyncpa [#allocation13], 0
    %18 = vsyncpa [#allocation5], 0
    %s19 = scalar_lea.sflag [#allocation5], 1
    %20 = vsyncpa %s19, 0
    loop: start=0, step=1, limit=4
    $region2: #{upblock_forward.1} parent=1 // loop_pre_header
      _
    $region3: #{upblock_forward.1} parent=1 // loop_header
      %s22 = sphi 0, %s26
      %p23 = scmp.ge.s32.totalorder %s22, 4
      %s32 = sphi 0, %s34
      %s35 = sphi 0, %s32
      %s36 = sphi 0, %s35
      %s52 = sphi 0, %s36
      %s56 = sphi 0, %s56
      %s58 = sphi 0, %s56
      %s59 = sphi 0, %s58
      %s73 = sphi 0, %s59
      %s77 = sphi 0, %s77
      %s79 = sphi 0, %s77
      %s80 = sphi 0, %s79
      %s94 = sphi 0, %s80
      %s98 = sphi 0, %s98
      %s100 = sphi 0, %s98
      %s101 = sphi 0, %s100
      %s115 = sphi 0, %s101
      %s119 = sphi 0, %s119
      %s121 = sphi 0, %s119
      %s122 = sphi 0, %s121
      %s136 = sphi 0, %s122
      %s140 = sphi 0, %s140
      %s142 = sphi 0, %s140
      %s143 = sphi 0, %s142
      %s157 = sphi 0, %s143
      %s161 = sphi 0, %s161
      %s163 = sphi 0, %s161
      %s164 = sphi 0, %s163
      %s178 = sphi 0, %s164
      %s184 = sphi 0, %s186
      %s187 = sphi 0, %s184
      %s188 = sphi 0, %s187
      %s204 = sphi 0, %s188
    $region4: #{upblock_forward.1} parent=1 // loop_header_branch
      %25 = sbr.rel (%p23) target = $region8
    $region5: #{upblock_forward.1} parent=1 // loop_body
      %s27 = ssub.s32 %s22, 1
      %s28 = ssub.s32 %s22, 2
      %s29 = sadd.s32 %s22, 1
      %s30 = ssub.s32 %s22, %s29
      %p31 = scmp.eq.s32.totalorder %s30, 0
      %s33 = sadd.s32 %s32, 1
      %s34 = scalar_select %p31, %s32, %s33
      %p37 = pneg %p31
      %p38 = scmp.eq.s32.totalorder %s22, 1
      %p39 = por %p37, %p38
      %p40 = scmp.ne.s32.totalorder %s32, %s35
      %p41 = scmp.eq.s32.totalorder %s22, 0
      %p42 = por %p40, %p41
      %p43 = scmp.ne.s32.totalorder %s32, %s35
      %p44 = scmp.eq.s32.totalorder %s27, 1
      %p45 = por %p43, %p44
      %p46 = scmp.ne.s32.totalorder %s35, %s36
      %p47 = scmp.eq.s32.totalorder %s27, 0
      %p48 = por %p46, %p47
      %p49 = scmp.ne.s32.totalorder %s35, %s36
      %p50 = scmp.eq.s32.totalorder %s28, 1
      %p51 = por %p49, %p50
      %p53 = scmp.ne.s32.totalorder %s36, %s52
      %p54 = scmp.eq.s32.totalorder %s28, 0
      %p55 = por %p53, %p54
      %s57 = sadd.s32 %s56, 1
      %p60 = scmp.eq.s32.totalorder %s22, 1
      %p61 = scmp.ne.s32.totalorder %s56, %s58
      %p62 = scmp.eq.s32.totalorder %s22, 0
      %p63 = por %p61, %p62
      %p64 = scmp.ne.s32.totalorder %s56, %s58
      %p65 = scmp.eq.s32.totalorder %s27, 1
      %p66 = por %p64, %p65
      %p67 = scmp.ne.s32.totalorder %s58, %s59
      %p68 = scmp.eq.s32.totalorder %s27, 0
      %p69 = por %p67, %p68
      %p70 = scmp.ne.s32.totalorder %s58, %s59
      %p71 = scmp.eq.s32.totalorder %s28, 1
      %p72 = por %p70, %p71
      %p74 = scmp.ne.s32.totalorder %s59, %s73
      %p75 = scmp.eq.s32.totalorder %s28, 0
      %p76 = por %p74, %p75
      %s78 = sadd.s32 %s77, 1
      %p81 = scmp.eq.s32.totalorder %s22, 1
      %p82 = scmp.ne.s32.totalorder %s77, %s79
      %p83 = scmp.eq.s32.totalorder %s22, 0
      %p84 = por %p82, %p83
      %p85 = scmp.ne.s32.totalorder %s77, %s79
      %p86 = scmp.eq.s32.totalorder %s27, 1
      %p87 = por %p85, %p86
      %p88 = scmp.ne.s32.totalorder %s79, %s80
      %p89 = scmp.eq.s32.totalorder %s27, 0
      %p90 = por %p88, %p89
      %p91 = scmp.ne.s32.totalorder %s79, %s80
      %p92 = scmp.eq.s32.totalorder %s28, 1
      %p93 = por %p91, %p92
      %p95 = scmp.ne.s32.totalorder %s80, %s94
      %p96 = scmp.eq.s32.totalorder %s28, 0
      %p97 = por %p95, %p96
      %s99 = sadd.s32 %s98, 1
      %p102 = scmp.eq.s32.totalorder %s22, 1
      %p103 = scmp.ne.s32.totalorder %s98, %s100
      %p104 = scmp.eq.s32.totalorder %s22, 0
      %p105 = por %p103, %p104
      %p106 = scmp.ne.s32.totalorder %s98, %s100
      %p107 = scmp.eq.s32.totalorder %s27, 1
      %p108 = por %p106, %p107
      %p109 = scmp.ne.s32.totalorder %s100, %s101
      %p110 = scmp.eq.s32.totalorder %s27, 0
      %p111 = por %p109, %p110
      %p112 = scmp.ne.s32.totalorder %s100, %s101
      %p113 = scmp.eq.s32.totalorder %s28, 1
      %p114 = por %p112, %p113
      %p116 = scmp.ne.s32.totalorder %s101, %s115
      %p117 = scmp.eq.s32.totalorder %s28, 0
      %p118 = por %p116, %p117
      %s120 = sadd.s32 %s119, 1
      %p123 = scmp.eq.s32.totalorder %s22, 1
      %p124 = scmp.ne.s32.totalorder %s119, %s121
      %p125 = scmp.eq.s32.totalorder %s22, 0
      %p126 = por %p124, %p125
      %p127 = scmp.ne.s32.totalorder %s119, %s121
      %p128 = scmp.eq.s32.totalorder %s27, 1
      %p129 = por %p127, %p128
      %p130 = scmp.ne.s32.totalorder %s121, %s122
      %p131 = scmp.eq.s32.totalorder %s27, 0
      %p132 = por %p130, %p131
      %p133 = scmp.ne.s32.totalorder %s121, %s122
      %p134 = scmp.eq.s32.totalorder %s28, 1
      %p135 = por %p133, %p134
      %p137 = scmp.ne.s32.totalorder %s122, %s136
      %p138 = scmp.eq.s32.totalorder %s28, 0
      %p139 = por %p137, %p138
      %s141 = sadd.s32 %s140, 1
      %p144 = scmp.eq.s32.totalorder %s22, 1
      %p145 = scmp.ne.s32.totalorder %s140, %s142
      %p146 = scmp.eq.s32.totalorder %s22, 0
      %p147 = por %p145, %p146
      %p148 = scmp.ne.s32.totalorder %s140, %s142
      %p149 = scmp.eq.s32.totalorder %s27, 1
      %p150 = por %p148, %p149
      %p151 = scmp.ne.s32.totalorder %s142, %s143
      %p152 = scmp.eq.s32.totalorder %s27, 0
      %p153 = por %p151, %p152
      %p154 = scmp.ne.s32.totalorder %s142, %s143
      %p155 = scmp.eq.s32.totalorder %s28, 1
      %p156 = por %p154, %p155
      %p158 = scmp.ne.s32.totalorder %s143, %s157
      %p159 = scmp.eq.s32.totalorder %s28, 0
      %p160 = por %p158, %p159
      %s162 = sadd.s32 %s161, 1
      %p165 = scmp.eq.s32.totalorder %s22, 1
      %p166 = scmp.ne.s32.totalorder %s161, %s163
      %p167 = scmp.eq.s32.totalorder %s22, 0
      %p168 = por %p166, %p167
      %p169 = scmp.ne.s32.totalorder %s161, %s163
      %p170 = scmp.eq.s32.totalorder %s27, 1
      %p171 = por %p169, %p170
      %p172 = scmp.ne.s32.totalorder %s163, %s164
      %p173 = scmp.eq.s32.totalorder %s27, 0
      %p174 = por %p172, %p173
      %p175 = scmp.ne.s32.totalorder %s163, %s164
      %p176 = scmp.eq.s32.totalorder %s28, 1
      %p177 = por %p175, %p176
      %p179 = scmp.ne.s32.totalorder %s164, %s178
      %p180 = scmp.eq.s32.totalorder %s28, 0
      %p181 = por %p179, %p180
      %s182 = ssub.s32 %s22, %s29
      %p183 = scmp.eq.s32.totalorder %s182, 0
      %s185 = sadd.s32 %s184, 1
      %s186 = scalar_select %p183, %s184, %s185
      %p189 = pneg %p183
      %p190 = scmp.eq.s32.totalorder %s22, 1
      %p191 = por %p189, %p190
      %p192 = scmp.ne.s32.totalorder %s184, %s187
      %p193 = scmp.eq.s32.totalorder %s22, 0
      %p194 = por %p192, %p193
      %p195 = scmp.ne.s32.totalorder %s184, %s187
      %p196 = scmp.eq.s32.totalorder %s27, 1
      %p197 = por %p195, %p196
      %p198 = scmp.ne.s32.totalorder %s187, %s188
      %p199 = scmp.eq.s32.totalorder %s27, 0
      %p200 = por %p198, %p199
      %p201 = scmp.ne.s32.totalorder %s187, %s188
      %p202 = scmp.eq.s32.totalorder %s28, 1
      %p203 = por %p201, %p202
      %p205 = scmp.ne.s32.totalorder %s188, %s204
      %p206 = scmp.eq.s32.totalorder %s28, 0
      %p207 = por %p205, %p206
      %p208 = scmp.le.s32.totalorder 1, %s22
      %p209 = scmp.lt.s32.totalorder %s22, 3
      %p210 = pnand %p208, %p209
      %p211 = pneg %p210
      // Predicated region
      $region9: #{upblock_forward.1} parent=5 // pred_check
        _
      $region10: #{upblock_forward.1} parent=5 // pred_check_branch
        %213 = sbr.rel (%p210) target = $region12
      $region11: #{upblock_forward.1} parent=5 // pred_region
        %s214 = ssub.s32 %s22, 1
        // Predicated region
        $region13: #{upblock_forward.1} parent=11 // pred_check
          %p215 = pneg %p69
        $region14: #{upblock_forward.1} parent=11 // pred_check_branch
          %217 = sbr.rel (%p215) target = $region16
        $region15: #{upblock_forward.1} parent=11 // pred_region
          %s219 = ssub.s32 2304, 2304
          %220 = vsyncadd [#allocation7], %s219
          %s221 = sshll.u32 [#allocation6], 4
          %s222 = int_to_ptr.vmem [resolvable:$true] %s221
          %227 = dma.hbm_to_vmem [thread:$0]  %s1, 2304, %s222, [#allocation7], 128, 128, 8
        $region16: #{upblock_forward.1} parent=11 // pred_fallthru
          _
        // Predicated region
        $region17: #{upblock_forward.1} parent=11 // pred_check
          %p228 = pneg %p90
        $region18: #{upblock_forward.1} parent=11 // pred_check_branch
          %230 = sbr.rel (%p228) target = $region20
        $region19: #{upblock_forward.1} parent=11 // pred_region
          %s232 = ssub.s32 16, 16
          %233 = vsyncadd [#allocation7], %s232
          %s235 = sshll.u32 [#allocation8], 4
          %s236 = int_to_ptr.vmem [resolvable:$true] %s235
          %238 = dma.hbm_to_vmem [thread:$0]  %s2, 16, %s236, [#allocation7]
        $region20: #{upblock_forward.1} parent=11 // pred_fallthru
          _
        // Predicated region
        $region21: #{upblock_forward.1} parent=11 // pred_check
          %p239 = pneg %p111
        $region22: #{upblock_forward.1} parent=11 // pred_check_branch
          %241 = sbr.rel (%p239) target = $region24
        $region23: #{upblock_forward.1} parent=11 // pred_region
          %s243 = ssub.s32 1152, 1152
          %244 = vsyncadd [#allocation10], %s243
          %s245 = sshll.u32 [#allocation9], 4
          %s246 = int_to_ptr.vmem [resolvable:$true] %s245
          %251 = dma.hbm_to_vmem [thread:$0]  %s3, 1152, %s246, [#allocation10], 128, 128, 8
        $region24: #{upblock_forward.1} parent=11 // pred_fallthru
          _
        // Predicated region
        $region25: #{upblock_forward.1} parent=11 // pred_check
          %p252 = pneg %p132
        $region26: #{upblock_forward.1} parent=11 // pred_check_branch
          %254 = sbr.rel (%p252) target = $region28
        $region27: #{upblock_forward.1} parent=11 // pred_region
          %s256 = ssub.s32 16, 16
          %257 = vsyncadd [#allocation10], %s256
          %s259 = sshll.u32 [#allocation11], 4
          %s260 = int_to_ptr.vmem [resolvable:$true] %s259
          %262 = dma.hbm_to_vmem [thread:$0]  %s4, 16, %s260, [#allocation10]
        $region28: #{upblock_forward.1} parent=11 // pred_fallthru
          _
        // Predicated region
        $region29: #{upblock_forward.1} parent=11 // pred_check
          %p263 = pneg %p153
        $region30: #{upblock_forward.1} parent=11 // pred_check_branch
          %265 = sbr.rel (%p263) target = $region32
        $region31: #{upblock_forward.1} parent=11 // pred_region
          %s267 = ssub.s32 256, 256
          %268 = vsyncadd [#allocation13], %s267
          %s269 = sshll.u32 [#allocation12], 4
          %s270 = int_to_ptr.vmem [resolvable:$true] %s269
          %275 = dma.hbm_to_vmem [thread:$0]  %s5, 256, %s270, [#allocation13], 128, 128, 8
        $region32: #{upblock_forward.1} parent=11 // pred_fallthru
          _
        // Predicated region
        $region33: #{upblock_forward.1} parent=11 // pred_check
          %p276 = pneg %p174
        $region34: #{upblock_forward.1} parent=11 // pred_check_branch
          %278 = sbr.rel (%p276) target = $region36
        $region35: #{upblock_forward.1} parent=11 // pred_region
          %s280 = ssub.s32 16, 16
          %281 = vsyncadd [#allocation13], %s280
          %s283 = sshll.u32 [#allocation14], 4
          %s284 = int_to_ptr.vmem [resolvable:$true] %s283
          %286 = dma.hbm_to_vmem [thread:$0]  %s6, 16, %s284, [#allocation13]
        $region36: #{upblock_forward.1} parent=11 // pred_fallthru
          _
      $region12: #{upblock_forward.1} parent=5 // pred_fallthru
        _
      %p287 = scmp.lt.s32.totalorder %s22, 2
      // Predicated region
      $region37: #{upblock_forward.1} parent=5 // pred_check
        %p288 = pneg %p287
      $region38: #{upblock_forward.1} parent=5 // pred_check_branch
        %290 = sbr.rel (%p288) target = $region40
      $region39: #{upblock_forward.1} parent=5 // pred_region
        // Predicated region
        $region41: #{upblock_forward.1} parent=39 // pred_check
          %p291 = pneg %p42
        $region42: #{upblock_forward.1} parent=39 // pred_check_branch
          %293 = sbr.rel (%p291) target = $region44
        $region43: #{upblock_forward.1} parent=39 // pred_region
          %s294 = sand.u32 %s32, 1
          %s295 = scalar_lea.sflag [#allocation4], %s294
          %s296 = sand.u32 %s32, 1
          %s297 = smul.addr %s296, 432
          %s298 = scalar_lea.vmem [#allocation3], %s297
          %s300 = ssub.s32 6912, 6912
          %301 = vsyncadd %s295, %s300
          %s302 = smul.addr %s22, 54
          %s303 = smul.addr %s302, 128
          %s304 = scalar_lea.hbm %s0, %s303
          %s305 = sshll.u32 %s298, 4
          %s306 = int_to_ptr.vmem [resolvable:$true] %s305
          %311 = dma.hbm_to_vmem [thread:$0]  %s304, 6912, %s306, %s295, 128, 128, 8
        $region44: #{upblock_forward.1} parent=39 // pred_fallthru
          _
      $region40: #{upblock_forward.1} parent=5 // pred_fallthru
        _
      %p312 = scmp.le.s32.totalorder 1, %s22
      %p313 = scmp.lt.s32.totalorder %s22, 3
      %p314 = pnand %p312, %p313
      %p315 = pneg %p314
      // Predicated region
      $region45: #{upblock_forward.1} parent=5 // pred_check
        _
      $region46: #{upblock_forward.1} parent=5 // pred_check_branch
        %317 = sbr.rel (%p314) target = $region48
      $region47: #{upblock_forward.1} parent=5 // pred_region
        %s318 = ssub.s32 %s22, 1
        %s319 = sand.u32 %s35, 1
        %s320 = scalar_lea.sflag [#allocation4], %s319
        %s321 = sand.u32 %s35, 1
        %s322 = smul.addr %s321, 432
        %s323 = scalar_lea.vmem [#allocation3], %s322
        // Predicated region
        $region49: #{upblock_forward.1} parent=47 // pred_check
          %p324 = pneg %p48
        $region50: #{upblock_forward.1} parent=47 // pred_check_branch
          %326 = sbr.rel (%p324) target = $region52
        $region51: #{upblock_forward.1} parent=47 // pred_region
          %327 = dma.done %s320, 6912
        $region52: #{upblock_forward.1} parent=47 // pred_fallthru
          _
        // Predicated region
        $region53: #{upblock_forward.1} parent=47 // pred_check
          %p328 = pneg %p69
        $region54: #{upblock_forward.1} parent=47 // pred_check_branch
          %330 = sbr.rel (%p328) target = $region56
        $region55: #{upblock_forward.1} parent=47 // pred_region
          %331 = dma.done [#allocation7], 2304
        $region56: #{upblock_forward.1} parent=47 // pred_fallthru
          _
        // Predicated region
        $region57: #{upblock_forward.1} parent=47 // pred_check
          %p332 = pneg %p90
        $region58: #{upblock_forward.1} parent=47 // pred_check_branch
          %334 = sbr.rel (%p332) target = $region60
        $region59: #{upblock_forward.1} parent=47 // pred_region
          %335 = dma.done [#allocation7], 16
        $region60: #{upblock_forward.1} parent=47 // pred_fallthru
          _
        // Predicated region
        $region61: #{upblock_forward.1} parent=47 // pred_check
          %p336 = pneg %p111
        $region62: #{upblock_forward.1} parent=47 // pred_check_branch
          %338 = sbr.rel (%p336) target = $region64
        $region63: #{upblock_forward.1} parent=47 // pred_region
          %339 = dma.done [#allocation10], 1152
        $region64: #{upblock_forward.1} parent=47 // pred_fallthru
          _
        // Predicated region
        $region65: #{upblock_forward.1} parent=47 // pred_check
          %p340 = pneg %p132
        $region66: #{upblock_forward.1} parent=47 // pred_check_branch
          %342 = sbr.rel (%p340) target = $region68
        $region67: #{upblock_forward.1} parent=47 // pred_region
          %343 = dma.done [#allocation10], 16
        $region68: #{upblock_forward.1} parent=47 // pred_fallthru
          _
        // Predicated region
        $region69: #{upblock_forward.1} parent=47 // pred_check
          %p344 = pneg %p153
        $region70: #{upblock_forward.1} parent=47 // pred_check_branch
          %346 = sbr.rel (%p344) target = $region72
        $region71: #{upblock_forward.1} parent=47 // pred_region
          %347 = dma.done [#allocation13], 256
        $region72: #{upblock_forward.1} parent=47 // pred_fallthru
          _
        // Predicated region
        $region73: #{upblock_forward.1} parent=47 // pred_check
          %p348 = pneg %p174
        $region74: #{upblock_forward.1} parent=47 // pred_check_branch
          %350 = sbr.rel (%p348) target = $region76
        $region75: #{upblock_forward.1} parent=47 // pred_region
          %351 = dma.done [#allocation13], 16
        $region76: #{upblock_forward.1} parent=47 // pred_fallthru
          _
        %s352 = sand.u32 %s35, 1
        %s353 = scalar_lea.sflag [#allocation4], %s352
        %s354 = sand.u32 %s35, 1
        %s355 = smul.addr %s354, 432
        %s356 = scalar_lea.vmem [#allocation3], %s355
        %p357 = pneg %p48
        %p358 = pneg %p45
        %p359 = pneg %p69
        %p360 = pneg %p66
        %p361 = pneg %p90
        %p362 = pneg %p87
        %p363 = pneg %p111
        %p364 = pneg %p108
        %p365 = pneg %p132
        %p366 = pneg %p129
        %p367 = pneg %p153
        %p368 = pneg %p150
        %p369 = pneg %p174
        %p370 = pneg %p171
        %p371 = pneg %p200
        %p372 = pneg %p197
        %s373 = sand.u32 %s187, 1
        %s374 = scalar_lea.sflag [#allocation5], %s373
        %s375 = sand.u32 %s187, 1
        %s376 = smul.addr %s375, 512
        %s377 = scalar_lea.vmem [#allocation15], %s376
        %v378 = vld [vmem:[%s323] sm:$0xff]
        %v379 = vld [vmem:[%s323 + $0x8] sm:$0xff]
        %v380 = vld [vmem:[%s323 + $0x10] sm:$0x3]
        %v381 = vld [vmem:[%s323 + $0x18] sm:$0xff]
        %v382 = vld [vmem:[%s323 + $0x20] sm:$0xff]
        %v383 = vld [vmem:[%s323 + $0x28] sm:$0x3]
        %v384 = vld [vmem:[%s323 + $0x30] sm:$0xff]
        %v385 = vld [vmem:[%s323 + $0x38] sm:$0xff]
        %v386 = vld [vmem:[%s323 + $0x40] sm:$0x3]
        %v387 = vld [vmem:[%s323 + $0x48] sm:$0xff]
        %v388 = vld [vmem:[%s323 + $0x50] sm:$0xff]
        %v389 = vld [vmem:[%s323 + $0x58] sm:$0x3]
        %v390 = vld [vmem:[%s323 + $0x60] sm:$0xff]
        %v391 = vld [vmem:[%s323 + $0x68] sm:$0xff]
        %v392 = vld [vmem:[%s323 + $0x70] sm:$0x3]
        %v393 = vld [vmem:[%s323 + $0x78] sm:$0xff]
        %v394 = vld [vmem:[%s323 + $0x80] sm:$0xff]
        %v395 = vld [vmem:[%s323 + $0x88] sm:$0x3]
        %v396 = vld [vmem:[%s323 + $0x90] sm:$0xff]
        %v397 = vld [vmem:[%s323 + $0x98] sm:$0xff]
        %v398 = vld [vmem:[%s323 + $0xa0] sm:$0x3]
        %v399 = vld [vmem:[%s323 + $0xa8] sm:$0xff]
        %v400 = vld [vmem:[%s323 + $0xb0] sm:$0xff]
        %v401 = vld [vmem:[%s323 + $0xb8] sm:$0x3]
        %v402 = vld [vmem:[%s323 + $0xc0] sm:$0xff]
        %v403 = vld [vmem:[%s323 + $0xc8] sm:$0xff]
        %v404 = vld [vmem:[%s323 + $0xd0] sm:$0x3]
        %v405 = vld [vmem:[%s323 + $0xd8] sm:$0xff]
        %v406 = vld [vmem:[%s323 + $0xe0] sm:$0xff]
        %v407 = vld [vmem:[%s323 + $0xe8] sm:$0x3]
        %v408 = vld [vmem:[%s323 + $0xf0] sm:$0xff]
        %v409 = vld [vmem:[%s323 + $0xf8] sm:$0xff]
        %v410 = vld [vmem:[%s323 + $0x100] sm:$0x3]
        %v411 = vld [vmem:[%s323 + $0x108] sm:$0xff]
        %v412 = vld [vmem:[%s323 + $0x110] sm:$0xff]
        %v413 = vld [vmem:[%s323 + $0x118] sm:$0x3]
        %v414 = vld [vmem:[%s323 + $0x120] sm:$0xff]
        %v415 = vld [vmem:[%s323 + $0x128] sm:$0xff]
        %v416 = vld [vmem:[%s323 + $0x130] sm:$0x3]
        %v417 = vld [vmem:[%s323 + $0x138] sm:$0xff]
        %v418 = vld [vmem:[%s323 + $0x140] sm:$0xff]
        %v419 = vld [vmem:[%s323 + $0x148] sm:$0x3]
        %v420 = vld [vmem:[%s323 + $0x150] sm:$0xff]
        %v421 = vld [vmem:[%s323 + $0x158] sm:$0xff]
        %v422 = vld [vmem:[%s323 + $0x160] sm:$0x3]
        %v423 = vld [vmem:[%s323 + $0x168] sm:$0xff]
        %v424 = vld [vmem:[%s323 + $0x170] sm:$0xff]
        %v425 = vld [vmem:[%s323 + $0x178] sm:$0x3]
        %v426 = vld [vmem:[%s323 + $0x180] sm:$0xff]
        %v427 = vld [vmem:[%s323 + $0x188] sm:$0xff]
        %v428 = vld [vmem:[%s323 + $0x190] sm:$0x3]
        %v429 = vld [vmem:[%s323 + $0x198] sm:$0xff]
        %v430 = vld [vmem:[%s323 + $0x1a0] sm:$0xff]
        %v431 = vld [vmem:[%s323 + $0x1a8] sm:$0x3]
        %vm480 = vcmask 1046528
        %v481 = vrot.slane %v378, 1
        %v482 = vrot.slane %v379, 1
        %v483 = vsel %vm480, %v481, %v482
        %v484 = vrot.slane %v380, 1
        %v485 = vsel %vm480, %v482, %v484
        %v486 = vrot.slane %v381, 1
        %v487 = vrot.slane %v382, 1
        %v488 = vsel %vm480, %v486, %v487
        %v489 = vrot.slane %v383, 1
        %v490 = vsel %vm480, %v487, %v489
        %v491 = vrot.slane %v384, 1
        %v492 = vrot.slane %v385, 1
        %v493 = vsel %vm480, %v491, %v492
        %v494 = vrot.slane %v386, 1
        %v495 = vsel %vm480, %v492, %v494
        %v496 = vrot.slane %v387, 1
        %v497 = vrot.slane %v388, 1
        %v498 = vsel %vm480, %v496, %v497
        %v499 = vrot.slane %v389, 1
        %v500 = vsel %vm480, %v497, %v499
        %v501 = vrot.slane %v390, 1
        %v502 = vrot.slane %v391, 1
        %v503 = vsel %vm480, %v501, %v502
        %v504 = vrot.slane %v392, 1
        %v505 = vsel %vm480, %v502, %v504
        %v506 = vrot.slane %v393, 1
        %v507 = vrot.slane %v394, 1
        %v508 = vsel %vm480, %v506, %v507
        %v509 = vrot.slane %v395, 1
        %v510 = vsel %vm480, %v507, %v509
        %v511 = vrot.slane %v396, 1
        %v512 = vrot.slane %v397, 1
        %v513 = vsel %vm480, %v511, %v512
        %v514 = vrot.slane %v398, 1
        %v515 = vsel %vm480, %v512, %v514
        %v516 = vrot.slane %v399, 1
        %v517 = vrot.slane %v400, 1
        %v518 = vsel %vm480, %v516, %v517
        %v519 = vrot.slane %v401, 1
        %v520 = vsel %vm480, %v517, %v519
        %v521 = vrot.slane %v402, 1
        %v522 = vrot.slane %v403, 1
        %v523 = vsel %vm480, %v521, %v522
        %v524 = vrot.slane %v404, 1
        %v525 = vsel %vm480, %v522, %v524
        %v526 = vrot.slane %v405, 1
        %v527 = vrot.slane %v406, 1
        %v528 = vsel %vm480, %v526, %v527
        %v529 = vrot.slane %v407, 1
        %v530 = vsel %vm480, %v527, %v529
        %v531 = vrot.slane %v408, 1
        %v532 = vrot.slane %v409, 1
        %v533 = vsel %vm480, %v531, %v532
        %v534 = vrot.slane %v410, 1
        %v535 = vsel %vm480, %v532, %v534
        %v536 = vrot.slane %v411, 1
        %v537 = vrot.slane %v412, 1
        %v538 = vsel %vm480, %v536, %v537
        %v539 = vrot.slane %v413, 1
        %v540 = vsel %vm480, %v537, %v539
        %v541 = vrot.slane %v414, 1
        %v542 = vrot.slane %v415, 1
        %v543 = vsel %vm480, %v541, %v542
        %v544 = vrot.slane %v416, 1
        %v545 = vsel %vm480, %v542, %v544
        %v546 = vrot.slane %v417, 1
        %v547 = vrot.slane %v418, 1
        %v548 = vsel %vm480, %v546, %v547
        %v549 = vrot.slane %v419, 1
        %v550 = vsel %vm480, %v547, %v549
        %v551 = vrot.slane %v420, 1
        %v552 = vrot.slane %v421, 1
        %v553 = vsel %vm480, %v551, %v552
        %v554 = vrot.slane %v422, 1
        %v555 = vsel %vm480, %v552, %v554
        %v556 = vrot.slane %v423, 1
        %v557 = vrot.slane %v424, 1
        %v558 = vsel %vm480, %v556, %v557
        %v559 = vrot.slane %v425, 1
        %v560 = vsel %vm480, %v557, %v559
        %vm561 = vcmask 1045504
        %v562 = vrot.slane %v378, 2
        %v563 = vrot.slane %v379, 2
        %v564 = vsel %vm561, %v562, %v563
        %v565 = vrot.slane %v380, 2
        %v566 = vsel %vm561, %v563, %v565
        %v567 = vrot.slane %v381, 2
        %v568 = vrot.slane %v382, 2
        %v569 = vsel %vm561, %v567, %v568
        %v570 = vrot.slane %v383, 2
        %v571 = vsel %vm561, %v568, %v570
        %v572 = vrot.slane %v384, 2
        %v573 = vrot.slane %v385, 2
        %v574 = vsel %vm561, %v572, %v573
        %v575 = vrot.slane %v386, 2
        %v576 = vsel %vm561, %v573, %v575
        %v577 = vrot.slane %v387, 2
        %v578 = vrot.slane %v388, 2
        %v579 = vsel %vm561, %v577, %v578
        %v580 = vrot.slane %v389, 2
        %v581 = vsel %vm561, %v578, %v580
        %v582 = vrot.slane %v390, 2
        %v583 = vrot.slane %v391, 2
        %v584 = vsel %vm561, %v582, %v583
        %v585 = vrot.slane %v392, 2
        %v586 = vsel %vm561, %v583, %v585
        %v587 = vrot.slane %v393, 2
        %v588 = vrot.slane %v394, 2
        %v589 = vsel %vm561, %v587, %v588
        %v590 = vrot.slane %v395, 2
        %v591 = vsel %vm561, %v588, %v590
        %v592 = vrot.slane %v396, 2
        %v593 = vrot.slane %v397, 2
        %v594 = vsel %vm561, %v592, %v593
        %v595 = vrot.slane %v398, 2
        %v596 = vsel %vm561, %v593, %v595
        %v597 = vrot.slane %v399, 2
        %v598 = vrot.slane %v400, 2
        %v599 = vsel %vm561, %v597, %v598
        %v600 = vrot.slane %v401, 2
        %v601 = vsel %vm561, %v598, %v600
        %v602 = vrot.slane %v402, 2
        %v603 = vrot.slane %v403, 2
        %v604 = vsel %vm561, %v602, %v603
        %v605 = vrot.slane %v404, 2
        %v606 = vsel %vm561, %v603, %v605
        %v607 = vrot.slane %v405, 2
        %v608 = vrot.slane %v406, 2
        %v609 = vsel %vm561, %v607, %v608
        %v610 = vrot.slane %v407, 2
        %v611 = vsel %vm561, %v608, %v610
        %v612 = vrot.slane %v408, 2
        %v613 = vrot.slane %v409, 2
        %v614 = vsel %vm561, %v612, %v613
        %v615 = vrot.slane %v410, 2
        %v616 = vsel %vm561, %v613, %v615
        %v617 = vrot.slane %v411, 2
        %v618 = vrot.slane %v412, 2
        %v619 = vsel %vm561, %v617, %v618
        %v620 = vrot.slane %v413, 2
        %v621 = vsel %vm561, %v618, %v620
        %v622 = vrot.slane %v414, 2
        %v623 = vrot.slane %v415, 2
        %v624 = vsel %vm561, %v622, %v623
        %v625 = vrot.slane %v416, 2
        %v626 = vsel %vm561, %v623, %v625
        %v627 = vrot.slane %v417, 2
        %v628 = vrot.slane %v418, 2
        %v629 = vsel %vm561, %v627, %v628
        %v630 = vrot.slane %v419, 2
        %v631 = vsel %vm561, %v628, %v630
        %v632 = vrot.slane %v420, 2
        %v633 = vrot.slane %v421, 2
        %v634 = vsel %vm561, %v632, %v633
        %v635 = vrot.slane %v422, 2
        %v636 = vsel %vm561, %v633, %v635
        %v637 = vrot.slane %v423, 2
        %v638 = vrot.slane %v424, 2
        %v639 = vsel %vm561, %v637, %v638
        %v640 = vrot.slane %v425, 2
        %v641 = vsel %vm561, %v638, %v640
        %v645 = vrot.slane %v426, 1
        %v646 = vrot.slane %v427, 1
        %v647 = vsel %vm480, %v645, %v646
        %v648 = vrot.slane %v428, 1
        %v649 = vsel %vm480, %v646, %v648
        %v650 = vrot.slane %v426, 2
        %v651 = vrot.slane %v427, 2
        %v652 = vsel %vm561, %v650, %v651
        %v653 = vrot.slane %v428, 2
        %v654 = vsel %vm561, %v651, %v653
        %v658 = vrot.slane %v429, 1
        %v659 = vrot.slane %v430, 1
        %v660 = vsel %vm480, %v658, %v659
        %v661 = vrot.slane %v431, 1
        %v662 = vsel %vm480, %v659, %v661
        %v663 = vrot.slane %v429, 2
        %v664 = vrot.slane %v430, 2
        %v665 = vsel %vm561, %v663, %v664
        %v666 = vrot.slane %v431, 2
        %v667 = vsel %vm561, %v664, %v666
        %668 = vrot.lane.b32.xlu0 %v483, 16
        %v669 = vpop.permute.xlu0 %668
        %670 = vrot.lane.b32.xlu0 %v485, 16
        %v671 = vpop.permute.xlu0 %670
        %672 = vrot.lane.b32.xlu0 %v488, 16
        %v673 = vpop.permute.xlu0 %672
        %674 = vrot.lane.b32.xlu0 %v490, 16
        %v675 = vpop.permute.xlu0 %674
        %676 = vrot.lane.b32.xlu0 %v493, 16
        %v677 = vpop.permute.xlu0 %676
        %678 = vrot.lane.b32.xlu0 %v495, 16
        %v679 = vpop.permute.xlu0 %678
        %680 = vrot.lane.b32.xlu0 %v498, 16
        %v681 = vpop.permute.xlu0 %680
        %682 = vrot.lane.b32.xlu0 %v500, 16
        %v683 = vpop.permute.xlu0 %682
        %684 = vrot.lane.b32.xlu0 %v503, 16
        %v685 = vpop.permute.xlu0 %684
        %686 = vrot.lane.b32.xlu0 %v505, 16
        %v687 = vpop.permute.xlu0 %686
        %688 = vrot.lane.b32.xlu0 %v508, 16
        %v689 = vpop.permute.xlu0 %688
        %690 = vrot.lane.b32.xlu0 %v510, 16
        %v691 = vpop.permute.xlu0 %690
        %692 = vrot.lane.b32.xlu0 %v513, 16
        %v693 = vpop.permute.xlu0 %692
        %694 = vrot.lane.b32.xlu0 %v515, 16
        %v695 = vpop.permute.xlu0 %694
        %696 = vrot.lane.b32.xlu0 %v518, 16
        %v697 = vpop.permute.xlu0 %696
        %698 = vrot.lane.b32.xlu0 %v520, 16
        %v699 = vpop.permute.xlu0 %698
        %700 = vrot.lane.b32.xlu0 %v523, 16
        %v701 = vpop.permute.xlu0 %700
        %702 = vrot.lane.b32.xlu0 %v525, 16
        %v703 = vpop.permute.xlu0 %702
        %704 = vrot.lane.b32.xlu0 %v528, 16
        %v705 = vpop.permute.xlu0 %704
        %706 = vrot.lane.b32.xlu0 %v530, 16
        %v707 = vpop.permute.xlu0 %706
        %708 = vrot.lane.b32.xlu0 %v533, 16
        %v709 = vpop.permute.xlu0 %708
        %710 = vrot.lane.b32.xlu0 %v535, 16
        %v711 = vpop.permute.xlu0 %710
        %712 = vrot.lane.b32.xlu0 %v538, 16
        %v713 = vpop.permute.xlu0 %712
        %714 = vrot.lane.b32.xlu0 %v540, 16
        %v715 = vpop.permute.xlu0 %714
        %716 = vrot.lane.b32.xlu0 %v543, 16
        %v717 = vpop.permute.xlu0 %716
        %718 = vrot.lane.b32.xlu0 %v545, 16
        %v719 = vpop.permute.xlu0 %718
        %720 = vrot.lane.b32.xlu0 %v548, 16
        %v721 = vpop.permute.xlu0 %720
        %722 = vrot.lane.b32.xlu0 %v550, 16
        %v723 = vpop.permute.xlu0 %722
        %724 = vrot.lane.b32.xlu0 %v553, 16
        %v725 = vpop.permute.xlu0 %724
        %726 = vrot.lane.b32.xlu0 %v555, 16
        %v727 = vpop.permute.xlu0 %726
        %728 = vrot.lane.b32.xlu0 %v558, 16
        %v729 = vpop.permute.xlu0 %728
        %730 = vrot.lane.b32.xlu0 %v560, 16
        %v731 = vpop.permute.xlu0 %730
        %764 = vrot.lane.b32.xlu0 %v564, 32
        %v765 = vpop.permute.xlu0 %764
        %766 = vrot.lane.b32.xlu0 %v566, 32
        %v767 = vpop.permute.xlu0 %766
        %768 = vrot.lane.b32.xlu0 %v569, 32
        %v769 = vpop.permute.xlu0 %768
        %770 = vrot.lane.b32.xlu0 %v571, 32
        %v771 = vpop.permute.xlu0 %770
        %772 = vrot.lane.b32.xlu0 %v574, 32
        %v773 = vpop.permute.xlu0 %772
        %774 = vrot.lane.b32.xlu0 %v576, 32
        %v775 = vpop.permute.xlu0 %774
        %776 = vrot.lane.b32.xlu0 %v579, 32
        %v777 = vpop.permute.xlu0 %776
        %778 = vrot.lane.b32.xlu0 %v581, 32
        %v779 = vpop.permute.xlu0 %778
        %780 = vrot.lane.b32.xlu0 %v584, 32
        %v781 = vpop.permute.xlu0 %780
        %782 = vrot.lane.b32.xlu0 %v586, 32
        %v783 = vpop.permute.xlu0 %782
        %784 = vrot.lane.b32.xlu0 %v589, 32
        %v785 = vpop.permute.xlu0 %784
        %786 = vrot.lane.b32.xlu0 %v591, 32
        %v787 = vpop.permute.xlu0 %786
        %788 = vrot.lane.b32.xlu0 %v594, 32
        %v789 = vpop.permute.xlu0 %788
        %790 = vrot.lane.b32.xlu0 %v596, 32
        %v791 = vpop.permute.xlu0 %790
        %792 = vrot.lane.b32.xlu0 %v599, 32
        %v793 = vpop.permute.xlu0 %792
        %794 = vrot.lane.b32.xlu0 %v601, 32
        %v795 = vpop.permute.xlu0 %794
        %796 = vrot.lane.b32.xlu0 %v604, 32
        %v797 = vpop.permute.xlu0 %796
        %798 = vrot.lane.b32.xlu0 %v606, 32
        %v799 = vpop.permute.xlu0 %798
        %800 = vrot.lane.b32.xlu0 %v609, 32
        %v801 = vpop.permute.xlu0 %800
        %802 = vrot.lane.b32.xlu0 %v611, 32
        %v803 = vpop.permute.xlu0 %802
        %804 = vrot.lane.b32.xlu0 %v614, 32
        %v805 = vpop.permute.xlu0 %804
        %806 = vrot.lane.b32.xlu0 %v616, 32
        %v807 = vpop.permute.xlu0 %806
        %808 = vrot.lane.b32.xlu0 %v619, 32
        %v809 = vpop.permute.xlu0 %808
        %810 = vrot.lane.b32.xlu0 %v621, 32
        %v811 = vpop.permute.xlu0 %810
        %812 = vrot.lane.b32.xlu0 %v624, 32
        %v813 = vpop.permute.xlu0 %812
        %814 = vrot.lane.b32.xlu0 %v626, 32
        %v815 = vpop.permute.xlu0 %814
        %816 = vrot.lane.b32.xlu0 %v629, 32
        %v817 = vpop.permute.xlu0 %816
        %818 = vrot.lane.b32.xlu0 %v631, 32
        %v819 = vpop.permute.xlu0 %818
        %820 = vrot.lane.b32.xlu0 %v634, 32
        %v821 = vpop.permute.xlu0 %820
        %822 = vrot.lane.b32.xlu0 %v636, 32
        %v823 = vpop.permute.xlu0 %822
        %824 = vrot.lane.b32.xlu0 %v639, 32
        %v825 = vpop.permute.xlu0 %824
        %826 = vrot.lane.b32.xlu0 %v641, 32
        %v827 = vpop.permute.xlu0 %826
        %860 = vrot.lane.b32.xlu0 %v381, 48
        %v861 = vpop.permute.xlu0 %860
        %862 = vrot.lane.b32.xlu0 %v382, 48
        %v863 = vpop.permute.xlu0 %862
        %864 = vrot.lane.b32.xlu0 %v384, 48
        %v865 = vpop.permute.xlu0 %864
        %866 = vrot.lane.b32.xlu0 %v385, 48
        %v867 = vpop.permute.xlu0 %866
        %868 = vrot.lane.b32.xlu0 %v387, 48
        %v869 = vpop.permute.xlu0 %868
        %870 = vrot.lane.b32.xlu0 %v388, 48
        %v871 = vpop.permute.xlu0 %870
        %872 = vrot.lane.b32.xlu0 %v390, 48
        %v873 = vpop.permute.xlu0 %872
        %874 = vrot.lane.b32.xlu0 %v391, 48
        %v875 = vpop.permute.xlu0 %874
        %876 = vrot.lane.b32.xlu0 %v393, 48
        %v877 = vpop.permute.xlu0 %876
        %878 = vrot.lane.b32.xlu0 %v394, 48
        %v879 = vpop.permute.xlu0 %878
        %880 = vrot.lane.b32.xlu0 %v396, 48
        %v881 = vpop.permute.xlu0 %880
        %882 = vrot.lane.b32.xlu0 %v397, 48
        %v883 = vpop.permute.xlu0 %882
        %884 = vrot.lane.b32.xlu0 %v399, 48
        %v885 = vpop.permute.xlu0 %884
        %886 = vrot.lane.b32.xlu0 %v400, 48
        %v887 = vpop.permute.xlu0 %886
        %888 = vrot.lane.b32.xlu0 %v402, 48
        %v889 = vpop.permute.xlu0 %888
        %890 = vrot.lane.b32.xlu0 %v403, 48
        %v891 = vpop.permute.xlu0 %890
        %892 = vrot.lane.b32.xlu0 %v405, 48
        %v893 = vpop.permute.xlu0 %892
        %894 = vrot.lane.b32.xlu0 %v406, 48
        %v895 = vpop.permute.xlu0 %894
        %896 = vrot.lane.b32.xlu0 %v408, 48
        %v897 = vpop.permute.xlu0 %896
        %898 = vrot.lane.b32.xlu0 %v409, 48
        %v899 = vpop.permute.xlu0 %898
        %900 = vrot.lane.b32.xlu0 %v411, 48
        %v901 = vpop.permute.xlu0 %900
        %902 = vrot.lane.b32.xlu0 %v412, 48
        %v903 = vpop.permute.xlu0 %902
        %904 = vrot.lane.b32.xlu0 %v414, 48
        %v905 = vpop.permute.xlu0 %904
        %906 = vrot.lane.b32.xlu0 %v415, 48
        %v907 = vpop.permute.xlu0 %906
        %908 = vrot.lane.b32.xlu0 %v417, 48
        %v909 = vpop.permute.xlu0 %908
        %910 = vrot.lane.b32.xlu0 %v418, 48
        %v911 = vpop.permute.xlu0 %910
        %912 = vrot.lane.b32.xlu0 %v420, 48
        %v913 = vpop.permute.xlu0 %912
        %914 = vrot.lane.b32.xlu0 %v421, 48
        %v915 = vpop.permute.xlu0 %914
        %916 = vrot.lane.b32.xlu0 %v423, 48
        %v917 = vpop.permute.xlu0 %916
        %918 = vrot.lane.b32.xlu0 %v424, 48
        %v919 = vpop.permute.xlu0 %918
        %920 = vrot.lane.b32.xlu0 %v426, 48
        %v921 = vpop.permute.xlu0 %920
        %922 = vrot.lane.b32.xlu0 %v427, 48
        %v923 = vpop.permute.xlu0 %922
        %956 = vrot.lane.b32.xlu0 %v488, 64
        %v957 = vpop.permute.xlu0 %956
        %958 = vrot.lane.b32.xlu0 %v490, 64
        %v959 = vpop.permute.xlu0 %958
        %960 = vrot.lane.b32.xlu0 %v493, 64
        %v961 = vpop.permute.xlu0 %960
        %962 = vrot.lane.b32.xlu0 %v495, 64
        %v963 = vpop.permute.xlu0 %962
        %964 = vrot.lane.b32.xlu0 %v498, 64
        %v965 = vpop.permute.xlu0 %964
        %966 = vrot.lane.b32.xlu0 %v500, 64
        %v967 = vpop.permute.xlu0 %966
        %968 = vrot.lane.b32.xlu0 %v503, 64
        %v969 = vpop.permute.xlu0 %968
        %970 = vrot.lane.b32.xlu0 %v505, 64
        %v971 = vpop.permute.xlu0 %970
        %972 = vrot.lane.b32.xlu0 %v508, 64
        %v973 = vpop.permute.xlu0 %972
        %974 = vrot.lane.b32.xlu0 %v510, 64
        %v975 = vpop.permute.xlu0 %974
        %976 = vrot.lane.b32.xlu0 %v513, 64
        %v977 = vpop.permute.xlu0 %976
        %978 = vrot.lane.b32.xlu0 %v515, 64
        %v979 = vpop.permute.xlu0 %978
        %980 = vrot.lane.b32.xlu0 %v518, 64
        %v981 = vpop.permute.xlu0 %980
        %982 = vrot.lane.b32.xlu0 %v520, 64
        %v983 = vpop.permute.xlu0 %982
        %984 = vrot.lane.b32.xlu0 %v523, 64
        %v985 = vpop.permute.xlu0 %984
        %986 = vrot.lane.b32.xlu0 %v525, 64
        %v987 = vpop.permute.xlu0 %986
        %988 = vrot.lane.b32.xlu0 %v528, 64
        %v989 = vpop.permute.xlu0 %988
        %990 = vrot.lane.b32.xlu0 %v530, 64
        %v991 = vpop.permute.xlu0 %990
        %992 = vrot.lane.b32.xlu0 %v533, 64
        %v993 = vpop.permute.xlu0 %992
        %994 = vrot.lane.b32.xlu0 %v535, 64
        %v995 = vpop.permute.xlu0 %994
        %996 = vrot.lane.b32.xlu0 %v538, 64
        %v997 = vpop.permute.xlu0 %996
        %998 = vrot.lane.b32.xlu0 %v540, 64
        %v999 = vpop.permute.xlu0 %998
        %1000 = vrot.lane.b32.xlu0 %v543, 64
        %v1001 = vpop.permute.xlu0 %1000
        %1002 = vrot.lane.b32.xlu0 %v545, 64
        %v1003 = vpop.permute.xlu0 %1002
        %1004 = vrot.lane.b32.xlu0 %v548, 64
        %v1005 = vpop.permute.xlu0 %1004
        %1006 = vrot.lane.b32.xlu0 %v550, 64
        %v1007 = vpop.permute.xlu0 %1006
        %1008 = vrot.lane.b32.xlu0 %v553, 64
        %v1009 = vpop.permute.xlu0 %1008
        %1010 = vrot.lane.b32.xlu0 %v555, 64
        %v1011 = vpop.permute.xlu0 %1010
        %1012 = vrot.lane.b32.xlu0 %v558, 64
        %v1013 = vpop.permute.xlu0 %1012
        %1014 = vrot.lane.b32.xlu0 %v560, 64
        %v1015 = vpop.permute.xlu0 %1014
        %1016 = vrot.lane.b32.xlu0 %v647, 64
        %v1017 = vpop.permute.xlu0 %1016
        %1018 = vrot.lane.b32.xlu0 %v649, 64
        %v1019 = vpop.permute.xlu0 %1018
        %1052 = vrot.lane.b32.xlu0 %v569, 80
        %v1053 = vpop.permute.xlu0 %1052
        %1054 = vrot.lane.b32.xlu0 %v571, 80
        %v1055 = vpop.permute.xlu0 %1054
        %1056 = vrot.lane.b32.xlu0 %v574, 80
        %v1057 = vpop.permute.xlu0 %1056
        %1058 = vrot.lane.b32.xlu0 %v576, 80
        %v1059 = vpop.permute.xlu0 %1058
        %1060 = vrot.lane.b32.xlu0 %v579, 80
        %v1061 = vpop.permute.xlu0 %1060
        %1062 = vrot.lane.b32.xlu0 %v581, 80
        %v1063 = vpop.permute.xlu0 %1062
        %1064 = vrot.lane.b32.xlu0 %v584, 80
        %v1065 = vpop.permute.xlu0 %1064
        %1066 = vrot.lane.b32.xlu0 %v586, 80
        %v1067 = vpop.permute.xlu0 %1066
        %1068 = vrot.lane.b32.xlu0 %v589, 80
        %v1069 = vpop.permute.xlu0 %1068
        %1070 = vrot.lane.b32.xlu0 %v591, 80
        %v1071 = vpop.permute.xlu0 %1070
        %1072 = vrot.lane.b32.xlu0 %v594, 80
        %v1073 = vpop.permute.xlu0 %1072
        %1074 = vrot.lane.b32.xlu0 %v596, 80
        %v1075 = vpop.permute.xlu0 %1074
        %1076 = vrot.lane.b32.xlu0 %v599, 80
        %v1077 = vpop.permute.xlu0 %1076
        %1078 = vrot.lane.b32.xlu0 %v601, 80
        %v1079 = vpop.permute.xlu0 %1078
        %1080 = vrot.lane.b32.xlu0 %v604, 80
        %v1081 = vpop.permute.xlu0 %1080
        %1082 = vrot.lane.b32.xlu0 %v606, 80
        %v1083 = vpop.permute.xlu0 %1082
        %1084 = vrot.lane.b32.xlu0 %v609, 80
        %v1085 = vpop.permute.xlu0 %1084
        %1086 = vrot.lane.b32.xlu0 %v611, 80
        %v1087 = vpop.permute.xlu0 %1086
        %1088 = vrot.lane.b32.xlu0 %v614, 80
        %v1089 = vpop.permute.xlu0 %1088
        %1090 = vrot.lane.b32.xlu0 %v616, 80
        %v1091 = vpop.permute.xlu0 %1090
        %1092 = vrot.lane.b32.xlu0 %v619, 80
        %v1093 = vpop.permute.xlu0 %1092
        %1094 = vrot.lane.b32.xlu0 %v621, 80
        %v1095 = vpop.permute.xlu0 %1094
        %1096 = vrot.lane.b32.xlu0 %v624, 80
        %v1097 = vpop.permute.xlu0 %1096
        %1098 = vrot.lane.b32.xlu0 %v626, 80
        %v1099 = vpop.permute.xlu0 %1098
        %1100 = vrot.lane.b32.xlu0 %v629, 80
        %v1101 = vpop.permute.xlu0 %1100
        %1102 = vrot.lane.b32.xlu0 %v631, 80
        %v1103 = vpop.permute.xlu0 %1102
        %1104 = vrot.lane.b32.xlu0 %v634, 80
        %v1105 = vpop.permute.xlu0 %1104
        %1106 = vrot.lane.b32.xlu0 %v636, 80
        %v1107 = vpop.permute.xlu0 %1106
        %1108 = vrot.lane.b32.xlu0 %v639, 80
        %v1109 = vpop.permute.xlu0 %1108
        %1110 = vrot.lane.b32.xlu0 %v641, 80
        %v1111 = vpop.permute.xlu0 %1110
        %1112 = vrot.lane.b32.xlu0 %v652, 80
        %v1113 = vpop.permute.xlu0 %1112
        %1114 = vrot.lane.b32.xlu0 %v654, 80
        %v1115 = vpop.permute.xlu0 %1114
        %1148 = vrot.lane.b32.xlu0 %v384, 96
        %v1149 = vpop.permute.xlu0 %1148
        %1150 = vrot.lane.b32.xlu0 %v385, 96
        %v1151 = vpop.permute.xlu0 %1150
        %1152 = vrot.lane.b32.xlu0 %v387, 96
        %v1153 = vpop.permute.xlu0 %1152
        %1154 = vrot.lane.b32.xlu0 %v388, 96
        %v1155 = vpop.permute.xlu0 %1154
        %1156 = vrot.lane.b32.xlu0 %v390, 96
        %v1157 = vpop.permute.xlu0 %1156
        %1158 = vrot.lane.b32.xlu0 %v391, 96
        %v1159 = vpop.permute.xlu0 %1158
        %1160 = vrot.lane.b32.xlu0 %v393, 96
        %v1161 = vpop.permute.xlu0 %1160
        %1162 = vrot.lane.b32.xlu0 %v394, 96
        %v1163 = vpop.permute.xlu0 %1162
        %1164 = vrot.lane.b32.xlu0 %v396, 96
        %v1165 = vpop.permute.xlu0 %1164
        %1166 = vrot.lane.b32.xlu0 %v397, 96
        %v1167 = vpop.permute.xlu0 %1166
        %1168 = vrot.lane.b32.xlu0 %v399, 96
        %v1169 = vpop.permute.xlu0 %1168
        %1170 = vrot.lane.b32.xlu0 %v400, 96
        %v1171 = vpop.permute.xlu0 %1170
        %1172 = vrot.lane.b32.xlu0 %v402, 96
        %v1173 = vpop.permute.xlu0 %1172
        %1174 = vrot.lane.b32.xlu0 %v403, 96
        %v1175 = vpop.permute.xlu0 %1174
        %1176 = vrot.lane.b32.xlu0 %v405, 96
        %v1177 = vpop.permute.xlu0 %1176
        %1178 = vrot.lane.b32.xlu0 %v406, 96
        %v1179 = vpop.permute.xlu0 %1178
        %1180 = vrot.lane.b32.xlu0 %v408, 96
        %v1181 = vpop.permute.xlu0 %1180
        %1182 = vrot.lane.b32.xlu0 %v409, 96
        %v1183 = vpop.permute.xlu0 %1182
        %1184 = vrot.lane.b32.xlu0 %v411, 96
        %v1185 = vpop.permute.xlu0 %1184
        %1186 = vrot.lane.b32.xlu0 %v412, 96
        %v1187 = vpop.permute.xlu0 %1186
        %1188 = vrot.lane.b32.xlu0 %v414, 96
        %v1189 = vpop.permute.xlu0 %1188
        %1190 = vrot.lane.b32.xlu0 %v415, 96
        %v1191 = vpop.permute.xlu0 %1190
        %1192 = vrot.lane.b32.xlu0 %v417, 96
        %v1193 = vpop.permute.xlu0 %1192
        %1194 = vrot.lane.b32.xlu0 %v418, 96
        %v1195 = vpop.permute.xlu0 %1194
        %1196 = vrot.lane.b32.xlu0 %v420, 96
        %v1197 = vpop.permute.xlu0 %1196
        %1198 = vrot.lane.b32.xlu0 %v421, 96
        %v1199 = vpop.permute.xlu0 %1198
        %1200 = vrot.lane.b32.xlu0 %v423, 96
        %v1201 = vpop.permute.xlu0 %1200
        %1202 = vrot.lane.b32.xlu0 %v424, 96
        %v1203 = vpop.permute.xlu0 %1202
        %1204 = vrot.lane.b32.xlu0 %v426, 96
        %v1205 = vpop.permute.xlu0 %1204
        %1206 = vrot.lane.b32.xlu0 %v427, 96
        %v1207 = vpop.permute.xlu0 %1206
        %1208 = vrot.lane.b32.xlu0 %v429, 96
        %v1209 = vpop.permute.xlu0 %1208
        %1210 = vrot.lane.b32.xlu0 %v430, 96
        %v1211 = vpop.permute.xlu0 %1210
        %1244 = vrot.lane.b32.xlu0 %v493, 112
        %v1245 = vpop.permute.xlu0 %1244
        %1246 = vrot.lane.b32.xlu0 %v495, 112
        %v1247 = vpop.permute.xlu0 %1246
        %1248 = vrot.lane.b32.xlu0 %v498, 112
        %v1249 = vpop.permute.xlu0 %1248
        %1250 = vrot.lane.b32.xlu0 %v500, 112
        %v1251 = vpop.permute.xlu0 %1250
        %1252 = vrot.lane.b32.xlu0 %v503, 112
        %v1253 = vpop.permute.xlu0 %1252
        %1254 = vrot.lane.b32.xlu0 %v505, 112
        %v1255 = vpop.permute.xlu0 %1254
        %1256 = vrot.lane.b32.xlu0 %v508, 112
        %v1257 = vpop.permute.xlu0 %1256
        %1258 = vrot.lane.b32.xlu0 %v510, 112
        %v1259 = vpop.permute.xlu0 %1258
        %1260 = vrot.lane.b32.xlu0 %v513, 112
        %v1261 = vpop.permute.xlu0 %1260
        %1262 = vrot.lane.b32.xlu0 %v515, 112
        %v1263 = vpop.permute.xlu0 %1262
        %1264 = vrot.lane.b32.xlu0 %v518, 112
        %v1265 = vpop.permute.xlu0 %1264
        %1266 = vrot.lane.b32.xlu0 %v520, 112
        %v1267 = vpop.permute.xlu0 %1266
        %1268 = vrot.lane.b32.xlu0 %v523, 112
        %v1269 = vpop.permute.xlu0 %1268
        %1270 = vrot.lane.b32.xlu0 %v525, 112
        %v1271 = vpop.permute.xlu0 %1270
        %1272 = vrot.lane.b32.xlu0 %v528, 112
        %v1273 = vpop.permute.xlu0 %1272
        %1274 = vrot.lane.b32.xlu0 %v530, 112
        %v1275 = vpop.permute.xlu0 %1274
        %1276 = vrot.lane.b32.xlu0 %v533, 112
        %v1277 = vpop.permute.xlu0 %1276
        %1278 = vrot.lane.b32.xlu0 %v535, 112
        %v1279 = vpop.permute.xlu0 %1278
        %1280 = vrot.lane.b32.xlu0 %v538, 112
        %v1281 = vpop.permute.xlu0 %1280
        %1282 = vrot.lane.b32.xlu0 %v540, 112
        %v1283 = vpop.permute.xlu0 %1282
        %1284 = vrot.lane.b32.xlu0 %v543, 112
        %v1285 = vpop.permute.xlu0 %1284
        %1286 = vrot.lane.b32.xlu0 %v545, 112
        %v1287 = vpop.permute.xlu0 %1286
        %1288 = vrot.lane.b32.xlu0 %v548, 112
        %v1289 = vpop.permute.xlu0 %1288
        %1290 = vrot.lane.b32.xlu0 %v550, 112
        %v1291 = vpop.permute.xlu0 %1290
        %1292 = vrot.lane.b32.xlu0 %v553, 112
        %v1293 = vpop.permute.xlu0 %1292
        %1294 = vrot.lane.b32.xlu0 %v555, 112
        %v1295 = vpop.permute.xlu0 %1294
        %1296 = vrot.lane.b32.xlu0 %v558, 112
        %v1297 = vpop.permute.xlu0 %1296
        %1298 = vrot.lane.b32.xlu0 %v560, 112
        %v1299 = vpop.permute.xlu0 %1298
        %1300 = vrot.lane.b32.xlu0 %v647, 112
        %v1301 = vpop.permute.xlu0 %1300
        %1302 = vrot.lane.b32.xlu0 %v649, 112
        %v1303 = vpop.permute.xlu0 %1302
        %1304 = vrot.lane.b32.xlu0 %v660, 112
        %v1305 = vpop.permute.xlu0 %1304
        %1306 = vrot.lane.b32.xlu0 %v662, 112
        %v1307 = vpop.permute.xlu0 %1306
        %vm1340 = vcmask 130048
        %v1341 = vsel %vm1340, %v378, %v669
        %v1342 = vsel %vm1340, %v379, %v671
        %v1343 = vsel %vm1340, %v381, %v673
        %v1344 = vsel %vm1340, %v382, %v675
        %v1345 = vsel %vm1340, %v384, %v677
        %v1346 = vsel %vm1340, %v385, %v679
        %v1347 = vsel %vm1340, %v387, %v681
        %v1348 = vsel %vm1340, %v388, %v683
        %v1349 = vsel %vm1340, %v390, %v685
        %v1350 = vsel %vm1340, %v391, %v687
        %v1351 = vsel %vm1340, %v393, %v689
        %v1352 = vsel %vm1340, %v394, %v691
        %v1353 = vsel %vm1340, %v396, %v693
        %v1354 = vsel %vm1340, %v397, %v695
        %v1355 = vsel %vm1340, %v399, %v697
        %v1356 = vsel %vm1340, %v400, %v699
        %v1357 = vsel %vm1340, %v402, %v701
        %v1358 = vsel %vm1340, %v403, %v703
        %v1359 = vsel %vm1340, %v405, %v705
        %v1360 = vsel %vm1340, %v406, %v707
        %v1361 = vsel %vm1340, %v408, %v709
        %v1362 = vsel %vm1340, %v409, %v711
        %v1363 = vsel %vm1340, %v411, %v713
        %v1364 = vsel %vm1340, %v412, %v715
        %v1365 = vsel %vm1340, %v414, %v717
        %v1366 = vsel %vm1340, %v415, %v719
        %v1367 = vsel %vm1340, %v417, %v721
        %v1368 = vsel %vm1340, %v418, %v723
        %v1369 = vsel %vm1340, %v420, %v725
        %v1370 = vsel %vm1340, %v421, %v727
        %v1371 = vsel %vm1340, %v423, %v729
        %v1372 = vsel %vm1340, %v424, %v731
        %vm1373 = vcmask 261120
        %v1374 = vsel %vm1373, %v1341, %v765
        %v1375 = vsel %vm1373, %v1342, %v767
        %v1376 = vsel %vm1373, %v1343, %v769
        %v1377 = vsel %vm1373, %v1344, %v771
        %v1378 = vsel %vm1373, %v1345, %v773
        %v1379 = vsel %vm1373, %v1346, %v775
        %v1380 = vsel %vm1373, %v1347, %v777
        %v1381 = vsel %vm1373, %v1348, %v779
        %v1382 = vsel %vm1373, %v1349, %v781
        %v1383 = vsel %vm1373, %v1350, %v783
        %v1384 = vsel %vm1373, %v1351, %v785
        %v1385 = vsel %vm1373, %v1352, %v787
        %v1386 = vsel %vm1373, %v1353, %v789
        %v1387 = vsel %vm1373, %v1354, %v791
        %v1388 = vsel %vm1373, %v1355, %v793
        %v1389 = vsel %vm1373, %v1356, %v795
        %v1390 = vsel %vm1373, %v1357, %v797
        %v1391 = vsel %vm1373, %v1358, %v799
        %v1392 = vsel %vm1373, %v1359, %v801
        %v1393 = vsel %vm1373, %v1360, %v803
        %v1394 = vsel %vm1373, %v1361, %v805
        %v1395 = vsel %vm1373, %v1362, %v807
        %v1396 = vsel %vm1373, %v1363, %v809
        %v1397 = vsel %vm1373, %v1364, %v811
        %v1398 = vsel %vm1373, %v1365, %v813
        %v1399 = vsel %vm1373, %v1366, %v815
        %v1400 = vsel %vm1373, %v1367, %v817
        %v1401 = vsel %vm1373, %v1368, %v819
        %v1402 = vsel %vm1373, %v1369, %v821
        %v1403 = vsel %vm1373, %v1370, %v823
        %v1404 = vsel %vm1373, %v1371, %v825
        %v1405 = vsel %vm1373, %v1372, %v827
        %vm1406 = vcmask 392192
        %v1407 = vsel %vm1406, %v1374, %v861
        %v1408 = vsel %vm1406, %v1375, %v863
        %v1409 = vsel %vm1406, %v1376, %v865
        %v1410 = vsel %vm1406, %v1377, %v867
        %v1411 = vsel %vm1406, %v1378, %v869
        %v1412 = vsel %vm1406, %v1379, %v871
        %v1413 = vsel %vm1406, %v1380, %v873
        %v1414 = vsel %vm1406, %v1381, %v875
        %v1415 = vsel %vm1406, %v1382, %v877
        %v1416 = vsel %vm1406, %v1383, %v879
        %v1417 = vsel %vm1406, %v1384, %v881
        %v1418 = vsel %vm1406, %v1385, %v883
        %v1419 = vsel %vm1406, %v1386, %v885
        %v1420 = vsel %vm1406, %v1387, %v887
        %v1421 = vsel %vm1406, %v1388, %v889
        %v1422 = vsel %vm1406, %v1389, %v891
        %v1423 = vsel %vm1406, %v1390, %v893
        %v1424 = vsel %vm1406, %v1391, %v895
        %v1425 = vsel %vm1406, %v1392, %v897
        %v1426 = vsel %vm1406, %v1393, %v899
        %v1427 = vsel %vm1406, %v1394, %v901
        %v1428 = vsel %vm1406, %v1395, %v903
        %v1429 = vsel %vm1406, %v1396, %v905
        %v1430 = vsel %vm1406, %v1397, %v907
        %v1431 = vsel %vm1406, %v1398, %v909
        %v1432 = vsel %vm1406, %v1399, %v911
        %v1433 = vsel %vm1406, %v1400, %v913
        %v1434 = vsel %vm1406, %v1401, %v915
        %v1435 = vsel %vm1406, %v1402, %v917
        %v1436 = vsel %vm1406, %v1403, %v919
        %v1437 = vsel %vm1406, %v1404, %v921
        %v1438 = vsel %vm1406, %v1405, %v923
        %vm1439 = vcmask 523264
        %v1440 = vsel %vm1439, %v1407, %v957
        %v1441 = vsel %vm1439, %v1408, %v959
        %v1442 = vsel %vm1439, %v1409, %v961
        %v1443 = vsel %vm1439, %v1410, %v963
        %v1444 = vsel %vm1439, %v1411, %v965
        %v1445 = vsel %vm1439, %v1412, %v967
        %v1446 = vsel %vm1439, %v1413, %v969
        %v1447 = vsel %vm1439, %v1414, %v971
        %v1448 = vsel %vm1439, %v1415, %v973
        %v1449 = vsel %vm1439, %v1416, %v975
        %v1450 = vsel %vm1439, %v1417, %v977
        %v1451 = vsel %vm1439, %v1418, %v979
        %v1452 = vsel %vm1439, %v1419, %v981
        %v1453 = vsel %vm1439, %v1420, %v983
        %v1454 = vsel %vm1439, %v1421, %v985
        %v1455 = vsel %vm1439, %v1422, %v987
        %v1456 = vsel %vm1439, %v1423, %v989
        %v1457 = vsel %vm1439, %v1424, %v991
        %v1458 = vsel %vm1439, %v1425, %v993
        %v1459 = vsel %vm1439, %v1426, %v995
        %v1460 = vsel %vm1439, %v1427, %v997
        %v1461 = vsel %vm1439, %v1428, %v999
        %v1462 = vsel %vm1439, %v1429, %v1001
        %v1463 = vsel %vm1439, %v1430, %v1003
        %v1464 = vsel %vm1439, %v1431, %v1005
        %v1465 = vsel %vm1439, %v1432, %v1007
        %v1466 = vsel %vm1439, %v1433, %v1009
        %v1467 = vsel %vm1439, %v1434, %v1011
        %v1468 = vsel %vm1439, %v1435, %v1013
        %v1469 = vsel %vm1439, %v1436, %v1015
        %v1470 = vsel %vm1439, %v1437, %v1017
        %v1471 = vsel %vm1439, %v1438, %v1019
        %vm1472 = vcmask 654336
        %v1473 = vsel %vm1472, %v1440, %v1053
        %v1474 = vsel %vm1472, %v1441, %v1055
        %v1475 = vsel %vm1472, %v1442, %v1057
        %v1476 = vsel %vm1472, %v1443, %v1059
        %v1477 = vsel %vm1472, %v1444, %v1061
        %v1478 = vsel %vm1472, %v1445, %v1063
        %v1479 = vsel %vm1472, %v1446, %v1065
        %v1480 = vsel %vm1472, %v1447, %v1067
        %v1481 = vsel %vm1472, %v1448, %v1069
        %v1482 = vsel %vm1472, %v1449, %v1071
        %v1483 = vsel %vm1472, %v1450, %v1073
        %v1484 = vsel %vm1472, %v1451, %v1075
        %v1485 = vsel %vm1472, %v1452, %v1077
        %v1486 = vsel %vm1472, %v1453, %v1079
        %v1487 = vsel %vm1472, %v1454, %v1081
        %v1488 = vsel %vm1472, %v1455, %v1083
        %v1489 = vsel %vm1472, %v1456, %v1085
        %v1490 = vsel %vm1472, %v1457, %v1087
        %v1491 = vsel %vm1472, %v1458, %v1089
        %v1492 = vsel %vm1472, %v1459, %v1091
        %v1493 = vsel %vm1472, %v1460, %v1093
        %v1494 = vsel %vm1472, %v1461, %v1095
        %v1495 = vsel %vm1472, %v1462, %v1097
        %v1496 = vsel %vm1472, %v1463, %v1099
        %v1497 = vsel %vm1472, %v1464, %v1101
        %v1498 = vsel %vm1472, %v1465, %v1103
        %v1499 = vsel %vm1472, %v1466, %v1105
        %v1500 = vsel %vm1472, %v1467, %v1107
        %v1501 = vsel %vm1472, %v1468, %v1109
        %v1502 = vsel %vm1472, %v1469, %v1111
        %v1503 = vsel %vm1472, %v1470, %v1113
        %v1504 = vsel %vm1472, %v1471, %v1115
        %vm1505 = vcmask 785408
        %v1506 = vsel %vm1505, %v1473, %v1149
        %v1507 = vsel %vm1505, %v1474, %v1151
        %v1508 = vsel %vm1505, %v1475, %v1153
        %v1509 = vsel %vm1505, %v1476, %v1155
        %v1510 = vsel %vm1505, %v1477, %v1157
        %v1511 = vsel %vm1505, %v1478, %v1159
        %v1512 = vsel %vm1505, %v1479, %v1161
        %v1513 = vsel %vm1505, %v1480, %v1163
        %v1514 = vsel %vm1505, %v1481, %v1165
        %v1515 = vsel %vm1505, %v1482, %v1167
        %v1516 = vsel %vm1505, %v1483, %v1169
        %v1517 = vsel %vm1505, %v1484, %v1171
        %v1518 = vsel %vm1505, %v1485, %v1173
        %v1519 = vsel %vm1505, %v1486, %v1175
        %v1520 = vsel %vm1505, %v1487, %v1177
        %v1521 = vsel %vm1505, %v1488, %v1179
        %v1522 = vsel %vm1505, %v1489, %v1181
        %v1523 = vsel %vm1505, %v1490, %v1183
        %v1524 = vsel %vm1505, %v1491, %v1185
        %v1525 = vsel %vm1505, %v1492, %v1187
        %v1526 = vsel %vm1505, %v1493, %v1189
        %v1527 = vsel %vm1505, %v1494, %v1191
        %v1528 = vsel %vm1505, %v1495, %v1193
        %v1529 = vsel %vm1505, %v1496, %v1195
        %v1530 = vsel %vm1505, %v1497, %v1197
        %v1531 = vsel %vm1505, %v1498, %v1199
        %v1532 = vsel %vm1505, %v1499, %v1201
        %v1533 = vsel %vm1505, %v1500, %v1203
        %v1534 = vsel %vm1505, %v1501, %v1205
        %v1535 = vsel %vm1505, %v1502, %v1207
        %v1536 = vsel %vm1505, %v1503, %v1209
        %v1537 = vsel %vm1505, %v1504, %v1211
        %vm1538 = vcmask 916480
        %v1539 = vsel %vm1538, %v1506, %v1245
        %v1540 = vsel %vm1538, %v1507, %v1247
        %v1541 = vsel %vm1538, %v1508, %v1249
        %v1542 = vsel %vm1538, %v1509, %v1251
        %v1543 = vsel %vm1538, %v1510, %v1253
        %v1544 = vsel %vm1538, %v1511, %v1255
        %v1545 = vsel %vm1538, %v1512, %v1257
        %v1546 = vsel %vm1538, %v1513, %v1259
        %v1547 = vsel %vm1538, %v1514, %v1261
        %v1548 = vsel %vm1538, %v1515, %v1263
        %v1549 = vsel %vm1538, %v1516, %v1265
        %v1550 = vsel %vm1538, %v1517, %v1267
        %v1551 = vsel %vm1538, %v1518, %v1269
        %v1552 = vsel %vm1538, %v1519, %v1271
        %v1553 = vsel %vm1538, %v1520, %v1273
        %v1554 = vsel %vm1538, %v1521, %v1275
        %v1555 = vsel %vm1538, %v1522, %v1277
        %v1556 = vsel %vm1538, %v1523, %v1279
        %v1557 = vsel %vm1538, %v1524, %v1281
        %v1558 = vsel %vm1538, %v1525, %v1283
        %v1559 = vsel %vm1538, %v1526, %v1285
        %v1560 = vsel %vm1538, %v1527, %v1287
        %v1561 = vsel %vm1538, %v1528, %v1289
        %v1562 = vsel %vm1538, %v1529, %v1291
        %v1563 = vsel %vm1538, %v1530, %v1293
        %v1564 = vsel %vm1538, %v1531, %v1295
        %v1565 = vsel %vm1538, %v1532, %v1297
        %v1566 = vsel %vm1538, %v1533, %v1299
        %v1567 = vsel %vm1538, %v1534, %v1301
        %v1568 = vsel %vm1538, %v1535, %v1303
        %v1569 = vsel %vm1538, %v1536, %v1305
        %v1570 = vsel %vm1538, %v1537, %v1307
        %v1571 = vld [vmem:[#allocation6] sm:$0xff]
        %v1572 = vld [vmem:[#allocation6 + $0x8] sm:$0xff]
        %v1573 = vld [vmem:[#allocation6 + $0x10] sm:$0xff]
        %v1574 = vld [vmem:[#allocation6 + $0x18] sm:$0xff]
        %v1575 = vld [vmem:[#allocation6 + $0x20] sm:$0xff]
        %v1576 = vld [vmem:[#allocation6 + $0x28] sm:$0xff]
        %v1577 = vld [vmem:[#allocation6 + $0x30] sm:$0xff]
        %v1578 = vld [vmem:[#allocation6 + $0x38] sm:$0xff]
        %v1579 = vld [vmem:[#allocation6 + $0x40] sm:$0xff]
        %v1580 = vld [vmem:[#allocation6 + $0x48] sm:$0xff]
        %v1581 = vld [vmem:[#allocation6 + $0x50] sm:$0xff]
        %v1582 = vld [vmem:[#allocation6 + $0x58] sm:$0xff]
        %v1583 = vld [vmem:[#allocation6 + $0x60] sm:$0xff]
        %v1584 = vld [vmem:[#allocation6 + $0x68] sm:$0xff]
        %v1585 = vld [vmem:[#allocation6 + $0x70] sm:$0xff]
        %v1586 = vld [vmem:[#allocation6 + $0x78] sm:$0xff]
        %v1587 = vld [vmem:[#allocation6 + $0x80] sm:$0xff]
        %v1588 = vld [vmem:[#allocation6 + $0x88] sm:$0xff]
        %v1589 = vld [vmem:[#allocation8] sm:$0x1]
        %v1591 = vlaneseq
        %v1592 = vshrl.u32 %v1591, 7
        %v1593 = vsub.s32 0, %v1592
        %v1594 = vrot.slane %v1589, %v1593
        %v1596 = vsel %vm1340, %v574, 0
        %v1598 = vsel %vm1340, %v576, 0
        %v1600 = vsel %vm1340, %v579, 0
        %v1602 = vsel %vm1340, %v581, 0
        %v1604 = vsel %vm1340, %v584, 0
        %v1606 = vsel %vm1340, %v586, 0
        %v1608 = vsel %vm1340, %v589, 0
        %v1610 = vsel %vm1340, %v591, 0
        %v1612 = vsel %vm1340, %v594, 0
        %v1614 = vsel %vm1340, %v596, 0
        %v1616 = vsel %vm1340, %v599, 0
        %v1618 = vsel %vm1340, %v601, 0
        %v1620 = vsel %vm1340, %v604, 0
        %v1622 = vsel %vm1340, %v606, 0
        %v1624 = vsel %vm1340, %v609, 0
        %v1626 = vsel %vm1340, %v611, 0
        %v1628 = vsel %vm1340, %v614, 0
        %v1630 = vsel %vm1340, %v616, 0
        %v1632 = vsel %vm1340, %v619, 0
        %v1634 = vsel %vm1340, %v621, 0
        %v1636 = vsel %vm1340, %v624, 0
        %v1638 = vsel %vm1340, %v626, 0
        %v1640 = vsel %vm1340, %v629, 0
        %v1642 = vsel %vm1340, %v631, 0
        %v1644 = vsel %vm1340, %v634, 0
        %v1646 = vsel %vm1340, %v636, 0
        %v1648 = vsel %vm1340, %v639, 0
        %v1650 = vsel %vm1340, %v641, 0
        %v1652 = vsel %vm1340, %v652, 0
        %v1654 = vsel %vm1340, %v654, 0
        %v1656 = vsel %vm1340, %v665, 0
        %v1658 = vsel %vm1340, %v667, 0
        %1660 = vmatprep.subr.mxu0 0.0
        %1661 = vmatpush1.msra.mxu0 %v1571
        %1662 = vmatprep.subr.mxu0 0.0
        %1663 = vmatpush1.msra.mxu0 %v1572
        %1664 = vmatprep.subr.mxu0 0.0
        %1665 = vmatpush1.msra.mxu0 %v1573
        %1666 = vmatprep.subr.mxu0 0.0
        %1667 = vmatpush1.msra.mxu0 %v1574
        %1668 = vmatprep.subr.mxu0 0.0
        %1669 = vmatpush1.msra.mxu0 %v1575
        %1670 = vmatprep.subr.mxu0 0.0
        %1671 = vmatpush1.msra.mxu0 %v1576
        %1672 = vmatprep.subr.mxu0 0.0
        %1673 = vmatpush1.msra.mxu0 %v1577
        %1674 = vmatprep.subr.mxu0 0.0
        %1675 = vmatpush1.msra.mxu0 %v1578
        %1676 = vmatprep.subr.mxu0 0.0
        %1677 = vmatpush1.msra.mxu0 %v1579
        %1678 = vmatprep.subr.mxu0 0.0
        %1679 = vmatpush1.msra.mxu0 %v1580
        %1680 = vmatprep.subr.mxu0 0.0
        %1681 = vmatpush1.msra.mxu0 %v1581
        %1682 = vmatprep.subr.mxu0 0.0
        %1683 = vmatpush1.msra.mxu0 %v1582
        %1684 = vmatprep.subr.mxu0 0.0
        %1685 = vmatpush1.msra.mxu0 %v1583
        %1686 = vmatprep.subr.mxu0 0.0
        %1687 = vmatpush1.msra.mxu0 %v1584
        %1688 = vmatprep.subr.mxu0 0.0
        %1689 = vmatpush1.msra.mxu0 %v1585
        %1690 = vmatprep.subr.mxu0 0.0
        %1691 = vmatpush1.msra.mxu0 %v1586
        %1692 = vmatprep.subr.mxu0 0.0
        %1693 = vmatpush1.msra.mxu0 %v1587
        %1694 = vmatprep.subr.mxu0 0.0
        %1695 = vmatpush1.msra.mxu0 %v1588
        %1696 = vmatprep.subr.mxu0 0.0
        %1697 = vmatpush1.msra.mxu0 0.0
        %1698 = vmatprep.subr.mxu0 0.0
        %1699 = vmatpush1.msra.mxu0 0.0
        %1700 = vmatprep.subr.mxu0 0.0
        %1701 = vmatpush1.msra.mxu0 0.0
        %1702 = vmatprep.subr.mxu0 0.0
        %1703 = vmatpush1.msra.mxu0 0.0
        %1704 = vmatprep.subr.mxu0 0.0
        %1705 = vmatpush1.msra.mxu0 0.0
        %1706 = vmatprep.subr.mxu0 0.0
        %1707 = vmatpush1.msra.mxu0 0.0
        %1708 = vmatprep.subr.mxu0 0.0
        %1709 = vmatpush1.msra.mxu0 0.0
        %1710 = vmatprep.subr.mxu0 0.0
        %1711 = vmatpush1.msra.mxu0 0.0
        %1712 = vmatprep.subr.mxu0 0.0
        %1713 = vmatpush1.msra.mxu0 0.0
        %1714 = vmatprep.subr.mxu0 0.0
        %1715 = vmatpush1.msra.mxu0 0.0
        %1716 = vmatprep.subr.mxu0 0.0
        %1717 = vmatpush1.msra.mxu0 0.0
        %1718 = vmatprep.subr.mxu0 0.0
        %1719 = vmatpush1.msra.mxu0 0.0
        %1720 = vmatprep.subr.mxu0 0.0
        %1721 = vmatpush1.msra.mxu0 0.0
        %1722 = vmatprep.subr.mxu0 0.0
        %1723 = vmatpush1.msra.mxu0 0.0
        %1724 = vmatprep.mubr.f32.mxu0 %v1596
        %1725 = vmatmul.mubr.f32.gmra.mrb[0].mxu0 %v1539
        %v1726 = vpop.f32.mrb[0].mxu0
        %v1727 = vadd.f32 %v1594, %v1726
        %v1728 = vpop.f32.mrb[0].mxu0
        %1729 = vmatprep.mubr.f32.mxu0 %v1598
        %1730 = vmatmul.mubr.f32.gmra.mrb[0].mxu0 %v1540
        %v1731 = vpop.f32.mrb[0].mxu0
        %v1732 = vadd.f32 %v1594, %v1731
        %v1733 = vpop.f32.mrb[0].mxu0
        %1734 = vmatprep.mubr.f32.mxu0 %v1600
        %1735 = vmatmul.mubr.f32.gmra.mrb[0].mxu0 %v1541
        %v1736 = vpop.f32.mrb[0].mxu0
        %v1737 = vadd.f32 %v1594, %v1736
        %v1738 = vpop.f32.mrb[0].mxu0
        %1739 = vmatprep.mubr.f32.mxu0 %v1602
        %1740 = vmatmul.mubr.f32.gmra.mrb[0].mxu0 %v1542
        %v1741 = vpop.f32.mrb[0].mxu0
        %v1742 = vadd.f32 %v1594, %v1741
        %v1743 = vpop.f32.mrb[0].mxu0
        %1744 = vmatprep.mubr.f32.mxu0 %v1604
        %1745 = vmatmul.mubr.f32.gmra.mrb[0].mxu0 %v1543
        %v1746 = vpop.f32.mrb[0].mxu0
        %v1747 = vadd.f32 %v1594, %v1746
        %v1748 = vpop.f32.mrb[0].mxu0
        %1749 = vmatprep.mubr.f32.mxu0 %v1606
        %1750 = vmatmul.mubr.f32.gmra.mrb[0].mxu0 %v1544
        %v1751 = vpop.f32.mrb[0].mxu0
        %v1752 = vadd.f32 %v1594, %v1751
        %v1753 = vpop.f32.mrb[0].mxu0
        %1754 = vmatprep.mubr.f32.mxu0 %v1608
        %1755 = vmatmul.mubr.f32.gmra.mrb[0].mxu0 %v1545
        %v1756 = vpop.f32.mrb[0].mxu0
        %v1757 = vadd.f32 %v1594, %v1756
        %v1758 = vpop.f32.mrb[0].mxu0
        %1759 = vmatprep.mubr.f32.mxu0 %v1610
        %1760 = vmatmul.mubr.f32.gmra.mrb[0].mxu0 %v1546
        %v1761 = vpop.f32.mrb[0].mxu0
        %v1762 = vadd.f32 %v1594, %v1761
        %v1763 = vpop.f32.mrb[0].mxu0
        %1764 = vmatprep.mubr.f32.mxu0 %v1612
        %1765 = vmatmul.mubr.f32.gmra.mrb[0].mxu0 %v1547
        %v1766 = vpop.f32.mrb[0].mxu0
        %v1767 = vadd.f32 %v1594, %v1766
        %v1768 = vpop.f32.mrb[0].mxu0
        %1769 = vmatprep.mubr.f32.mxu0 %v1614
        %1770 = vmatmul.mubr.f32.gmra.mrb[0].mxu0 %v1548
        %v1771 = vpop.f32.mrb[0].mxu0
        %v1772 = vadd.f32 %v1594, %v1771
        %v1773 = vpop.f32.mrb[0].mxu0
        %1774 = vmatprep.mubr.f32.mxu0 %v1616
        %1775 = vmatmul.mubr.f32.gmra.mrb[0].mxu0 %v1549
        %v1776 = vpop.f32.mrb[0].mxu0
        %v1777 = vadd.f32 %v1594, %v1776
        %v1778 = vpop.f32.mrb[0].mxu0
        %1779 = vmatprep.mubr.f32.mxu0 %v1618
        %1780 = vmatmul.mubr.f32.gmra.mrb[0].mxu0 %v1550
        %v1781 = vpop.f32.mrb[0].mxu0
        %v1782 = vadd.f32 %v1594, %v1781
        %v1783 = vpop.f32.mrb[0].mxu0
        %1784 = vmatprep.mubr.f32.mxu0 %v1620
        %1785 = vmatmul.mubr.f32.gmra.mrb[0].mxu0 %v1551
        %v1786 = vpop.f32.mrb[0].mxu0
        %v1787 = vadd.f32 %v1594, %v1786
        %v1788 = vpop.f32.mrb[0].mxu0
        %1789 = vmatprep.mubr.f32.mxu0 %v1622
        %1790 = vmatmul.mubr.f32.gmra.mrb[0].mxu0 %v1552
        %v1791 = vpop.f32.mrb[0].mxu0
        %v1792 = vadd.f32 %v1594, %v1791
        %v1793 = vpop.f32.mrb[0].mxu0
        %1794 = vmatprep.mubr.f32.mxu0 %v1624
        %1795 = vmatmul.mubr.f32.gmra.mrb[0].mxu0 %v1553
        %v1796 = vpop.f32.mrb[0].mxu0
        %v1797 = vadd.f32 %v1594, %v1796
        %v1798 = vpop.f32.mrb[0].mxu0
        %1799 = vmatprep.mubr.f32.mxu0 %v1626
        %1800 = vmatmul.mubr.f32.gmra.mrb[0].mxu0 %v1554
        %v1801 = vpop.f32.mrb[0].mxu0
        %v1802 = vadd.f32 %v1594, %v1801
        %v1803 = vpop.f32.mrb[0].mxu0
        %1804 = vmatprep.mubr.f32.mxu0 %v1628
        %1805 = vmatmul.mubr.f32.gmra.mrb[0].mxu0 %v1555
        %v1806 = vpop.f32.mrb[0].mxu0
        %v1807 = vadd.f32 %v1594, %v1806
        %v1808 = vpop.f32.mrb[0].mxu0
        %1809 = vmatprep.mubr.f32.mxu0 %v1630
        %1810 = vmatmul.mubr.f32.gmra.mrb[0].mxu0 %v1556
        %v1811 = vpop.f32.mrb[0].mxu0
        %v1812 = vadd.f32 %v1594, %v1811
        %v1813 = vpop.f32.mrb[0].mxu0
        %1814 = vmatprep.mubr.f32.mxu0 %v1632
        %1815 = vmatmul.mubr.f32.gmra.mrb[0].mxu0 %v1557
        %v1816 = vpop.f32.mrb[0].mxu0
        %v1817 = vadd.f32 %v1594, %v1816
        %v1818 = vpop.f32.mrb[0].mxu0
        %1819 = vmatprep.mubr.f32.mxu0 %v1634
        %1820 = vmatmul.mubr.f32.gmra.mrb[0].mxu0 %v1558
        %v1821 = vpop.f32.mrb[0].mxu0
        %v1822 = vadd.f32 %v1594, %v1821
        %v1823 = vpop.f32.mrb[0].mxu0
        %1824 = vmatprep.mubr.f32.mxu0 %v1636
        %1825 = vmatmul.mubr.f32.gmra.mrb[0].mxu0 %v1559
        %v1826 = vpop.f32.mrb[0].mxu0
        %v1827 = vadd.f32 %v1594, %v1826
        %v1828 = vpop.f32.mrb[0].mxu0
        %1829 = vmatprep.mubr.f32.mxu0 %v1638
        %1830 = vmatmul.mubr.f32.gmra.mrb[0].mxu0 %v1560
        %v1831 = vpop.f32.mrb[0].mxu0
        %v1832 = vadd.f32 %v1594, %v1831
        %v1833 = vpop.f32.mrb[0].mxu0
        %1834 = vmatprep.mubr.f32.mxu0 %v1640
        %1835 = vmatmul.mubr.f32.gmra.mrb[0].mxu0 %v1561
        %v1836 = vpop.f32.mrb[0].mxu0
        %v1837 = vadd.f32 %v1594, %v1836
        %v1838 = vpop.f32.mrb[0].mxu0
        %1839 = vmatprep.mubr.f32.mxu0 %v1642
        %1840 = vmatmul.mubr.f32.gmra.mrb[0].mxu0 %v1562
        %v1841 = vpop.f32.mrb[0].mxu0
        %v1842 = vadd.f32 %v1594, %v1841
        %v1843 = vpop.f32.mrb[0].mxu0
        %1844 = vmatprep.mubr.f32.mxu0 %v1644
        %1845 = vmatmul.mubr.f32.gmra.mrb[0].mxu0 %v1563
        %v1846 = vpop.f32.mrb[0].mxu0
        %v1847 = vadd.f32 %v1594, %v1846
        %v1848 = vpop.f32.mrb[0].mxu0
        %1849 = vmatprep.mubr.f32.mxu0 %v1646
        %1850 = vmatmul.mubr.f32.gmra.mrb[0].mxu0 %v1564
        %v1851 = vpop.f32.mrb[0].mxu0
        %v1852 = vadd.f32 %v1594, %v1851
        %v1853 = vpop.f32.mrb[0].mxu0
        %1854 = vmatprep.mubr.f32.mxu0 %v1648
        %1855 = vmatmul.mubr.f32.gmra.mrb[0].mxu0 %v1565
        %v1856 = vpop.f32.mrb[0].mxu0
        %v1857 = vadd.f32 %v1594, %v1856
        %v1858 = vpop.f32.mrb[0].mxu0
        %1859 = vmatprep.mubr.f32.mxu0 %v1650
        %1860 = vmatmul.mubr.f32.gmra.mrb[0].mxu0 %v1566
        %v1861 = vpop.f32.mrb[0].mxu0
        %v1862 = vadd.f32 %v1594, %v1861
        %v1863 = vpop.f32.mrb[0].mxu0
        %1864 = vmatprep.mubr.f32.mxu0 %v1652
        %1865 = vmatmul.mubr.f32.gmra.mrb[0].mxu0 %v1567
        %v1866 = vpop.f32.mrb[0].mxu0
        %v1867 = vadd.f32 %v1594, %v1866
        %v1868 = vpop.f32.mrb[0].mxu0
        %1869 = vmatprep.mubr.f32.mxu0 %v1654
        %1870 = vmatmul.mubr.f32.gmra.mrb[0].mxu0 %v1568
        %v1871 = vpop.f32.mrb[0].mxu0
        %v1872 = vadd.f32 %v1594, %v1871
        %v1873 = vpop.f32.mrb[0].mxu0
        %1874 = vmatprep.mubr.f32.mxu0 %v1656
        %1875 = vmatmul.mubr.f32.gmra.mrb[0].mxu0 %v1569
        %v1876 = vpop.f32.mrb[0].mxu0
        %v1877 = vadd.f32 %v1594, %v1876
        %v1878 = vpop.f32.mrb[0].mxu0
        %1879 = vmatprep.mubr.f32.mxu0 %v1658
        %1880 = vmatmul.mubr.f32.gmra.mrb[0].mxu0 %v1570
        %v1881 = vpop.f32.mrb[0].mxu0
        %v1882 = vadd.f32 %v1594, %v1881
        %v1883 = vpop.f32.mrb[0].mxu0
        %1884 = vdwg.mxu0
        %v1885 = vmax.f32 %v1727, 0.0
        %v1886 = vmax.f32 %v1732, 0.0
        %v1887 = vmax.f32 %v1737, 0.0
        %v1888 = vmax.f32 %v1742, 0.0
        %v1889 = vmax.f32 %v1747, 0.0
        %v1890 = vmax.f32 %v1752, 0.0
        %v1891 = vmax.f32 %v1757, 0.0
        %v1892 = vmax.f32 %v1762, 0.0
        %v1893 = vmax.f32 %v1767, 0.0
        %v1894 = vmax.f32 %v1772, 0.0
        %v1895 = vmax.f32 %v1777, 0.0
        %v1896 = vmax.f32 %v1782, 0.0
        %v1897 = vmax.f32 %v1787, 0.0
        %v1898 = vmax.f32 %v1792, 0.0
        %v1899 = vmax.f32 %v1797, 0.0
        %v1900 = vmax.f32 %v1802, 0.0
        %v1901 = vmax.f32 %v1807, 0.0
        %v1902 = vmax.f32 %v1812, 0.0
        %v1903 = vmax.f32 %v1817, 0.0
        %v1904 = vmax.f32 %v1822, 0.0
        %v1905 = vmax.f32 %v1827, 0.0
        %v1906 = vmax.f32 %v1832, 0.0
        %v1907 = vmax.f32 %v1837, 0.0
        %v1908 = vmax.f32 %v1842, 0.0
        %v1909 = vmax.f32 %v1847, 0.0
        %v1910 = vmax.f32 %v1852, 0.0
        %v1911 = vmax.f32 %v1857, 0.0
        %v1912 = vmax.f32 %v1862, 0.0
        %v1913 = vmax.f32 %v1867, 0.0
        %v1914 = vmax.f32 %v1872, 0.0
        %v1915 = vmax.f32 %v1877, 0.0
        %v1916 = vmax.f32 %v1882, 0.0
        %vm1917 = vcmask 64512
        %1918 = vst.msk [vmem:[#allocation2] sm:$0xff] %vm1917, 0.0
        %1919 = vst.msk [vmem:[#allocation2 + $0x8] sm:$0xff] %vm1917, 0.0
        %vm1920 = vcmask 58368
        %1921 = vst.msk [vmem:[#allocation2 + $0x10] sm:$0x3] %vm1920, 0.0
        %s1922 = scalar_lea.vmem [#allocation2], 408
        %1923 = vst.msk [vmem:[%s1922] sm:$0xff] %vm1917, 0.0
        %1924 = vst.msk [vmem:[%s1922 + $0x8] sm:$0xff] %vm1917, 0.0
        %1925 = vst.msk [vmem:[%s1922 + $0x10] sm:$0x3] %vm1920, 0.0
        %vm1926 = vcmask 57344
        %1927 = vst.msk [vmem:[#allocation2] sm:$0x1] %vm1926, 0.0
        %1928 = vst.msk [vmem:[#allocation2 + $0x18] sm:$0x1] %vm1926, 0.0
        %1929 = vst.msk [vmem:[#allocation2 + $0x30] sm:$0x1] %vm1926, 0.0
        %1930 = vst.msk [vmem:[#allocation2 + $0x48] sm:$0x1] %vm1926, 0.0
        %1931 = vst.msk [vmem:[#allocation2 + $0x60] sm:$0x1] %vm1926, 0.0
        %1932 = vst.msk [vmem:[#allocation2 + $0x78] sm:$0x1] %vm1926, 0.0
        %1933 = vst.msk [vmem:[#allocation2 + $0x90] sm:$0x1] %vm1926, 0.0
        %1934 = vst.msk [vmem:[#allocation2 + $0xa8] sm:$0x1] %vm1926, 0.0
        %1935 = vst.msk [vmem:[#allocation2 + $0xc0] sm:$0x1] %vm1926, 0.0
        %1936 = vst.msk [vmem:[#allocation2 + $0xd8] sm:$0x1] %vm1926, 0.0
        %1937 = vst.msk [vmem:[#allocation2 + $0xf0] sm:$0x1] %vm1926, 0.0
        %1938 = vst.msk [vmem:[#allocation2 + $0x108] sm:$0x1] %vm1926, 0.0
        %1939 = vst.msk [vmem:[#allocation2 + $0x120] sm:$0x1] %vm1926, 0.0
        %1940 = vst.msk [vmem:[#allocation2 + $0x138] sm:$0x1] %vm1926, 0.0
        %1941 = vst.msk [vmem:[#allocation2 + $0x150] sm:$0x1] %vm1926, 0.0
        %1942 = vst.msk [vmem:[#allocation2 + $0x168] sm:$0x1] %vm1926, 0.0
        %1943 = vst.msk [vmem:[#allocation2 + $0x180] sm:$0x1] %vm1926, 0.0
        %1944 = vst.msk [vmem:[#allocation2 + $0x198] sm:$0x1] %vm1926, 0.0
        %1945 = vst.msk [vmem:[#allocation2 + $0x11] sm:$0x1] %vm1926, 0.0
        %1946 = vst.msk [vmem:[#allocation2 + $0x29] sm:$0x1] %vm1926, 0.0
        %1947 = vst.msk [vmem:[#allocation2 + $0x41] sm:$0x1] %vm1926, 0.0
        %1948 = vst.msk [vmem:[#allocation2 + $0x59] sm:$0x1] %vm1926, 0.0
        %1949 = vst.msk [vmem:[#allocation2 + $0x71] sm:$0x1] %vm1926, 0.0
        %1950 = vst.msk [vmem:[#allocation2 + $0x89] sm:$0x1] %vm1926, 0.0
        %1951 = vst.msk [vmem:[#allocation2 + $0xa1] sm:$0x1] %vm1926, 0.0
        %1952 = vst.msk [vmem:[#allocation2 + $0xb9] sm:$0x1] %vm1926, 0.0
        %1953 = vst.msk [vmem:[#allocation2 + $0xd1] sm:$0x1] %vm1926, 0.0
        %1954 = vst.msk [vmem:[#allocation2 + $0xe9] sm:$0x1] %vm1926, 0.0
        %1955 = vst.msk [vmem:[#allocation2 + $0x101] sm:$0x1] %vm1926, 0.0
        %1956 = vst.msk [vmem:[#allocation2 + $0x119] sm:$0x1] %vm1926, 0.0
        %1957 = vst.msk [vmem:[#allocation2 + $0x131] sm:$0x1] %vm1926, 0.0
        %1958 = vst.msk [vmem:[#allocation2 + $0x149] sm:$0x1] %vm1926, 0.0
        %1959 = vst.msk [vmem:[#allocation2 + $0x161] sm:$0x1] %vm1926, 0.0
        %1960 = vst.msk [vmem:[#allocation2 + $0x179] sm:$0x1] %vm1926, 0.0
        %1961 = vst.msk [vmem:[#allocation2 + $0x191] sm:$0x1] %vm1926, 0.0
        %1962 = vst.msk [vmem:[#allocation2 + $0x1a9] sm:$0x1] %vm1926, 0.0
        %s1963 = scalar_lea.vmem [#allocation2], 24
        %1964 = vst.msk [vmem:[%s1963 + $0x1] sm:$0xff] %vm1917, %v1885
        %1965 = vst.msk [vmem:[%s1963 + $0x9] sm:$0xff] %vm1917, %v1886
        %1966 = vst.msk [vmem:[%s1963 + $0x19] sm:$0xff] %vm1917, %v1887
        %1967 = vst.msk [vmem:[%s1963 + $0x21] sm:$0xff] %vm1917, %v1888
        %1968 = vst.msk [vmem:[%s1963 + $0x31] sm:$0xff] %vm1917, %v1889
        %1969 = vst.msk [vmem:[%s1963 + $0x39] sm:$0xff] %vm1917, %v1890
        %1970 = vst.msk [vmem:[%s1963 + $0x49] sm:$0xff] %vm1917, %v1891
        %1971 = vst.msk [vmem:[%s1963 + $0x51] sm:$0xff] %vm1917, %v1892
        %1972 = vst.msk [vmem:[%s1963 + $0x61] sm:$0xff] %vm1917, %v1893
        %1973 = vst.msk [vmem:[%s1963 + $0x69] sm:$0xff] %vm1917, %v1894
        %1974 = vst.msk [vmem:[%s1963 + $0x79] sm:$0xff] %vm1917, %v1895
        %1975 = vst.msk [vmem:[%s1963 + $0x81] sm:$0xff] %vm1917, %v1896
        %1976 = vst.msk [vmem:[%s1963 + $0x91] sm:$0xff] %vm1917, %v1897
        %1977 = vst.msk [vmem:[%s1963 + $0x99] sm:$0xff] %vm1917, %v1898
        %1978 = vst.msk [vmem:[%s1963 + $0xa9] sm:$0xff] %vm1917, %v1899
        %1979 = vst.msk [vmem:[%s1963 + $0xb1] sm:$0xff] %vm1917, %v1900
        %1980 = vst.msk [vmem:[%s1963 + $0xc1] sm:$0xff] %vm1917, %v1901
        %1981 = vst.msk [vmem:[%s1963 + $0xc9] sm:$0xff] %vm1917, %v1902
        %1982 = vst.msk [vmem:[%s1963 + $0xd9] sm:$0xff] %vm1917, %v1903
        %1983 = vst.msk [vmem:[%s1963 + $0xe1] sm:$0xff] %vm1917, %v1904
        %1984 = vst.msk [vmem:[%s1963 + $0xf1] sm:$0xff] %vm1917, %v1905
        %1985 = vst.msk [vmem:[%s1963 + $0xf9] sm:$0xff] %vm1917, %v1906
        %1986 = vst.msk [vmem:[%s1963 + $0x109] sm:$0xff] %vm1917, %v1907
        %1987 = vst.msk [vmem:[%s1963 + $0x111] sm:$0xff] %vm1917, %v1908
        %1988 = vst.msk [vmem:[%s1963 + $0x121] sm:$0xff] %vm1917, %v1909
        %1989 = vst.msk [vmem:[%s1963 + $0x129] sm:$0xff] %vm1917, %v1910
        %1990 = vst.msk [vmem:[%s1963 + $0x139] sm:$0xff] %vm1917, %v1911
        %1991 = vst.msk [vmem:[%s1963 + $0x141] sm:$0xff] %vm1917, %v1912
        %1992 = vst.msk [vmem:[%s1963 + $0x151] sm:$0xff] %vm1917, %v1913
        %1993 = vst.msk [vmem:[%s1963 + $0x159] sm:$0xff] %vm1917, %v1914
        %1994 = vst.msk [vmem:[%s1963 + $0x169] sm:$0xff] %vm1917, %v1915
        %1995 = vst.msk [vmem:[%s1963 + $0x171] sm:$0xff] %vm1917, %v1916
        %v1996 = vld [vmem:[#allocation2] sm:$0xff]
        %v1997 = vld [vmem:[#allocation2 + $0x8] sm:$0xff]
        %v1998 = vld [vmem:[#allocation2 + $0x10] sm:$0x3]
        %v1999 = vld [vmem:[#allocation2 + $0x18] sm:$0xff]
        %v2000 = vld [vmem:[#allocation2 + $0x20] sm:$0xff]
        %v2001 = vld [vmem:[#allocation2 + $0x28] sm:$0x3]
        %v2002 = vld [vmem:[#allocation2 + $0x30] sm:$0xff]
        %v2003 = vld [vmem:[#allocation2 + $0x38] sm:$0xff]
        %v2004 = vld [vmem:[#allocation2 + $0x40] sm:$0x3]
        %v2005 = vld [vmem:[#allocation2 + $0x48] sm:$0xff]
        %v2006 = vld [vmem:[#allocation2 + $0x50] sm:$0xff]
        %v2007 = vld [vmem:[#allocation2 + $0x58] sm:$0x3]
        %v2008 = vld [vmem:[#allocation2 + $0x60] sm:$0xff]
        %v2009 = vld [vmem:[#allocation2 + $0x68] sm:$0xff]
        %v2010 = vld [vmem:[#allocation2 + $0x70] sm:$0x3]
        %v2011 = vld [vmem:[#allocation2 + $0x78] sm:$0xff]
        %v2012 = vld [vmem:[#allocation2 + $0x80] sm:$0xff]
        %v2013 = vld [vmem:[#allocation2 + $0x88] sm:$0x3]
        %v2014 = vld [vmem:[#allocation2 + $0x90] sm:$0xff]
        %v2015 = vld [vmem:[#allocation2 + $0x98] sm:$0xff]
        %v2016 = vld [vmem:[#allocation2 + $0xa0] sm:$0x3]
        %v2017 = vld [vmem:[#allocation2 + $0xa8] sm:$0xff]
        %v2018 = vld [vmem:[#allocation2 + $0xb0] sm:$0xff]
        %v2019 = vld [vmem:[#allocation2 + $0xb8] sm:$0x3]
        %v2020 = vld [vmem:[#allocation2 + $0xc0] sm:$0xff]
        %v2021 = vld [vmem:[#allocation2 + $0xc8] sm:$0xff]
        %v2022 = vld [vmem:[#allocation2 + $0xd0] sm:$0x3]
        %v2023 = vld [vmem:[#allocation2 + $0xd8] sm:$0xff]
        %v2024 = vld [vmem:[#allocation2 + $0xe0] sm:$0xff]
        %v2025 = vld [vmem:[#allocation2 + $0xe8] sm:$0x3]
        %v2026 = vld [vmem:[#allocation2 + $0xf0] sm:$0xff]
        %v2027 = vld [vmem:[#allocation2 + $0xf8] sm:$0xff]
        %v2028 = vld [vmem:[#allocation2 + $0x100] sm:$0x3]
        %v2029 = vld [vmem:[#allocation2 + $0x108] sm:$0xff]
        %v2030 = vld [vmem:[#allocation2 + $0x110] sm:$0xff]
        %v2031 = vld [vmem:[#allocation2 + $0x118] sm:$0x3]
        %v2032 = vld [vmem:[#allocation2 + $0x120] sm:$0xff]
        %v2033 = vld [vmem:[#allocation2 + $0x128] sm:$0xff]
        %v2034 = vld [vmem:[#allocation2 + $0x130] sm:$0x3]
        %v2035 = vld [vmem:[#allocation2 + $0x138] sm:$0xff]
        %v2036 = vld [vmem:[#allocation2 + $0x140] sm:$0xff]
        %v2037 = vld [vmem:[#allocation2 + $0x148] sm:$0x3]
        %v2038 = vld [vmem:[#allocation2 + $0x150] sm:$0xff]
        %v2039 = vld [vmem:[#allocation2 + $0x158] sm:$0xff]
        %v2040 = vld [vmem:[#allocation2 + $0x160] sm:$0x3]
        %v2041 = vld [vmem:[#allocation2 + $0x168] sm:$0xff]
        %v2042 = vld [vmem:[#allocation2 + $0x170] sm:$0xff]
        %v2043 = vld [vmem:[#allocation2 + $0x178] sm:$0x3]
        %v2044 = vld [vmem:[#allocation2 + $0x180] sm:$0xff]
        %v2045 = vld [vmem:[#allocation2 + $0x188] sm:$0xff]
        %v2046 = vld [vmem:[#allocation2 + $0x190] sm:$0x3]
        %v2047 = vld [vmem:[#allocation2 + $0x198] sm:$0xff]
        %v2048 = vld [vmem:[#allocation2 + $0x1a0] sm:$0xff]
        %v2049 = vld [vmem:[#allocation2 + $0x1a8] sm:$0x3]
        %v2098 = vrot.slane %v1996, 1
        %v2099 = vrot.slane %v1997, 1
        %v2100 = vsel %vm480, %v2098, %v2099
        %v2101 = vrot.slane %v1998, 1
        %v2102 = vsel %vm480, %v2099, %v2101
        %v2103 = vrot.slane %v1999, 1
        %v2104 = vrot.slane %v2000, 1
        %v2105 = vsel %vm480, %v2103, %v2104
        %v2106 = vrot.slane %v2001, 1
        %v2107 = vsel %vm480, %v2104, %v2106
        %v2108 = vrot.slane %v2002, 1
        %v2109 = vrot.slane %v2003, 1
        %v2110 = vsel %vm480, %v2108, %v2109
        %v2111 = vrot.slane %v2004, 1
        %v2112 = vsel %vm480, %v2109, %v2111
        %v2113 = vrot.slane %v2005, 1
        %v2114 = vrot.slane %v2006, 1
        %v2115 = vsel %vm480, %v2113, %v2114
        %v2116 = vrot.slane %v2007, 1
        %v2117 = vsel %vm480, %v2114, %v2116
        %v2118 = vrot.slane %v2008, 1
        %v2119 = vrot.slane %v2009, 1
        %v2120 = vsel %vm480, %v2118, %v2119
        %v2121 = vrot.slane %v2010, 1
        %v2122 = vsel %vm480, %v2119, %v2121
        %v2123 = vrot.slane %v2011, 1
        %v2124 = vrot.slane %v2012, 1
        %v2125 = vsel %vm480, %v2123, %v2124
        %v2126 = vrot.slane %v2013, 1
        %v2127 = vsel %vm480, %v2124, %v2126
        %v2128 = vrot.slane %v2014, 1
        %v2129 = vrot.slane %v2015, 1
        %v2130 = vsel %vm480, %v2128, %v2129
        %v2131 = vrot.slane %v2016, 1
        %v2132 = vsel %vm480, %v2129, %v2131
        %v2133 = vrot.slane %v2017, 1
        %v2134 = vrot.slane %v2018, 1
        %v2135 = vsel %vm480, %v2133, %v2134
        %v2136 = vrot.slane %v2019, 1
        %v2137 = vsel %vm480, %v2134, %v2136
        %v2138 = vrot.slane %v2020, 1
        %v2139 = vrot.slane %v2021, 1
        %v2140 = vsel %vm480, %v2138, %v2139
        %v2141 = vrot.slane %v2022, 1
        %v2142 = vsel %vm480, %v2139, %v2141
        %v2143 = vrot.slane %v2023, 1
        %v2144 = vrot.slane %v2024, 1
        %v2145 = vsel %vm480, %v2143, %v2144
        %v2146 = vrot.slane %v2025, 1
        %v2147 = vsel %vm480, %v2144, %v2146
        %v2148 = vrot.slane %v2026, 1
        %v2149 = vrot.slane %v2027, 1
        %v2150 = vsel %vm480, %v2148, %v2149
        %v2151 = vrot.slane %v2028, 1
        %v2152 = vsel %vm480, %v2149, %v2151
        %v2153 = vrot.slane %v2029, 1
        %v2154 = vrot.slane %v2030, 1
        %v2155 = vsel %vm480, %v2153, %v2154
        %v2156 = vrot.slane %v2031, 1
        %v2157 = vsel %vm480, %v2154, %v2156
        %v2158 = vrot.slane %v2032, 1
        %v2159 = vrot.slane %v2033, 1
        %v2160 = vsel %vm480, %v2158, %v2159
        %v2161 = vrot.slane %v2034, 1
        %v2162 = vsel %vm480, %v2159, %v2161
        %v2163 = vrot.slane %v2035, 1
        %v2164 = vrot.slane %v2036, 1
        %v2165 = vsel %vm480, %v2163, %v2164
        %v2166 = vrot.slane %v2037, 1
        %v2167 = vsel %vm480, %v2164, %v2166
        %v2168 = vrot.slane %v2038, 1
        %v2169 = vrot.slane %v2039, 1
        %v2170 = vsel %vm480, %v2168, %v2169
        %v2171 = vrot.slane %v2040, 1
        %v2172 = vsel %vm480, %v2169, %v2171
        %v2173 = vrot.slane %v2041, 1
        %v2174 = vrot.slane %v2042, 1
        %v2175 = vsel %vm480, %v2173, %v2174
        %v2176 = vrot.slane %v2043, 1
        %v2177 = vsel %vm480, %v2174, %v2176
        %v2178 = vrot.slane %v1996, 2
        %v2179 = vrot.slane %v1997, 2
        %v2180 = vsel %vm561, %v2178, %v2179
        %v2181 = vrot.slane %v1998, 2
        %v2182 = vsel %vm561, %v2179, %v2181
        %v2183 = vrot.slane %v1999, 2
        %v2184 = vrot.slane %v2000, 2
        %v2185 = vsel %vm561, %v2183, %v2184
        %v2186 = vrot.slane %v2001, 2
        %v2187 = vsel %vm561, %v2184, %v2186
        %v2188 = vrot.slane %v2002, 2
        %v2189 = vrot.slane %v2003, 2
        %v2190 = vsel %vm561, %v2188, %v2189
        %v2191 = vrot.slane %v2004, 2
        %v2192 = vsel %vm561, %v2189, %v2191
        %v2193 = vrot.slane %v2005, 2
        %v2194 = vrot.slane %v2006, 2
        %v2195 = vsel %vm561, %v2193, %v2194
        %v2196 = vrot.slane %v2007, 2
        %v2197 = vsel %vm561, %v2194, %v2196
        %v2198 = vrot.slane %v2008, 2
        %v2199 = vrot.slane %v2009, 2
        %v2200 = vsel %vm561, %v2198, %v2199
        %v2201 = vrot.slane %v2010, 2
        %v2202 = vsel %vm561, %v2199, %v2201
        %v2203 = vrot.slane %v2011, 2
        %v2204 = vrot.slane %v2012, 2
        %v2205 = vsel %vm561, %v2203, %v2204
        %v2206 = vrot.slane %v2013, 2
        %v2207 = vsel %vm561, %v2204, %v2206
        %v2208 = vrot.slane %v2014, 2
        %v2209 = vrot.slane %v2015, 2
        %v2210 = vsel %vm561, %v2208, %v2209
        %v2211 = vrot.slane %v2016, 2
        %v2212 = vsel %vm561, %v2209, %v2211
        %v2213 = vrot.slane %v2017, 2
        %v2214 = vrot.slane %v2018, 2
        %v2215 = vsel %vm561, %v2213, %v2214
        %v2216 = vrot.slane %v2019, 2
        %v2217 = vsel %vm561, %v2214, %v2216
        %v2218 = vrot.slane %v2020, 2
        %v2219 = vrot.slane %v2021, 2
        %v2220 = vsel %vm561, %v2218, %v2219
        %v2221 = vrot.slane %v2022, 2
        %v2222 = vsel %vm561, %v2219, %v2221
        %v2223 = vrot.slane %v2023, 2
        %v2224 = vrot.slane %v2024, 2
        %v2225 = vsel %vm561, %v2223, %v2224
        %v2226 = vrot.slane %v2025, 2
        %v2227 = vsel %vm561, %v2224, %v2226
        %v2228 = vrot.slane %v2026, 2
        %v2229 = vrot.slane %v2027, 2
        %v2230 = vsel %vm561, %v2228, %v2229
        %v2231 = vrot.slane %v2028, 2
        %v2232 = vsel %vm561, %v2229, %v2231
        %v2233 = vrot.slane %v2029, 2
        %v2234 = vrot.slane %v2030, 2
        %v2235 = vsel %vm561, %v2233, %v2234
        %v2236 = vrot.slane %v2031, 2
        %v2237 = vsel %vm561, %v2234, %v2236
        %v2238 = vrot.slane %v2032, 2
        %v2239 = vrot.slane %v2033, 2
        %v2240 = vsel %vm561, %v2238, %v2239
        %v2241 = vrot.slane %v2034, 2
        %v2242 = vsel %vm561, %v2239, %v2241
        %v2243 = vrot.slane %v2035, 2
        %v2244 = vrot.slane %v2036, 2
        %v2245 = vsel %vm561, %v2243, %v2244
        %v2246 = vrot.slane %v2037, 2
        %v2247 = vsel %vm561, %v2244, %v2246
        %v2248 = vrot.slane %v2038, 2
        %v2249 = vrot.slane %v2039, 2
        %v2250 = vsel %vm561, %v2248, %v2249
        %v2251 = vrot.slane %v2040, 2
        %v2252 = vsel %vm561, %v2249, %v2251
        %v2253 = vrot.slane %v2041, 2
        %v2254 = vrot.slane %v2042, 2
        %v2255 = vsel %vm561, %v2253, %v2254
        %v2256 = vrot.slane %v2043, 2
        %v2257 = vsel %vm561, %v2254, %v2256
        %v2261 = vrot.slane %v2044, 1
        %v2262 = vrot.slane %v2045, 1
        %v2263 = vsel %vm480, %v2261, %v2262
        %v2264 = vrot.slane %v2046, 1
        %v2265 = vsel %vm480, %v2262, %v2264
        %v2266 = vrot.slane %v2044, 2
        %v2267 = vrot.slane %v2045, 2
        %v2268 = vsel %vm561, %v2266, %v2267
        %v2269 = vrot.slane %v2046, 2
        %v2270 = vsel %vm561, %v2267, %v2269
        %v2274 = vrot.slane %v2047, 1
        %v2275 = vrot.slane %v2048, 1
        %v2276 = vsel %vm480, %v2274, %v2275
        %v2277 = vrot.slane %v2049, 1
        %v2278 = vsel %vm480, %v2275, %v2277
        %v2279 = vrot.slane %v2047, 2
        %v2280 = vrot.slane %v2048, 2
        %v2281 = vsel %vm561, %v2279, %v2280
        %v2282 = vrot.slane %v2049, 2
        %v2283 = vsel %vm561, %v2280, %v2282
        %2284 = vrot.lane.b32.xlu0 %v2100, 8
        %v2285 = vpop.permute.xlu0 %2284
        %2286 = vrot.lane.b32.xlu0 %v2102, 8
        %v2287 = vpop.permute.xlu0 %2286
        %2288 = vrot.lane.b32.xlu0 %v2105, 8
        %v2289 = vpop.permute.xlu0 %2288
        %2290 = vrot.lane.b32.xlu0 %v2107, 8
        %v2291 = vpop.permute.xlu0 %2290
        %2292 = vrot.lane.b32.xlu0 %v2110, 8
        %v2293 = vpop.permute.xlu0 %2292
        %2294 = vrot.lane.b32.xlu0 %v2112, 8
        %v2295 = vpop.permute.xlu0 %2294
        %2296 = vrot.lane.b32.xlu0 %v2115, 8
        %v2297 = vpop.permute.xlu0 %2296
        %2298 = vrot.lane.b32.xlu0 %v2117, 8
        %v2299 = vpop.permute.xlu0 %2298
        %2300 = vrot.lane.b32.xlu0 %v2120, 8
        %v2301 = vpop.permute.xlu0 %2300
        %2302 = vrot.lane.b32.xlu0 %v2122, 8
        %v2303 = vpop.permute.xlu0 %2302
        %2304 = vrot.lane.b32.xlu0 %v2125, 8
        %v2305 = vpop.permute.xlu0 %2304
        %2306 = vrot.lane.b32.xlu0 %v2127, 8
        %v2307 = vpop.permute.xlu0 %2306
        %2308 = vrot.lane.b32.xlu0 %v2130, 8
        %v2309 = vpop.permute.xlu0 %2308
        %2310 = vrot.lane.b32.xlu0 %v2132, 8
        %v2311 = vpop.permute.xlu0 %2310
        %2312 = vrot.lane.b32.xlu0 %v2135, 8
        %v2313 = vpop.permute.xlu0 %2312
        %2314 = vrot.lane.b32.xlu0 %v2137, 8
        %v2315 = vpop.permute.xlu0 %2314
        %2316 = vrot.lane.b32.xlu0 %v2140, 8
        %v2317 = vpop.permute.xlu0 %2316
        %2318 = vrot.lane.b32.xlu0 %v2142, 8
        %v2319 = vpop.permute.xlu0 %2318
        %2320 = vrot.lane.b32.xlu0 %v2145, 8
        %v2321 = vpop.permute.xlu0 %2320
        %2322 = vrot.lane.b32.xlu0 %v2147, 8
        %v2323 = vpop.permute.xlu0 %2322
        %2324 = vrot.lane.b32.xlu0 %v2150, 8
        %v2325 = vpop.permute.xlu0 %2324
        %2326 = vrot.lane.b32.xlu0 %v2152, 8
        %v2327 = vpop.permute.xlu0 %2326
        %2328 = vrot.lane.b32.xlu0 %v2155, 8
        %v2329 = vpop.permute.xlu0 %2328
        %2330 = vrot.lane.b32.xlu0 %v2157, 8
        %v2331 = vpop.permute.xlu0 %2330
        %2332 = vrot.lane.b32.xlu0 %v2160, 8
        %v2333 = vpop.permute.xlu0 %2332
        %2334 = vrot.lane.b32.xlu0 %v2162, 8
        %v2335 = vpop.permute.xlu0 %2334
        %2336 = vrot.lane.b32.xlu0 %v2165, 8
        %v2337 = vpop.permute.xlu0 %2336
        %2338 = vrot.lane.b32.xlu0 %v2167, 8
        %v2339 = vpop.permute.xlu0 %2338
        %2340 = vrot.lane.b32.xlu0 %v2170, 8
        %v2341 = vpop.permute.xlu0 %2340
        %2342 = vrot.lane.b32.xlu0 %v2172, 8
        %v2343 = vpop.permute.xlu0 %2342
        %2344 = vrot.lane.b32.xlu0 %v2175, 8
        %v2345 = vpop.permute.xlu0 %2344
        %2346 = vrot.lane.b32.xlu0 %v2177, 8
        %v2347 = vpop.permute.xlu0 %2346
        %2380 = vrot.lane.b32.xlu0 %v2180, 16
        %v2381 = vpop.permute.xlu0 %2380
        %2382 = vrot.lane.b32.xlu0 %v2182, 16
        %v2383 = vpop.permute.xlu0 %2382
        %2384 = vrot.lane.b32.xlu0 %v2185, 16
        %v2385 = vpop.permute.xlu0 %2384
        %2386 = vrot.lane.b32.xlu0 %v2187, 16
        %v2387 = vpop.permute.xlu0 %2386
        %2388 = vrot.lane.b32.xlu0 %v2190, 16
        %v2389 = vpop.permute.xlu0 %2388
        %2390 = vrot.lane.b32.xlu0 %v2192, 16
        %v2391 = vpop.permute.xlu0 %2390
        %2392 = vrot.lane.b32.xlu0 %v2195, 16
        %v2393 = vpop.permute.xlu0 %2392
        %2394 = vrot.lane.b32.xlu0 %v2197, 16
        %v2395 = vpop.permute.xlu0 %2394
        %2396 = vrot.lane.b32.xlu0 %v2200, 16
        %v2397 = vpop.permute.xlu0 %2396
        %2398 = vrot.lane.b32.xlu0 %v2202, 16
        %v2399 = vpop.permute.xlu0 %2398
        %2400 = vrot.lane.b32.xlu0 %v2205, 16
        %v2401 = vpop.permute.xlu0 %2400
        %2402 = vrot.lane.b32.xlu0 %v2207, 16
        %v2403 = vpop.permute.xlu0 %2402
        %2404 = vrot.lane.b32.xlu0 %v2210, 16
        %v2405 = vpop.permute.xlu0 %2404
        %2406 = vrot.lane.b32.xlu0 %v2212, 16
        %v2407 = vpop.permute.xlu0 %2406
        %2408 = vrot.lane.b32.xlu0 %v2215, 16
        %v2409 = vpop.permute.xlu0 %2408
        %2410 = vrot.lane.b32.xlu0 %v2217, 16
        %v2411 = vpop.permute.xlu0 %2410
        %2412 = vrot.lane.b32.xlu0 %v2220, 16
        %v2413 = vpop.permute.xlu0 %2412
        %2414 = vrot.lane.b32.xlu0 %v2222, 16
        %v2415 = vpop.permute.xlu0 %2414
        %2416 = vrot.lane.b32.xlu0 %v2225, 16
        %v2417 = vpop.permute.xlu0 %2416
        %2418 = vrot.lane.b32.xlu0 %v2227, 16
        %v2419 = vpop.permute.xlu0 %2418
        %2420 = vrot.lane.b32.xlu0 %v2230, 16
        %v2421 = vpop.permute.xlu0 %2420
        %2422 = vrot.lane.b32.xlu0 %v2232, 16
        %v2423 = vpop.permute.xlu0 %2422
        %2424 = vrot.lane.b32.xlu0 %v2235, 16
        %v2425 = vpop.permute.xlu0 %2424
        %2426 = vrot.lane.b32.xlu0 %v2237, 16
        %v2427 = vpop.permute.xlu0 %2426
        %2428 = vrot.lane.b32.xlu0 %v2240, 16
        %v2429 = vpop.permute.xlu0 %2428
        %2430 = vrot.lane.b32.xlu0 %v2242, 16
        %v2431 = vpop.permute.xlu0 %2430
        %2432 = vrot.lane.b32.xlu0 %v2245, 16
        %v2433 = vpop.permute.xlu0 %2432
        %2434 = vrot.lane.b32.xlu0 %v2247, 16
        %v2435 = vpop.permute.xlu0 %2434
        %2436 = vrot.lane.b32.xlu0 %v2250, 16
        %v2437 = vpop.permute.xlu0 %2436
        %2438 = vrot.lane.b32.xlu0 %v2252, 16
        %v2439 = vpop.permute.xlu0 %2438
        %2440 = vrot.lane.b32.xlu0 %v2255, 16
        %v2441 = vpop.permute.xlu0 %2440
        %2442 = vrot.lane.b32.xlu0 %v2257, 16
        %v2443 = vpop.permute.xlu0 %2442
        %2476 = vrot.lane.b32.xlu0 %v1999, 24
        %v2477 = vpop.permute.xlu0 %2476
        %2478 = vrot.lane.b32.xlu0 %v2000, 24
        %v2479 = vpop.permute.xlu0 %2478
        %2480 = vrot.lane.b32.xlu0 %v2002, 24
        %v2481 = vpop.permute.xlu0 %2480
        %2482 = vrot.lane.b32.xlu0 %v2003, 24
        %v2483 = vpop.permute.xlu0 %2482
        %2484 = vrot.lane.b32.xlu0 %v2005, 24
        %v2485 = vpop.permute.xlu0 %2484
        %2486 = vrot.lane.b32.xlu0 %v2006, 24
        %v2487 = vpop.permute.xlu0 %2486
        %2488 = vrot.lane.b32.xlu0 %v2008, 24
        %v2489 = vpop.permute.xlu0 %2488
        %2490 = vrot.lane.b32.xlu0 %v2009, 24
        %v2491 = vpop.permute.xlu0 %2490
        %2492 = vrot.lane.b32.xlu0 %v2011, 24
        %v2493 = vpop.permute.xlu0 %2492
        %2494 = vrot.lane.b32.xlu0 %v2012, 24
        %v2495 = vpop.permute.xlu0 %2494
        %2496 = vrot.lane.b32.xlu0 %v2014, 24
        %v2497 = vpop.permute.xlu0 %2496
        %2498 = vrot.lane.b32.xlu0 %v2015, 24
        %v2499 = vpop.permute.xlu0 %2498
        %2500 = vrot.lane.b32.xlu0 %v2017, 24
        %v2501 = vpop.permute.xlu0 %2500
        %2502 = vrot.lane.b32.xlu0 %v2018, 24
        %v2503 = vpop.permute.xlu0 %2502
        %2504 = vrot.lane.b32.xlu0 %v2020, 24
        %v2505 = vpop.permute.xlu0 %2504
        %2506 = vrot.lane.b32.xlu0 %v2021, 24
        %v2507 = vpop.permute.xlu0 %2506
        %2508 = vrot.lane.b32.xlu0 %v2023, 24
        %v2509 = vpop.permute.xlu0 %2508
        %2510 = vrot.lane.b32.xlu0 %v2024, 24
        %v2511 = vpop.permute.xlu0 %2510
        %2512 = vrot.lane.b32.xlu0 %v2026, 24
        %v2513 = vpop.permute.xlu0 %2512
        %2514 = vrot.lane.b32.xlu0 %v2027, 24
        %v2515 = vpop.permute.xlu0 %2514
        %2516 = vrot.lane.b32.xlu0 %v2029, 24
        %v2517 = vpop.permute.xlu0 %2516
        %2518 = vrot.lane.b32.xlu0 %v2030, 24
        %v2519 = vpop.permute.xlu0 %2518
        %2520 = vrot.lane.b32.xlu0 %v2032, 24
        %v2521 = vpop.permute.xlu0 %2520
        %2522 = vrot.lane.b32.xlu0 %v2033, 24
        %v2523 = vpop.permute.xlu0 %2522
        %2524 = vrot.lane.b32.xlu0 %v2035, 24
        %v2525 = vpop.permute.xlu0 %2524
        %2526 = vrot.lane.b32.xlu0 %v2036, 24
        %v2527 = vpop.permute.xlu0 %2526
        %2528 = vrot.lane.b32.xlu0 %v2038, 24
        %v2529 = vpop.permute.xlu0 %2528
        %2530 = vrot.lane.b32.xlu0 %v2039, 24
        %v2531 = vpop.permute.xlu0 %2530
        %2532 = vrot.lane.b32.xlu0 %v2041, 24
        %v2533 = vpop.permute.xlu0 %2532
        %2534 = vrot.lane.b32.xlu0 %v2042, 24
        %v2535 = vpop.permute.xlu0 %2534
        %2536 = vrot.lane.b32.xlu0 %v2044, 24
        %v2537 = vpop.permute.xlu0 %2536
        %2538 = vrot.lane.b32.xlu0 %v2045, 24
        %v2539 = vpop.permute.xlu0 %2538
        %2572 = vrot.lane.b32.xlu0 %v2105, 32
        %v2573 = vpop.permute.xlu0 %2572
        %2574 = vrot.lane.b32.xlu0 %v2107, 32
        %v2575 = vpop.permute.xlu0 %2574
        %2576 = vrot.lane.b32.xlu0 %v2110, 32
        %v2577 = vpop.permute.xlu0 %2576
        %2578 = vrot.lane.b32.xlu0 %v2112, 32
        %v2579 = vpop.permute.xlu0 %2578
        %2580 = vrot.lane.b32.xlu0 %v2115, 32
        %v2581 = vpop.permute.xlu0 %2580
        %2582 = vrot.lane.b32.xlu0 %v2117, 32
        %v2583 = vpop.permute.xlu0 %2582
        %2584 = vrot.lane.b32.xlu0 %v2120, 32
        %v2585 = vpop.permute.xlu0 %2584
        %2586 = vrot.lane.b32.xlu0 %v2122, 32
        %v2587 = vpop.permute.xlu0 %2586
        %2588 = vrot.lane.b32.xlu0 %v2125, 32
        %v2589 = vpop.permute.xlu0 %2588
        %2590 = vrot.lane.b32.xlu0 %v2127, 32
        %v2591 = vpop.permute.xlu0 %2590
        %2592 = vrot.lane.b32.xlu0 %v2130, 32
        %v2593 = vpop.permute.xlu0 %2592
        %2594 = vrot.lane.b32.xlu0 %v2132, 32
        %v2595 = vpop.permute.xlu0 %2594
        %2596 = vrot.lane.b32.xlu0 %v2135, 32
        %v2597 = vpop.permute.xlu0 %2596
        %2598 = vrot.lane.b32.xlu0 %v2137, 32
        %v2599 = vpop.permute.xlu0 %2598
        %2600 = vrot.lane.b32.xlu0 %v2140, 32
        %v2601 = vpop.permute.xlu0 %2600
        %2602 = vrot.lane.b32.xlu0 %v2142, 32
        %v2603 = vpop.permute.xlu0 %2602
        %2604 = vrot.lane.b32.xlu0 %v2145, 32
        %v2605 = vpop.permute.xlu0 %2604
        %2606 = vrot.lane.b32.xlu0 %v2147, 32
        %v2607 = vpop.permute.xlu0 %2606
        %2608 = vrot.lane.b32.xlu0 %v2150, 32
        %v2609 = vpop.permute.xlu0 %2608
        %2610 = vrot.lane.b32.xlu0 %v2152, 32
        %v2611 = vpop.permute.xlu0 %2610
        %2612 = vrot.lane.b32.xlu0 %v2155, 32
        %v2613 = vpop.permute.xlu0 %2612
        %2614 = vrot.lane.b32.xlu0 %v2157, 32
        %v2615 = vpop.permute.xlu0 %2614
        %2616 = vrot.lane.b32.xlu0 %v2160, 32
        %v2617 = vpop.permute.xlu0 %2616
        %2618 = vrot.lane.b32.xlu0 %v2162, 32
        %v2619 = vpop.permute.xlu0 %2618
        %2620 = vrot.lane.b32.xlu0 %v2165, 32
        %v2621 = vpop.permute.xlu0 %2620
        %2622 = vrot.lane.b32.xlu0 %v2167, 32
        %v2623 = vpop.permute.xlu0 %2622
        %2624 = vrot.lane.b32.xlu0 %v2170, 32
        %v2625 = vpop.permute.xlu0 %2624
        %2626 = vrot.lane.b32.xlu0 %v2172, 32
        %v2627 = vpop.permute.xlu0 %2626
        %2628 = vrot.lane.b32.xlu0 %v2175, 32
        %v2629 = vpop.permute.xlu0 %2628
        %2630 = vrot.lane.b32.xlu0 %v2177, 32
        %v2631 = vpop.permute.xlu0 %2630
        %2632 = vrot.lane.b32.xlu0 %v2263, 32
        %v2633 = vpop.permute.xlu0 %2632
        %2634 = vrot.lane.b32.xlu0 %v2265, 32
        %v2635 = vpop.permute.xlu0 %2634
        %2668 = vrot.lane.b32.xlu0 %v2185, 40
        %v2669 = vpop.permute.xlu0 %2668
        %2670 = vrot.lane.b32.xlu0 %v2187, 40
        %v2671 = vpop.permute.xlu0 %2670
        %2672 = vrot.lane.b32.xlu0 %v2190, 40
        %v2673 = vpop.permute.xlu0 %2672
        %2674 = vrot.lane.b32.xlu0 %v2192, 40
        %v2675 = vpop.permute.xlu0 %2674
        %2676 = vrot.lane.b32.xlu0 %v2195, 40
        %v2677 = vpop.permute.xlu0 %2676
        %2678 = vrot.lane.b32.xlu0 %v2197, 40
        %v2679 = vpop.permute.xlu0 %2678
        %2680 = vrot.lane.b32.xlu0 %v2200, 40
        %v2681 = vpop.permute.xlu0 %2680
        %2682 = vrot.lane.b32.xlu0 %v2202, 40
        %v2683 = vpop.permute.xlu0 %2682
        %2684 = vrot.lane.b32.xlu0 %v2205, 40
        %v2685 = vpop.permute.xlu0 %2684
        %2686 = vrot.lane.b32.xlu0 %v2207, 40
        %v2687 = vpop.permute.xlu0 %2686
        %2688 = vrot.lane.b32.xlu0 %v2210, 40
        %v2689 = vpop.permute.xlu0 %2688
        %2690 = vrot.lane.b32.xlu0 %v2212, 40
        %v2691 = vpop.permute.xlu0 %2690
        %2692 = vrot.lane.b32.xlu0 %v2215, 40
        %v2693 = vpop.permute.xlu0 %2692
        %2694 = vrot.lane.b32.xlu0 %v2217, 40
        %v2695 = vpop.permute.xlu0 %2694
        %2696 = vrot.lane.b32.xlu0 %v2220, 40
        %v2697 = vpop.permute.xlu0 %2696
        %2698 = vrot.lane.b32.xlu0 %v2222, 40
        %v2699 = vpop.permute.xlu0 %2698
        %2700 = vrot.lane.b32.xlu0 %v2225, 40
        %v2701 = vpop.permute.xlu0 %2700
        %2702 = vrot.lane.b32.xlu0 %v2227, 40
        %v2703 = vpop.permute.xlu0 %2702
        %2704 = vrot.lane.b32.xlu0 %v2230, 40
        %v2705 = vpop.permute.xlu0 %2704
        %2706 = vrot.lane.b32.xlu0 %v2232, 40
        %v2707 = vpop.permute.xlu0 %2706
        %2708 = vrot.lane.b32.xlu0 %v2235, 40
        %v2709 = vpop.permute.xlu0 %2708
        %2710 = vrot.lane.b32.xlu0 %v2237, 40
        %v2711 = vpop.permute.xlu0 %2710
        %2712 = vrot.lane.b32.xlu0 %v2240, 40
        %v2713 = vpop.permute.xlu0 %2712
        %2714 = vrot.lane.b32.xlu0 %v2242, 40
        %v2715 = vpop.permute.xlu0 %2714
        %2716 = vrot.lane.b32.xlu0 %v2245, 40
        %v2717 = vpop.permute.xlu0 %2716
        %2718 = vrot.lane.b32.xlu0 %v2247, 40
        %v2719 = vpop.permute.xlu0 %2718
        %2720 = vrot.lane.b32.xlu0 %v2250, 40
        %v2721 = vpop.permute.xlu0 %2720
        %2722 = vrot.lane.b32.xlu0 %v2252, 40
        %v2723 = vpop.permute.xlu0 %2722
        %2724 = vrot.lane.b32.xlu0 %v2255, 40
        %v2725 = vpop.permute.xlu0 %2724
        %2726 = vrot.lane.b32.xlu0 %v2257, 40
        %v2727 = vpop.permute.xlu0 %2726
        %2728 = vrot.lane.b32.xlu0 %v2268, 40
        %v2729 = vpop.permute.xlu0 %2728
        %2730 = vrot.lane.b32.xlu0 %v2270, 40
        %v2731 = vpop.permute.xlu0 %2730
        %2764 = vrot.lane.b32.xlu0 %v2002, 48
        %v2765 = vpop.permute.xlu0 %2764
        %2766 = vrot.lane.b32.xlu0 %v2003, 48
        %v2767 = vpop.permute.xlu0 %2766
        %2768 = vrot.lane.b32.xlu0 %v2005, 48
        %v2769 = vpop.permute.xlu0 %2768
        %2770 = vrot.lane.b32.xlu0 %v2006, 48
        %v2771 = vpop.permute.xlu0 %2770
        %2772 = vrot.lane.b32.xlu0 %v2008, 48
        %v2773 = vpop.permute.xlu0 %2772
        %2774 = vrot.lane.b32.xlu0 %v2009, 48
        %v2775 = vpop.permute.xlu0 %2774
        %2776 = vrot.lane.b32.xlu0 %v2011, 48
        %v2777 = vpop.permute.xlu0 %2776
        %2778 = vrot.lane.b32.xlu0 %v2012, 48
        %v2779 = vpop.permute.xlu0 %2778
        %2780 = vrot.lane.b32.xlu0 %v2014, 48
        %v2781 = vpop.permute.xlu0 %2780
        %2782 = vrot.lane.b32.xlu0 %v2015, 48
        %v2783 = vpop.permute.xlu0 %2782
        %2784 = vrot.lane.b32.xlu0 %v2017, 48
        %v2785 = vpop.permute.xlu0 %2784
        %2786 = vrot.lane.b32.xlu0 %v2018, 48
        %v2787 = vpop.permute.xlu0 %2786
        %2788 = vrot.lane.b32.xlu0 %v2020, 48
        %v2789 = vpop.permute.xlu0 %2788
        %2790 = vrot.lane.b32.xlu0 %v2021, 48
        %v2791 = vpop.permute.xlu0 %2790
        %2792 = vrot.lane.b32.xlu0 %v2023, 48
        %v2793 = vpop.permute.xlu0 %2792
        %2794 = vrot.lane.b32.xlu0 %v2024, 48
        %v2795 = vpop.permute.xlu0 %2794
        %2796 = vrot.lane.b32.xlu0 %v2026, 48
        %v2797 = vpop.permute.xlu0 %2796
        %2798 = vrot.lane.b32.xlu0 %v2027, 48
        %v2799 = vpop.permute.xlu0 %2798
        %2800 = vrot.lane.b32.xlu0 %v2029, 48
        %v2801 = vpop.permute.xlu0 %2800
        %2802 = vrot.lane.b32.xlu0 %v2030, 48
        %v2803 = vpop.permute.xlu0 %2802
        %2804 = vrot.lane.b32.xlu0 %v2032, 48
        %v2805 = vpop.permute.xlu0 %2804
        %2806 = vrot.lane.b32.xlu0 %v2033, 48
        %v2807 = vpop.permute.xlu0 %2806
        %2808 = vrot.lane.b32.xlu0 %v2035, 48
        %v2809 = vpop.permute.xlu0 %2808
        %2810 = vrot.lane.b32.xlu0 %v2036, 48
        %v2811 = vpop.permute.xlu0 %2810
        %2812 = vrot.lane.b32.xlu0 %v2038, 48
        %v2813 = vpop.permute.xlu0 %2812
        %2814 = vrot.lane.b32.xlu0 %v2039, 48
        %v2815 = vpop.permute.xlu0 %2814
        %2816 = vrot.lane.b32.xlu0 %v2041, 48
        %v2817 = vpop.permute.xlu0 %2816
        %2818 = vrot.lane.b32.xlu0 %v2042, 48
        %v2819 = vpop.permute.xlu0 %2818
        %2820 = vrot.lane.b32.xlu0 %v2044, 48
        %v2821 = vpop.permute.xlu0 %2820
        %2822 = vrot.lane.b32.xlu0 %v2045, 48
        %v2823 = vpop.permute.xlu0 %2822
        %2824 = vrot.lane.b32.xlu0 %v2047, 48
        %v2825 = vpop.permute.xlu0 %2824
        %2826 = vrot.lane.b32.xlu0 %v2048, 48
        %v2827 = vpop.permute.xlu0 %2826
        %2860 = vrot.lane.b32.xlu0 %v2110, 56
        %v2861 = vpop.permute.xlu0 %2860
        %2862 = vrot.lane.b32.xlu0 %v2112, 56
        %v2863 = vpop.permute.xlu0 %2862
        %2864 = vrot.lane.b32.xlu0 %v2115, 56
        %v2865 = vpop.permute.xlu0 %2864
        %2866 = vrot.lane.b32.xlu0 %v2117, 56
        %v2867 = vpop.permute.xlu0 %2866
        %2868 = vrot.lane.b32.xlu0 %v2120, 56
        %v2869 = vpop.permute.xlu0 %2868
        %2870 = vrot.lane.b32.xlu0 %v2122, 56
        %v2871 = vpop.permute.xlu0 %2870
        %2872 = vrot.lane.b32.xlu0 %v2125, 56
        %v2873 = vpop.permute.xlu0 %2872
        %2874 = vrot.lane.b32.xlu0 %v2127, 56
        %v2875 = vpop.permute.xlu0 %2874
        %2876 = vrot.lane.b32.xlu0 %v2130, 56
        %v2877 = vpop.permute.xlu0 %2876
        %2878 = vrot.lane.b32.xlu0 %v2132, 56
        %v2879 = vpop.permute.xlu0 %2878
        %2880 = vrot.lane.b32.xlu0 %v2135, 56
        %v2881 = vpop.permute.xlu0 %2880
        %2882 = vrot.lane.b32.xlu0 %v2137, 56
        %v2883 = vpop.permute.xlu0 %2882
        %2884 = vrot.lane.b32.xlu0 %v2140, 56
        %v2885 = vpop.permute.xlu0 %2884
        %2886 = vrot.lane.b32.xlu0 %v2142, 56
        %v2887 = vpop.permute.xlu0 %2886
        %2888 = vrot.lane.b32.xlu0 %v2145, 56
        %v2889 = vpop.permute.xlu0 %2888
        %2890 = vrot.lane.b32.xlu0 %v2147, 56
        %v2891 = vpop.permute.xlu0 %2890
        %2892 = vrot.lane.b32.xlu0 %v2150, 56
        %v2893 = vpop.permute.xlu0 %2892
        %2894 = vrot.lane.b32.xlu0 %v2152, 56
        %v2895 = vpop.permute.xlu0 %2894
        %2896 = vrot.lane.b32.xlu0 %v2155, 56
        %v2897 = vpop.permute.xlu0 %2896
        %2898 = vrot.lane.b32.xlu0 %v2157, 56
        %v2899 = vpop.permute.xlu0 %2898
        %2900 = vrot.lane.b32.xlu0 %v2160, 56
        %v2901 = vpop.permute.xlu0 %2900
        %2902 = vrot.lane.b32.xlu0 %v2162, 56
        %v2903 = vpop.permute.xlu0 %2902
        %2904 = vrot.lane.b32.xlu0 %v2165, 56
        %v2905 = vpop.permute.xlu0 %2904
        %2906 = vrot.lane.b32.xlu0 %v2167, 56
        %v2907 = vpop.permute.xlu0 %2906
        %2908 = vrot.lane.b32.xlu0 %v2170, 56
        %v2909 = vpop.permute.xlu0 %2908
        %2910 = vrot.lane.b32.xlu0 %v2172, 56
        %v2911 = vpop.permute.xlu0 %2910
        %2912 = vrot.lane.b32.xlu0 %v2175, 56
        %v2913 = vpop.permute.xlu0 %2912
        %2914 = vrot.lane.b32.xlu0 %v2177, 56
        %v2915 = vpop.permute.xlu0 %2914
        %2916 = vrot.lane.b32.xlu0 %v2263, 56
        %v2917 = vpop.permute.xlu0 %2916
        %2918 = vrot.lane.b32.xlu0 %v2265, 56
        %v2919 = vpop.permute.xlu0 %2918
        %2920 = vrot.lane.b32.xlu0 %v2276, 56
        %v2921 = vpop.permute.xlu0 %2920
        %2922 = vrot.lane.b32.xlu0 %v2278, 56
        %v2923 = vpop.permute.xlu0 %2922
        %2956 = vrot.lane.b32.xlu0 %v2190, 64
        %v2957 = vpop.permute.xlu0 %2956
        %2958 = vrot.lane.b32.xlu0 %v2192, 64
        %v2959 = vpop.permute.xlu0 %2958
        %2960 = vrot.lane.b32.xlu0 %v2195, 64
        %v2961 = vpop.permute.xlu0 %2960
        %2962 = vrot.lane.b32.xlu0 %v2197, 64
        %v2963 = vpop.permute.xlu0 %2962
        %2964 = vrot.lane.b32.xlu0 %v2200, 64
        %v2965 = vpop.permute.xlu0 %2964
        %2966 = vrot.lane.b32.xlu0 %v2202, 64
        %v2967 = vpop.permute.xlu0 %2966
        %2968 = vrot.lane.b32.xlu0 %v2205, 64
        %v2969 = vpop.permute.xlu0 %2968
        %2970 = vrot.lane.b32.xlu0 %v2207, 64
        %v2971 = vpop.permute.xlu0 %2970
        %2972 = vrot.lane.b32.xlu0 %v2210, 64
        %v2973 = vpop.permute.xlu0 %2972
        %2974 = vrot.lane.b32.xlu0 %v2212, 64
        %v2975 = vpop.permute.xlu0 %2974
        %2976 = vrot.lane.b32.xlu0 %v2215, 64
        %v2977 = vpop.permute.xlu0 %2976
        %2978 = vrot.lane.b32.xlu0 %v2217, 64
        %v2979 = vpop.permute.xlu0 %2978
        %2980 = vrot.lane.b32.xlu0 %v2220, 64
        %v2981 = vpop.permute.xlu0 %2980
        %2982 = vrot.lane.b32.xlu0 %v2222, 64
        %v2983 = vpop.permute.xlu0 %2982
        %2984 = vrot.lane.b32.xlu0 %v2225, 64
        %v2985 = vpop.permute.xlu0 %2984
        %2986 = vrot.lane.b32.xlu0 %v2227, 64
        %v2987 = vpop.permute.xlu0 %2986
        %2988 = vrot.lane.b32.xlu0 %v2230, 64
        %v2989 = vpop.permute.xlu0 %2988
        %2990 = vrot.lane.b32.xlu0 %v2232, 64
        %v2991 = vpop.permute.xlu0 %2990
        %2992 = vrot.lane.b32.xlu0 %v2235, 64
        %v2993 = vpop.permute.xlu0 %2992
        %2994 = vrot.lane.b32.xlu0 %v2237, 64
        %v2995 = vpop.permute.xlu0 %2994
        %2996 = vrot.lane.b32.xlu0 %v2240, 64
        %v2997 = vpop.permute.xlu0 %2996
        %2998 = vrot.lane.b32.xlu0 %v2242, 64
        %v2999 = vpop.permute.xlu0 %2998
        %3000 = vrot.lane.b32.xlu0 %v2245, 64
        %v3001 = vpop.permute.xlu0 %3000
        %3002 = vrot.lane.b32.xlu0 %v2247, 64
        %v3003 = vpop.permute.xlu0 %3002
        %3004 = vrot.lane.b32.xlu0 %v2250, 64
        %v3005 = vpop.permute.xlu0 %3004
        %3006 = vrot.lane.b32.xlu0 %v2252, 64
        %v3007 = vpop.permute.xlu0 %3006
        %3008 = vrot.lane.b32.xlu0 %v2255, 64
        %v3009 = vpop.permute.xlu0 %3008
        %3010 = vrot.lane.b32.xlu0 %v2257, 64
        %v3011 = vpop.permute.xlu0 %3010
        %3012 = vrot.lane.b32.xlu0 %v2268, 64
        %v3013 = vpop.permute.xlu0 %3012
        %3014 = vrot.lane.b32.xlu0 %v2270, 64
        %v3015 = vpop.permute.xlu0 %3014
        %3016 = vrot.lane.b32.xlu0 %v2281, 64
        %v3017 = vpop.permute.xlu0 %3016
        %3018 = vrot.lane.b32.xlu0 %v2283, 64
        %v3019 = vpop.permute.xlu0 %3018
        %v3052 = vsel %vm1917, %v1996, %v2285
        %v3053 = vsel %vm1917, %v1997, %v2287
        %v3054 = vsel %vm1917, %v1999, %v2289
        %v3055 = vsel %vm1917, %v2000, %v2291
        %v3056 = vsel %vm1917, %v2002, %v2293
        %v3057 = vsel %vm1917, %v2003, %v2295
        %v3058 = vsel %vm1917, %v2005, %v2297
        %v3059 = vsel %vm1917, %v2006, %v2299
        %v3060 = vsel %vm1917, %v2008, %v2301
        %v3061 = vsel %vm1917, %v2009, %v2303
        %v3062 = vsel %vm1917, %v2011, %v2305
        %v3063 = vsel %vm1917, %v2012, %v2307
        %v3064 = vsel %vm1917, %v2014, %v2309
        %v3065 = vsel %vm1917, %v2015, %v2311
        %v3066 = vsel %vm1917, %v2017, %v2313
        %v3067 = vsel %vm1917, %v2018, %v2315
        %v3068 = vsel %vm1917, %v2020, %v2317
        %v3069 = vsel %vm1917, %v2021, %v2319
        %v3070 = vsel %vm1917, %v2023, %v2321
        %v3071 = vsel %vm1917, %v2024, %v2323
        %v3072 = vsel %vm1917, %v2026, %v2325
        %v3073 = vsel %vm1917, %v2027, %v2327
        %v3074 = vsel %vm1917, %v2029, %v2329
        %v3075 = vsel %vm1917, %v2030, %v2331
        %v3076 = vsel %vm1917, %v2032, %v2333
        %v3077 = vsel %vm1917, %v2033, %v2335
        %v3078 = vsel %vm1917, %v2035, %v2337
        %v3079 = vsel %vm1917, %v2036, %v2339
        %v3080 = vsel %vm1917, %v2038, %v2341
        %v3081 = vsel %vm1917, %v2039, %v2343
        %v3082 = vsel %vm1917, %v2041, %v2345
        %v3083 = vsel %vm1917, %v2042, %v2347
        %v3084 = vsel %vm1340, %v3052, %v2381
        %v3085 = vsel %vm1340, %v3053, %v2383
        %v3086 = vsel %vm1340, %v3054, %v2385
        %v3087 = vsel %vm1340, %v3055, %v2387
        %v3088 = vsel %vm1340, %v3056, %v2389
        %v3089 = vsel %vm1340, %v3057, %v2391
        %v3090 = vsel %vm1340, %v3058, %v2393
        %v3091 = vsel %vm1340, %v3059, %v2395
        %v3092 = vsel %vm1340, %v3060, %v2397
        %v3093 = vsel %vm1340, %v3061, %v2399
        %v3094 = vsel %vm1340, %v3062, %v2401
        %v3095 = vsel %vm1340, %v3063, %v2403
        %v3096 = vsel %vm1340, %v3064, %v2405
        %v3097 = vsel %vm1340, %v3065, %v2407
        %v3098 = vsel %vm1340, %v3066, %v2409
        %v3099 = vsel %vm1340, %v3067, %v2411
        %v3100 = vsel %vm1340, %v3068, %v2413
        %v3101 = vsel %vm1340, %v3069, %v2415
        %v3102 = vsel %vm1340, %v3070, %v2417
        %v3103 = vsel %vm1340, %v3071, %v2419
        %v3104 = vsel %vm1340, %v3072, %v2421
        %v3105 = vsel %vm1340, %v3073, %v2423
        %v3106 = vsel %vm1340, %v3074, %v2425
        %v3107 = vsel %vm1340, %v3075, %v2427
        %v3108 = vsel %vm1340, %v3076, %v2429
        %v3109 = vsel %vm1340, %v3077, %v2431
        %v3110 = vsel %vm1340, %v3078, %v2433
        %v3111 = vsel %vm1340, %v3079, %v2435
        %v3112 = vsel %vm1340, %v3080, %v2437
        %v3113 = vsel %vm1340, %v3081, %v2439
        %v3114 = vsel %vm1340, %v3082, %v2441
        %v3115 = vsel %vm1340, %v3083, %v2443
        %vm3116 = vcmask 195584
        %v3117 = vsel %vm3116, %v3084, %v2477
        %v3118 = vsel %vm3116, %v3085, %v2479
        %v3119 = vsel %vm3116, %v3086, %v2481
        %v3120 = vsel %vm3116, %v3087, %v2483
        %v3121 = vsel %vm3116, %v3088, %v2485
        %v3122 = vsel %vm3116, %v3089, %v2487
        %v3123 = vsel %vm3116, %v3090, %v2489
        %v3124 = vsel %vm3116, %v3091, %v2491
        %v3125 = vsel %vm3116, %v3092, %v2493
        %v3126 = vsel %vm3116, %v3093, %v2495
        %v3127 = vsel %vm3116, %v3094, %v2497
        %v3128 = vsel %vm3116, %v3095, %v2499
        %v3129 = vsel %vm3116, %v3096, %v2501
        %v3130 = vsel %vm3116, %v3097, %v2503
        %v3131 = vsel %vm3116, %v3098, %v2505
        %v3132 = vsel %vm3116, %v3099, %v2507
        %v3133 = vsel %vm3116, %v3100, %v2509
        %v3134 = vsel %vm3116, %v3101, %v2511
        %v3135 = vsel %vm3116, %v3102, %v2513
        %v3136 = vsel %vm3116, %v3103, %v2515
        %v3137 = vsel %vm3116, %v3104, %v2517
        %v3138 = vsel %vm3116, %v3105, %v2519
        %v3139 = vsel %vm3116, %v3106, %v2521
        %v3140 = vsel %vm3116, %v3107, %v2523
        %v3141 = vsel %vm3116, %v3108, %v2525
        %v3142 = vsel %vm3116, %v3109, %v2527
        %v3143 = vsel %vm3116, %v3110, %v2529
        %v3144 = vsel %vm3116, %v3111, %v2531
        %v3145 = vsel %vm3116, %v3112, %v2533
        %v3146 = vsel %vm3116, %v3113, %v2535
        %v3147 = vsel %vm3116, %v3114, %v2537
        %v3148 = vsel %vm3116, %v3115, %v2539
        %v3149 = vsel %vm1373, %v3117, %v2573
        %v3150 = vsel %vm1373, %v3118, %v2575
        %v3151 = vsel %vm1373, %v3119, %v2577
        %v3152 = vsel %vm1373, %v3120, %v2579
        %v3153 = vsel %vm1373, %v3121, %v2581
        %v3154 = vsel %vm1373, %v3122, %v2583
        %v3155 = vsel %vm1373, %v3123, %v2585
        %v3156 = vsel %vm1373, %v3124, %v2587
        %v3157 = vsel %vm1373, %v3125, %v2589
        %v3158 = vsel %vm1373, %v3126, %v2591
        %v3159 = vsel %vm1373, %v3127, %v2593
        %v3160 = vsel %vm1373, %v3128, %v2595
        %v3161 = vsel %vm1373, %v3129, %v2597
        %v3162 = vsel %vm1373, %v3130, %v2599
        %v3163 = vsel %vm1373, %v3131, %v2601
        %v3164 = vsel %vm1373, %v3132, %v2603
        %v3165 = vsel %vm1373, %v3133, %v2605
        %v3166 = vsel %vm1373, %v3134, %v2607
        %v3167 = vsel %vm1373, %v3135, %v2609
        %v3168 = vsel %vm1373, %v3136, %v2611
        %v3169 = vsel %vm1373, %v3137, %v2613
        %v3170 = vsel %vm1373, %v3138, %v2615
        %v3171 = vsel %vm1373, %v3139, %v2617
        %v3172 = vsel %vm1373, %v3140, %v2619
        %v3173 = vsel %vm1373, %v3141, %v2621
        %v3174 = vsel %vm1373, %v3142, %v2623
        %v3175 = vsel %vm1373, %v3143, %v2625
        %v3176 = vsel %vm1373, %v3144, %v2627
        %v3177 = vsel %vm1373, %v3145, %v2629
        %v3178 = vsel %vm1373, %v3146, %v2631
        %v3179 = vsel %vm1373, %v3147, %v2633
        %v3180 = vsel %vm1373, %v3148, %v2635
        %vm3181 = vcmask 326656
        %v3182 = vsel %vm3181, %v3149, %v2669
        %v3183 = vsel %vm3181, %v3150, %v2671
        %v3184 = vsel %vm3181, %v3151, %v2673
        %v3185 = vsel %vm3181, %v3152, %v2675
        %v3186 = vsel %vm3181, %v3153, %v2677
        %v3187 = vsel %vm3181, %v3154, %v2679
        %v3188 = vsel %vm3181, %v3155, %v2681
        %v3189 = vsel %vm3181, %v3156, %v2683
        %v3190 = vsel %vm3181, %v3157, %v2685
        %v3191 = vsel %vm3181, %v3158, %v2687
        %v3192 = vsel %vm3181, %v3159, %v2689
        %v3193 = vsel %vm3181, %v3160, %v2691
        %v3194 = vsel %vm3181, %v3161, %v2693
        %v3195 = vsel %vm3181, %v3162, %v2695
        %v3196 = vsel %vm3181, %v3163, %v2697
        %v3197 = vsel %vm3181, %v3164, %v2699
        %v3198 = vsel %vm3181, %v3165, %v2701
        %v3199 = vsel %vm3181, %v3166, %v2703
        %v3200 = vsel %vm3181, %v3167, %v2705
        %v3201 = vsel %vm3181, %v3168, %v2707
        %v3202 = vsel %vm3181, %v3169, %v2709
        %v3203 = vsel %vm3181, %v3170, %v2711
        %v3204 = vsel %vm3181, %v3171, %v2713
        %v3205 = vsel %vm3181, %v3172, %v2715
        %v3206 = vsel %vm3181, %v3173, %v2717
        %v3207 = vsel %vm3181, %v3174, %v2719
        %v3208 = vsel %vm3181, %v3175, %v2721
        %v3209 = vsel %vm3181, %v3176, %v2723
        %v3210 = vsel %vm3181, %v3177, %v2725
        %v3211 = vsel %vm3181, %v3178, %v2727
        %v3212 = vsel %vm3181, %v3179, %v2729
        %v3213 = vsel %vm3181, %v3180, %v2731
        %v3214 = vsel %vm1406, %v3182, %v2765
        %v3215 = vsel %vm1406, %v3183, %v2767
        %v3216 = vsel %vm1406, %v3184, %v2769
        %v3217 = vsel %vm1406, %v3185, %v2771
        %v3218 = vsel %vm1406, %v3186, %v2773
        %v3219 = vsel %vm1406, %v3187, %v2775
        %v3220 = vsel %vm1406, %v3188, %v2777
        %v3221 = vsel %vm1406, %v3189, %v2779
        %v3222 = vsel %vm1406, %v3190, %v2781
        %v3223 = vsel %vm1406, %v3191, %v2783
        %v3224 = vsel %vm1406, %v3192, %v2785
        %v3225 = vsel %vm1406, %v3193, %v2787
        %v3226 = vsel %vm1406, %v3194, %v2789
        %v3227 = vsel %vm1406, %v3195, %v2791
        %v3228 = vsel %vm1406, %v3196, %v2793
        %v3229 = vsel %vm1406, %v3197, %v2795
        %v3230 = vsel %vm1406, %v3198, %v2797
        %v3231 = vsel %vm1406, %v3199, %v2799
        %v3232 = vsel %vm1406, %v3200, %v2801
        %v3233 = vsel %vm1406, %v3201, %v2803
        %v3234 = vsel %vm1406, %v3202, %v2805
        %v3235 = vsel %vm1406, %v3203, %v2807
        %v3236 = vsel %vm1406, %v3204, %v2809
        %v3237 = vsel %vm1406, %v3205, %v2811
        %v3238 = vsel %vm1406, %v3206, %v2813
        %v3239 = vsel %vm1406, %v3207, %v2815
        %v3240 = vsel %vm1406, %v3208, %v2817
        %v3241 = vsel %vm1406, %v3209, %v2819
        %v3242 = vsel %vm1406, %v3210, %v2821
        %v3243 = vsel %vm1406, %v3211, %v2823
        %v3244 = vsel %vm1406, %v3212, %v2825
        %v3245 = vsel %vm1406, %v3213, %v2827
        %vm3246 = vcmask 457728
        %v3247 = vsel %vm3246, %v3214, %v2861
        %v3248 = vsel %vm3246, %v3215, %v2863
        %v3249 = vsel %vm3246, %v3216, %v2865
        %v3250 = vsel %vm3246, %v3217, %v2867
        %v3251 = vsel %vm3246, %v3218, %v2869
        %v3252 = vsel %vm3246, %v3219, %v2871
        %v3253 = vsel %vm3246, %v3220, %v2873
        %v3254 = vsel %vm3246, %v3221, %v2875
        %v3255 = vsel %vm3246, %v3222, %v2877
        %v3256 = vsel %vm3246, %v3223, %v2879
        %v3257 = vsel %vm3246, %v3224, %v2881
        %v3258 = vsel %vm3246, %v3225, %v2883
        %v3259 = vsel %vm3246, %v3226, %v2885
        %v3260 = vsel %vm3246, %v3227, %v2887
        %v3261 = vsel %vm3246, %v3228, %v2889
        %v3262 = vsel %vm3246, %v3229, %v2891
        %v3263 = vsel %vm3246, %v3230, %v2893
        %v3264 = vsel %vm3246, %v3231, %v2895
        %v3265 = vsel %vm3246, %v3232, %v2897
        %v3266 = vsel %vm3246, %v3233, %v2899
        %v3267 = vsel %vm3246, %v3234, %v2901
        %v3268 = vsel %vm3246, %v3235, %v2903
        %v3269 = vsel %vm3246, %v3236, %v2905
        %v3270 = vsel %vm3246, %v3237, %v2907
        %v3271 = vsel %vm3246, %v3238, %v2909
        %v3272 = vsel %vm3246, %v3239, %v2911
        %v3273 = vsel %vm3246, %v3240, %v2913
        %v3274 = vsel %vm3246, %v3241, %v2915
        %v3275 = vsel %vm3246, %v3242, %v2917
        %v3276 = vsel %vm3246, %v3243, %v2919
        %v3277 = vsel %vm3246, %v3244, %v2921
        %v3278 = vsel %vm3246, %v3245, %v2923
        %v3279 = vsel %vm1439, %v3247, %v2957
        %v3280 = vsel %vm1439, %v3248, %v2959
        %v3281 = vsel %vm1439, %v3249, %v2961
        %v3282 = vsel %vm1439, %v3250, %v2963
        %v3283 = vsel %vm1439, %v3251, %v2965
        %v3284 = vsel %vm1439, %v3252, %v2967
        %v3285 = vsel %vm1439, %v3253, %v2969
        %v3286 = vsel %vm1439, %v3254, %v2971
        %v3287 = vsel %vm1439, %v3255, %v2973
        %v3288 = vsel %vm1439, %v3256, %v2975
        %v3289 = vsel %vm1439, %v3257, %v2977
        %v3290 = vsel %vm1439, %v3258, %v2979
        %v3291 = vsel %vm1439, %v3259, %v2981
        %v3292 = vsel %vm1439, %v3260, %v2983
        %v3293 = vsel %vm1439, %v3261, %v2985
        %v3294 = vsel %vm1439, %v3262, %v2987
        %v3295 = vsel %vm1439, %v3263, %v2989
        %v3296 = vsel %vm1439, %v3264, %v2991
        %v3297 = vsel %vm1439, %v3265, %v2993
        %v3298 = vsel %vm1439, %v3266, %v2995
        %v3299 = vsel %vm1439, %v3267, %v2997
        %v3300 = vsel %vm1439, %v3268, %v2999
        %v3301 = vsel %vm1439, %v3269, %v3001
        %v3302 = vsel %vm1439, %v3270, %v3003
        %v3303 = vsel %vm1439, %v3271, %v3005
        %v3304 = vsel %vm1439, %v3272, %v3007
        %v3305 = vsel %vm1439, %v3273, %v3009
        %v3306 = vsel %vm1439, %v3274, %v3011
        %v3307 = vsel %vm1439, %v3275, %v3013
        %v3308 = vsel %vm1439, %v3276, %v3015
        %v3309 = vsel %vm1439, %v3277, %v3017
        %v3310 = vsel %vm1439, %v3278, %v3019
        %v3311 = vld [vmem:[#allocation9] sm:$0xff]
        %v3312 = vld [vmem:[#allocation9 + $0x8] sm:$0xff]
        %v3313 = vld [vmem:[#allocation9 + $0x10] sm:$0xff]
        %v3314 = vld [vmem:[#allocation9 + $0x18] sm:$0xff]
        %v3315 = vld [vmem:[#allocation9 + $0x20] sm:$0xff]
        %v3316 = vld [vmem:[#allocation9 + $0x28] sm:$0xff]
        %v3317 = vld [vmem:[#allocation9 + $0x30] sm:$0xff]
        %v3318 = vld [vmem:[#allocation9 + $0x38] sm:$0xff]
        %v3319 = vld [vmem:[#allocation9 + $0x40] sm:$0xff]
        %v3320 = vld [vmem:[#allocation11] sm:$0x1]
        %v3322 = vlaneseq
        %v3323 = vshrl.u32 %v3322, 7
        %v3324 = vsub.s32 0, %v3323
        %v3325 = vrot.slane %v3320, %v3324
        %vm3327 = vcmask 588800
        %v3329 = vsel %vm3327, %v3279, 0
        %v3332 = vsel %vm3327, %v3280, 0
        %v3335 = vsel %vm3327, %v3281, 0
        %v3338 = vsel %vm3327, %v3282, 0
        %v3341 = vsel %vm3327, %v3283, 0
        %v3344 = vsel %vm3327, %v3284, 0
        %v3347 = vsel %vm3327, %v3285, 0
        %v3350 = vsel %vm3327, %v3286, 0
        %v3353 = vsel %vm3327, %v3287, 0
        %v3356 = vsel %vm3327, %v3288, 0
        %v3359 = vsel %vm3327, %v3289, 0
        %v3362 = vsel %vm3327, %v3290, 0
        %v3365 = vsel %vm3327, %v3291, 0
        %v3368 = vsel %vm3327, %v3292, 0
        %v3371 = vsel %vm3327, %v3293, 0
        %v3374 = vsel %vm3327, %v3294, 0
        %v3377 = vsel %vm3327, %v3295, 0
        %v3380 = vsel %vm3327, %v3296, 0
        %v3383 = vsel %vm3327, %v3297, 0
        %v3386 = vsel %vm3327, %v3298, 0
        %v3389 = vsel %vm3327, %v3299, 0
        %v3392 = vsel %vm3327, %v3300, 0
        %v3395 = vsel %vm3327, %v3301, 0
        %v3398 = vsel %vm3327, %v3302, 0
        %v3401 = vsel %vm3327, %v3303, 0
        %v3404 = vsel %vm3327, %v3304, 0
        %v3407 = vsel %vm3327, %v3305, 0
        %v3410 = vsel %vm3327, %v3306, 0
        %v3413 = vsel %vm3327, %v3307, 0
        %v3416 = vsel %vm3327, %v3308, 0
        %v3419 = vsel %vm3327, %v3309, 0
        %v3422 = vsel %vm3327, %v3310, 0
        %3424 = vmatprep.subr.mxu0 0.0
        %3425 = vmatpush1.msra.mxu0 %v3311
        %3426 = vmatprep.subr.mxu0 0.0
        %3427 = vmatpush1.msra.mxu0 %v3312
        %3428 = vmatprep.subr.mxu0 0.0
        %3429 = vmatpush1.msra.mxu0 %v3313
        %3430 = vmatprep.subr.mxu0 0.0
        %3431 = vmatpush1.msra.mxu0 %v3314
        %3432 = vmatprep.subr.mxu0 0.0
        %3433 = vmatpush1.msra.mxu0 %v3315
        %3434 = vmatprep.subr.mxu0 0.0
        %3435 = vmatpush1.msra.mxu0 %v3316
        %3436 = vmatprep.subr.mxu0 0.0
        %3437 = vmatpush1.msra.mxu0 %v3317
        %3438 = vmatprep.subr.mxu0 0.0
        %3439 = vmatpush1.msra.mxu0 %v3318
        %3440 = vmatprep.subr.mxu0 0.0
        %3441 = vmatpush1.msra.mxu0 %v3319
        %3442 = vmatprep.subr.mxu0 0.0
        %3443 = vmatpush1.msra.mxu0 0.0
        %3444 = vmatprep.subr.mxu0 0.0
        %3445 = vmatpush1.msra.mxu0 0.0
        %3446 = vmatprep.subr.mxu0 0.0
        %3447 = vmatpush1.msra.mxu0 0.0
        %3448 = vmatprep.subr.mxu0 0.0
        %3449 = vmatpush1.msra.mxu0 0.0
        %3450 = vmatprep.subr.mxu0 0.0
        %3451 = vmatpush1.msra.mxu0 0.0
        %3452 = vmatprep.subr.mxu0 0.0
        %3453 = vmatpush1.msra.mxu0 0.0
        %3454 = vmatprep.subr.mxu0 0.0
        %3455 = vmatpush1.msra.mxu0 0.0
        %3456 = vmatprep.subr.mxu0 0.0
        %3457 = vmatpush1.msra.mxu0 0.0
        %3458 = vmatprep.subr.mxu0 0.0
        %3459 = vmatpush1.msra.mxu0 0.0
        %3460 = vmatprep.subr.mxu0 0.0
        %3461 = vmatpush1.msra.mxu0 0.0
        %3462 = vmatprep.subr.mxu0 0.0
        %3463 = vmatpush1.msra.mxu0 0.0
        %3464 = vmatprep.subr.mxu0 0.0
        %3465 = vmatpush1.msra.mxu0 0.0
        %3466 = vmatprep.subr.mxu0 0.0
        %3467 = vmatpush1.msra.mxu0 0.0
        %3468 = vmatprep.subr.mxu0 0.0
        %3469 = vmatpush1.msra.mxu0 0.0
        %3470 = vmatprep.subr.mxu0 0.0
        %3471 = vmatpush1.msra.mxu0 0.0
        %3472 = vmatprep.subr.mxu0 0.0
        %3473 = vmatpush1.msra.mxu0 0.0
        %3474 = vmatprep.subr.mxu0 0.0
        %3475 = vmatpush1.msra.mxu0 0.0
        %3476 = vmatprep.subr.mxu0 0.0
        %3477 = vmatpush1.msra.mxu0 0.0
        %3478 = vmatprep.subr.mxu0 0.0
        %3479 = vmatpush1.msra.mxu0 0.0
        %3480 = vmatprep.subr.mxu0 0.0
        %3481 = vmatpush1.msra.mxu0 0.0
        %3482 = vmatprep.subr.mxu0 0.0
        %3483 = vmatpush1.msra.mxu0 0.0
        %3484 = vmatprep.subr.mxu0 0.0
        %3485 = vmatpush1.msra.mxu0 0.0
        %3486 = vmatprep.subr.mxu0 0.0
        %3487 = vmatpush1.msra.mxu0 0.0
        %3488 = vmatprep.mubr.f32.mxu0 0.0
        %3489 = vmatmul.mubr.f32.gmra.mrb[0].mxu0 %v3329
        %v3490 = vpop.f32.mrb[0].mxu0
        %v3491 = vadd.f32 %v3325, %v3490
        %v3492 = vpop.f32.mrb[0].mxu0
        %3493 = vmatprep.mubr.f32.mxu0 0.0
        %3494 = vmatmul.mubr.f32.gmra.mrb[0].mxu0 %v3332
        %v3495 = vpop.f32.mrb[0].mxu0
        %v3496 = vadd.f32 %v3325, %v3495
        %v3497 = vpop.f32.mrb[0].mxu0
        %3498 = vmatprep.mubr.f32.mxu0 0.0
        %3499 = vmatmul.mubr.f32.gmra.mrb[0].mxu0 %v3335
        %v3500 = vpop.f32.mrb[0].mxu0
        %v3501 = vadd.f32 %v3325, %v3500
        %v3502 = vpop.f32.mrb[0].mxu0
        %3503 = vmatprep.mubr.f32.mxu0 0.0
        %3504 = vmatmul.mubr.f32.gmra.mrb[0].mxu0 %v3338
        %v3505 = vpop.f32.mrb[0].mxu0
        %v3506 = vadd.f32 %v3325, %v3505
        %v3507 = vpop.f32.mrb[0].mxu0
        %3508 = vmatprep.mubr.f32.mxu0 0.0
        %3509 = vmatmul.mubr.f32.gmra.mrb[0].mxu0 %v3341
        %v3510 = vpop.f32.mrb[0].mxu0
        %v3511 = vadd.f32 %v3325, %v3510
        %v3512 = vpop.f32.mrb[0].mxu0
        %3513 = vmatprep.mubr.f32.mxu0 0.0
        %3514 = vmatmul.mubr.f32.gmra.mrb[0].mxu0 %v3344
        %v3515 = vpop.f32.mrb[0].mxu0
        %v3516 = vadd.f32 %v3325, %v3515
        %v3517 = vpop.f32.mrb[0].mxu0
        %3518 = vmatprep.mubr.f32.mxu0 0.0
        %3519 = vmatmul.mubr.f32.gmra.mrb[0].mxu0 %v3347
        %v3520 = vpop.f32.mrb[0].mxu0
        %v3521 = vadd.f32 %v3325, %v3520
        %v3522 = vpop.f32.mrb[0].mxu0
        %3523 = vmatprep.mubr.f32.mxu0 0.0
        %3524 = vmatmul.mubr.f32.gmra.mrb[0].mxu0 %v3350
        %v3525 = vpop.f32.mrb[0].mxu0
        %v3526 = vadd.f32 %v3325, %v3525
        %v3527 = vpop.f32.mrb[0].mxu0
        %3528 = vmatprep.mubr.f32.mxu0 0.0
        %3529 = vmatmul.mubr.f32.gmra.mrb[0].mxu0 %v3353
        %v3530 = vpop.f32.mrb[0].mxu0
        %v3531 = vadd.f32 %v3325, %v3530
        %v3532 = vpop.f32.mrb[0].mxu0
        %3533 = vmatprep.mubr.f32.mxu0 0.0
        %3534 = vmatmul.mubr.f32.gmra.mrb[0].mxu0 %v3356
        %v3535 = vpop.f32.mrb[0].mxu0
        %v3536 = vadd.f32 %v3325, %v3535
        %v3537 = vpop.f32.mrb[0].mxu0
        %3538 = vmatprep.mubr.f32.mxu0 0.0
        %3539 = vmatmul.mubr.f32.gmra.mrb[0].mxu0 %v3359
        %v3540 = vpop.f32.mrb[0].mxu0
        %v3541 = vadd.f32 %v3325, %v3540
        %v3542 = vpop.f32.mrb[0].mxu0
        %3543 = vmatprep.mubr.f32.mxu0 0.0
        %3544 = vmatmul.mubr.f32.gmra.mrb[0].mxu0 %v3362
        %v3545 = vpop.f32.mrb[0].mxu0
        %v3546 = vadd.f32 %v3325, %v3545
        %v3547 = vpop.f32.mrb[0].mxu0
        %3548 = vmatprep.mubr.f32.mxu0 0.0
        %3549 = vmatmul.mubr.f32.gmra.mrb[0].mxu0 %v3365
        %v3550 = vpop.f32.mrb[0].mxu0
        %v3551 = vadd.f32 %v3325, %v3550
        %v3552 = vpop.f32.mrb[0].mxu0
        %3553 = vmatprep.mubr.f32.mxu0 0.0
        %3554 = vmatmul.mubr.f32.gmra.mrb[0].mxu0 %v3368
        %v3555 = vpop.f32.mrb[0].mxu0
        %v3556 = vadd.f32 %v3325, %v3555
        %v3557 = vpop.f32.mrb[0].mxu0
        %3558 = vmatprep.mubr.f32.mxu0 0.0
        %3559 = vmatmul.mubr.f32.gmra.mrb[0].mxu0 %v3371
        %v3560 = vpop.f32.mrb[0].mxu0
        %v3561 = vadd.f32 %v3325, %v3560
        %v3562 = vpop.f32.mrb[0].mxu0
        %3563 = vmatprep.mubr.f32.mxu0 0.0
        %3564 = vmatmul.mubr.f32.gmra.mrb[0].mxu0 %v3374
        %v3565 = vpop.f32.mrb[0].mxu0
        %v3566 = vadd.f32 %v3325, %v3565
        %v3567 = vpop.f32.mrb[0].mxu0
        %3568 = vmatprep.mubr.f32.mxu0 0.0
        %3569 = vmatmul.mubr.f32.gmra.mrb[0].mxu0 %v3377
        %v3570 = vpop.f32.mrb[0].mxu0
        %v3571 = vadd.f32 %v3325, %v3570
        %v3572 = vpop.f32.mrb[0].mxu0
        %3573 = vmatprep.mubr.f32.mxu0 0.0
        %3574 = vmatmul.mubr.f32.gmra.mrb[0].mxu0 %v3380
        %v3575 = vpop.f32.mrb[0].mxu0
        %v3576 = vadd.f32 %v3325, %v3575
        %v3577 = vpop.f32.mrb[0].mxu0
        %3578 = vmatprep.mubr.f32.mxu0 0.0
        %3579 = vmatmul.mubr.f32.gmra.mrb[0].mxu0 %v3383
        %v3580 = vpop.f32.mrb[0].mxu0
        %v3581 = vadd.f32 %v3325, %v3580
        %v3582 = vpop.f32.mrb[0].mxu0
        %3583 = vmatprep.mubr.f32.mxu0 0.0
        %3584 = vmatmul.mubr.f32.gmra.mrb[0].mxu0 %v3386
        %v3585 = vpop.f32.mrb[0].mxu0
        %v3586 = vadd.f32 %v3325, %v3585
        %v3587 = vpop.f32.mrb[0].mxu0
        %3588 = vmatprep.mubr.f32.mxu0 0.0
        %3589 = vmatmul.mubr.f32.gmra.mrb[0].mxu0 %v3389
        %v3590 = vpop.f32.mrb[0].mxu0
        %v3591 = vadd.f32 %v3325, %v3590
        %v3592 = vpop.f32.mrb[0].mxu0
        %3593 = vmatprep.mubr.f32.mxu0 0.0
        %3594 = vmatmul.mubr.f32.gmra.mrb[0].mxu0 %v3392
        %v3595 = vpop.f32.mrb[0].mxu0
        %v3596 = vadd.f32 %v3325, %v3595
        %v3597 = vpop.f32.mrb[0].mxu0
        %3598 = vmatprep.mubr.f32.mxu0 0.0
        %3599 = vmatmul.mubr.f32.gmra.mrb[0].mxu0 %v3395
        %v3600 = vpop.f32.mrb[0].mxu0
        %v3601 = vadd.f32 %v3325, %v3600
        %v3602 = vpop.f32.mrb[0].mxu0
        %3603 = vmatprep.mubr.f32.mxu0 0.0
        %3604 = vmatmul.mubr.f32.gmra.mrb[0].mxu0 %v3398
        %v3605 = vpop.f32.mrb[0].mxu0
        %v3606 = vadd.f32 %v3325, %v3605
        %v3607 = vpop.f32.mrb[0].mxu0
        %3608 = vmatprep.mubr.f32.mxu0 0.0
        %3609 = vmatmul.mubr.f32.gmra.mrb[0].mxu0 %v3401
        %v3610 = vpop.f32.mrb[0].mxu0
        %v3611 = vadd.f32 %v3325, %v3610
        %v3612 = vpop.f32.mrb[0].mxu0
        %3613 = vmatprep.mubr.f32.mxu0 0.0
        %3614 = vmatmul.mubr.f32.gmra.mrb[0].mxu0 %v3404
        %v3615 = vpop.f32.mrb[0].mxu0
        %v3616 = vadd.f32 %v3325, %v3615
        %v3617 = vpop.f32.mrb[0].mxu0
        %3618 = vmatprep.mubr.f32.mxu0 0.0
        %3619 = vmatmul.mubr.f32.gmra.mrb[0].mxu0 %v3407
        %v3620 = vpop.f32.mrb[0].mxu0
        %v3621 = vadd.f32 %v3325, %v3620
        %v3622 = vpop.f32.mrb[0].mxu0
        %3623 = vmatprep.mubr.f32.mxu0 0.0
        %3624 = vmatmul.mubr.f32.gmra.mrb[0].mxu0 %v3410
        %v3625 = vpop.f32.mrb[0].mxu0
        %v3626 = vadd.f32 %v3325, %v3625
        %v3627 = vpop.f32.mrb[0].mxu0
        %3628 = vmatprep.mubr.f32.mxu0 0.0
        %3629 = vmatmul.mubr.f32.gmra.mrb[0].mxu0 %v3413
        %v3630 = vpop.f32.mrb[0].mxu0
        %v3631 = vadd.f32 %v3325, %v3630
        %v3632 = vpop.f32.mrb[0].mxu0
        %3633 = vmatprep.mubr.f32.mxu0 0.0
        %3634 = vmatmul.mubr.f32.gmra.mrb[0].mxu0 %v3416
        %v3635 = vpop.f32.mrb[0].mxu0
        %v3636 = vadd.f32 %v3325, %v3635
        %v3637 = vpop.f32.mrb[0].mxu0
        %3638 = vmatprep.mubr.f32.mxu0 0.0
        %3639 = vmatmul.mubr.f32.gmra.mrb[0].mxu0 %v3419
        %v3640 = vpop.f32.mrb[0].mxu0
        %v3641 = vadd.f32 %v3325, %v3640
        %v3642 = vpop.f32.mrb[0].mxu0
        %3643 = vmatprep.mubr.f32.mxu0 0.0
        %3644 = vmatmul.mubr.f32.gmra.mrb[0].mxu0 %v3422
        %v3645 = vpop.f32.mrb[0].mxu0
        %v3646 = vadd.f32 %v3325, %v3645
        %v3647 = vpop.f32.mrb[0].mxu0
        %3648 = vdwg.mxu0
        %v3649 = vmax.f32 %v3491, 0.0
        %v3650 = vmax.f32 %v3496, 0.0
        %v3651 = vmax.f32 %v3501, 0.0
        %v3652 = vmax.f32 %v3506, 0.0
        %v3653 = vmax.f32 %v3511, 0.0
        %v3654 = vmax.f32 %v3516, 0.0
        %v3655 = vmax.f32 %v3521, 0.0
        %v3656 = vmax.f32 %v3526, 0.0
        %v3657 = vmax.f32 %v3531, 0.0
        %v3658 = vmax.f32 %v3536, 0.0
        %v3659 = vmax.f32 %v3541, 0.0
        %v3660 = vmax.f32 %v3546, 0.0
        %v3661 = vmax.f32 %v3551, 0.0
        %v3662 = vmax.f32 %v3556, 0.0
        %v3663 = vmax.f32 %v3561, 0.0
        %v3664 = vmax.f32 %v3566, 0.0
        %v3665 = vmax.f32 %v3571, 0.0
        %v3666 = vmax.f32 %v3576, 0.0
        %v3667 = vmax.f32 %v3581, 0.0
        %v3668 = vmax.f32 %v3586, 0.0
        %v3669 = vmax.f32 %v3591, 0.0
        %v3670 = vmax.f32 %v3596, 0.0
        %v3671 = vmax.f32 %v3601, 0.0
        %v3672 = vmax.f32 %v3606, 0.0
        %v3673 = vmax.f32 %v3611, 0.0
        %v3674 = vmax.f32 %v3616, 0.0
        %v3675 = vmax.f32 %v3621, 0.0
        %v3676 = vmax.f32 %v3626, 0.0
        %v3677 = vmax.f32 %v3631, 0.0
        %v3678 = vmax.f32 %v3636, 0.0
        %v3679 = vmax.f32 %v3641, 0.0
        %v3680 = vmax.f32 %v3646, 0.0
        %v3681 = vld [vmem:[#allocation12] sm:$0xff]
        %v3682 = vld [vmem:[#allocation14] sm:$0x1]
        %v3684 = vlaneseq
        %v3685 = vshrl.u32 %v3684, 7
        %v3686 = vsub.s32 0, %v3685
        %v3687 = vrot.slane %v3682, %v3686
        %v3690 = vsel %vm1917, %v3649, 0
        %v3693 = vsel %vm1917, %v3650, 0
        %v3696 = vsel %vm1917, %v3651, 0
        %v3699 = vsel %vm1917, %v3652, 0
        %v3702 = vsel %vm1917, %v3653, 0
        %v3705 = vsel %vm1917, %v3654, 0
        %v3708 = vsel %vm1917, %v3655, 0
        %v3711 = vsel %vm1917, %v3656, 0
        %v3714 = vsel %vm1917, %v3657, 0
        %v3717 = vsel %vm1917, %v3658, 0
        %v3720 = vsel %vm1917, %v3659, 0
        %v3723 = vsel %vm1917, %v3660, 0
        %v3726 = vsel %vm1917, %v3661, 0
        %v3729 = vsel %vm1917, %v3662, 0
        %v3732 = vsel %vm1917, %v3663, 0
        %v3735 = vsel %vm1917, %v3664, 0
        %v3738 = vsel %vm1917, %v3665, 0
        %v3741 = vsel %vm1917, %v3666, 0
        %v3744 = vsel %vm1917, %v3667, 0
        %v3747 = vsel %vm1917, %v3668, 0
        %v3750 = vsel %vm1917, %v3669, 0
        %v3753 = vsel %vm1917, %v3670, 0
        %v3756 = vsel %vm1917, %v3671, 0
        %v3759 = vsel %vm1917, %v3672, 0
        %v3762 = vsel %vm1917, %v3673, 0
        %v3765 = vsel %vm1917, %v3674, 0
        %v3768 = vsel %vm1917, %v3675, 0
        %v3771 = vsel %vm1917, %v3676, 0
        %v3774 = vsel %vm1917, %v3677, 0
        %v3777 = vsel %vm1917, %v3678, 0
        %v3780 = vsel %vm1917, %v3679, 0
        %v3783 = vsel %vm1917, %v3680, 0
        %3785 = vmatprep.subr.mxu0 0.0
        %3786 = vmatpush1.msra.mxu0 %v3681
        %3787 = vmatprep.subr.mxu0 0.0
        %3788 = vmatpush1.msra.mxu0 0.0
        %3789 = vmatprep.subr.mxu0 0.0
        %3790 = vmatpush1.msra.mxu0 0.0
        %3791 = vmatprep.subr.mxu0 0.0
        %3792 = vmatpush1.msra.mxu0 0.0
        %3793 = vmatprep.subr.mxu0 0.0
        %3794 = vmatpush1.msra.mxu0 0.0
        %3795 = vmatprep.subr.mxu0 0.0
        %3796 = vmatpush1.msra.mxu0 0.0
        %3797 = vmatprep.subr.mxu0 0.0
        %3798 = vmatpush1.msra.mxu0 0.0
        %3799 = vmatprep.subr.mxu0 0.0
        %3800 = vmatpush1.msra.mxu0 0.0
        %3801 = vmatprep.subr.mxu0 0.0
        %3802 = vmatpush1.msra.mxu0 0.0
        %3803 = vmatprep.subr.mxu0 0.0
        %3804 = vmatpush1.msra.mxu0 0.0
        %3805 = vmatprep.subr.mxu0 0.0
        %3806 = vmatpush1.msra.mxu0 0.0
        %3807 = vmatprep.subr.mxu0 0.0
        %3808 = vmatpush1.msra.mxu0 0.0
        %3809 = vmatprep.subr.mxu0 0.0
        %3810 = vmatpush1.msra.mxu0 0.0
        %3811 = vmatprep.subr.mxu0 0.0
        %3812 = vmatpush1.msra.mxu0 0.0
        %3813 = vmatprep.subr.mxu0 0.0
        %3814 = vmatpush1.msra.mxu0 0.0
        %3815 = vmatprep.subr.mxu0 0.0
        %3816 = vmatpush1.msra.mxu0 0.0
        %3817 = vmatprep.subr.mxu0 0.0
        %3818 = vmatpush1.msra.mxu0 0.0
        %3819 = vmatprep.subr.mxu0 0.0
        %3820 = vmatpush1.msra.mxu0 0.0
        %3821 = vmatprep.subr.mxu0 0.0
        %3822 = vmatpush1.msra.mxu0 0.0
        %3823 = vmatprep.subr.mxu0 0.0
        %3824 = vmatpush1.msra.mxu0 0.0
        %3825 = vmatprep.subr.mxu0 0.0
        %3826 = vmatpush1.msra.mxu0 0.0
        %3827 = vmatprep.subr.mxu0 0.0
        %3828 = vmatpush1.msra.mxu0 0.0
        %3829 = vmatprep.subr.mxu0 0.0
        %3830 = vmatpush1.msra.mxu0 0.0
        %3831 = vmatprep.subr.mxu0 0.0
        %3832 = vmatpush1.msra.mxu0 0.0
        %3833 = vmatprep.subr.mxu0 0.0
        %3834 = vmatpush1.msra.mxu0 0.0
        %3835 = vmatprep.subr.mxu0 0.0
        %3836 = vmatpush1.msra.mxu0 0.0
        %3837 = vmatprep.subr.mxu0 0.0
        %3838 = vmatpush1.msra.mxu0 0.0
        %3839 = vmatprep.subr.mxu0 0.0
        %3840 = vmatpush1.msra.mxu0 0.0
        %3841 = vmatprep.subr.mxu0 0.0
        %3842 = vmatpush1.msra.mxu0 0.0
        %3843 = vmatprep.subr.mxu0 0.0
        %3844 = vmatpush1.msra.mxu0 0.0
        %3845 = vmatprep.subr.mxu0 0.0
        %3846 = vmatpush1.msra.mxu0 0.0
        %3847 = vmatprep.subr.mxu0 0.0
        %3848 = vmatpush1.msra.mxu0 0.0
        %3849 = vmatprep.mubr.f32.mxu0 0.0
        %3850 = vmatmul.mubr.f32.gmra.mrb[0].mxu0 %v3690
        %v3851 = vpop.f32.mrb[0].mxu0
        %v3852 = vadd.f32 %v3687, %v3851
        %v3853 = vpop.f32.mrb[0].mxu0
        %3854 = vmatprep.mubr.f32.mxu0 0.0
        %3855 = vmatmul.mubr.f32.gmra.mrb[0].mxu0 %v3693
        %v3856 = vpop.f32.mrb[0].mxu0
        %v3857 = vadd.f32 %v3687, %v3856
        %v3858 = vpop.f32.mrb[0].mxu0
        %3859 = vmatprep.mubr.f32.mxu0 0.0
        %3860 = vmatmul.mubr.f32.gmra.mrb[0].mxu0 %v3696
        %v3861 = vpop.f32.mrb[0].mxu0
        %v3862 = vadd.f32 %v3687, %v3861
        %v3863 = vpop.f32.mrb[0].mxu0
        %3864 = vmatprep.mubr.f32.mxu0 0.0
        %3865 = vmatmul.mubr.f32.gmra.mrb[0].mxu0 %v3699
        %v3866 = vpop.f32.mrb[0].mxu0
        %v3867 = vadd.f32 %v3687, %v3866
        %v3868 = vpop.f32.mrb[0].mxu0
        %3869 = vmatprep.mubr.f32.mxu0 0.0
        %3870 = vmatmul.mubr.f32.gmra.mrb[0].mxu0 %v3702
        %v3871 = vpop.f32.mrb[0].mxu0
        %v3872 = vadd.f32 %v3687, %v3871
        %v3873 = vpop.f32.mrb[0].mxu0
        %3874 = vmatprep.mubr.f32.mxu0 0.0
        %3875 = vmatmul.mubr.f32.gmra.mrb[0].mxu0 %v3705
        %v3876 = vpop.f32.mrb[0].mxu0
        %v3877 = vadd.f32 %v3687, %v3876
        %v3878 = vpop.f32.mrb[0].mxu0
        %3879 = vmatprep.mubr.f32.mxu0 0.0
        %3880 = vmatmul.mubr.f32.gmra.mrb[0].mxu0 %v3708
        %v3881 = vpop.f32.mrb[0].mxu0
        %v3882 = vadd.f32 %v3687, %v3881
        %v3883 = vpop.f32.mrb[0].mxu0
        %3884 = vmatprep.mubr.f32.mxu0 0.0
        %3885 = vmatmul.mubr.f32.gmra.mrb[0].mxu0 %v3711
        %v3886 = vpop.f32.mrb[0].mxu0
        %v3887 = vadd.f32 %v3687, %v3886
        %v3888 = vpop.f32.mrb[0].mxu0
        %3889 = vmatprep.mubr.f32.mxu0 0.0
        %3890 = vmatmul.mubr.f32.gmra.mrb[0].mxu0 %v3714
        %v3891 = vpop.f32.mrb[0].mxu0
        %v3892 = vadd.f32 %v3687, %v3891
        %v3893 = vpop.f32.mrb[0].mxu0
        %3894 = vmatprep.mubr.f32.mxu0 0.0
        %3895 = vmatmul.mubr.f32.gmra.mrb[0].mxu0 %v3717
        %v3896 = vpop.f32.mrb[0].mxu0
        %v3897 = vadd.f32 %v3687, %v3896
        %v3898 = vpop.f32.mrb[0].mxu0
        %3899 = vmatprep.mubr.f32.mxu0 0.0
        %3900 = vmatmul.mubr.f32.gmra.mrb[0].mxu0 %v3720
        %v3901 = vpop.f32.mrb[0].mxu0
        %v3902 = vadd.f32 %v3687, %v3901
        %v3903 = vpop.f32.mrb[0].mxu0
        %3904 = vmatprep.mubr.f32.mxu0 0.0
        %3905 = vmatmul.mubr.f32.gmra.mrb[0].mxu0 %v3723
        %v3906 = vpop.f32.mrb[0].mxu0
        %v3907 = vadd.f32 %v3687, %v3906
        %v3908 = vpop.f32.mrb[0].mxu0
        %3909 = vmatprep.mubr.f32.mxu0 0.0
        %3910 = vmatmul.mubr.f32.gmra.mrb[0].mxu0 %v3726
        %v3911 = vpop.f32.mrb[0].mxu0
        %v3912 = vadd.f32 %v3687, %v3911
        %v3913 = vpop.f32.mrb[0].mxu0
        %3914 = vmatprep.mubr.f32.mxu0 0.0
        %3915 = vmatmul.mubr.f32.gmra.mrb[0].mxu0 %v3729
        %v3916 = vpop.f32.mrb[0].mxu0
        %v3917 = vadd.f32 %v3687, %v3916
        %v3918 = vpop.f32.mrb[0].mxu0
        %3919 = vmatprep.mubr.f32.mxu0 0.0
        %3920 = vmatmul.mubr.f32.gmra.mrb[0].mxu0 %v3732
        %v3921 = vpop.f32.mrb[0].mxu0
        %v3922 = vadd.f32 %v3687, %v3921
        %v3923 = vpop.f32.mrb[0].mxu0
        %3924 = vmatprep.mubr.f32.mxu0 0.0
        %3925 = vmatmul.mubr.f32.gmra.mrb[0].mxu0 %v3735
        %v3926 = vpop.f32.mrb[0].mxu0
        %v3927 = vadd.f32 %v3687, %v3926
        %v3928 = vpop.f32.mrb[0].mxu0
        %3929 = vmatprep.mubr.f32.mxu0 0.0
        %3930 = vmatmul.mubr.f32.gmra.mrb[0].mxu0 %v3738
        %v3931 = vpop.f32.mrb[0].mxu0
        %v3932 = vadd.f32 %v3687, %v3931
        %v3933 = vpop.f32.mrb[0].mxu0
        %3934 = vmatprep.mubr.f32.mxu0 0.0
        %3935 = vmatmul.mubr.f32.gmra.mrb[0].mxu0 %v3741
        %v3936 = vpop.f32.mrb[0].mxu0
        %v3937 = vadd.f32 %v3687, %v3936
        %v3938 = vpop.f32.mrb[0].mxu0
        %3939 = vmatprep.mubr.f32.mxu0 0.0
        %3940 = vmatmul.mubr.f32.gmra.mrb[0].mxu0 %v3744
        %v3941 = vpop.f32.mrb[0].mxu0
        %v3942 = vadd.f32 %v3687, %v3941
        %v3943 = vpop.f32.mrb[0].mxu0
        %3944 = vmatprep.mubr.f32.mxu0 0.0
        %3945 = vmatmul.mubr.f32.gmra.mrb[0].mxu0 %v3747
        %v3946 = vpop.f32.mrb[0].mxu0
        %v3947 = vadd.f32 %v3687, %v3946
        %v3948 = vpop.f32.mrb[0].mxu0
        %3949 = vmatprep.mubr.f32.mxu0 0.0
        %3950 = vmatmul.mubr.f32.gmra.mrb[0].mxu0 %v3750
        %v3951 = vpop.f32.mrb[0].mxu0
        %v3952 = vadd.f32 %v3687, %v3951
        %v3953 = vpop.f32.mrb[0].mxu0
        %3954 = vmatprep.mubr.f32.mxu0 0.0
        %3955 = vmatmul.mubr.f32.gmra.mrb[0].mxu0 %v3753
        %v3956 = vpop.f32.mrb[0].mxu0
        %v3957 = vadd.f32 %v3687, %v3956
        %v3958 = vpop.f32.mrb[0].mxu0
        %3959 = vmatprep.mubr.f32.mxu0 0.0
        %3960 = vmatmul.mubr.f32.gmra.mrb[0].mxu0 %v3756
        %v3961 = vpop.f32.mrb[0].mxu0
        %v3962 = vadd.f32 %v3687, %v3961
        %v3963 = vpop.f32.mrb[0].mxu0
        %3964 = vmatprep.mubr.f32.mxu0 0.0
        %3965 = vmatmul.mubr.f32.gmra.mrb[0].mxu0 %v3759
        %v3966 = vpop.f32.mrb[0].mxu0
        %v3967 = vadd.f32 %v3687, %v3966
        %v3968 = vpop.f32.mrb[0].mxu0
        %3969 = vmatprep.mubr.f32.mxu0 0.0
        %3970 = vmatmul.mubr.f32.gmra.mrb[0].mxu0 %v3762
        %v3971 = vpop.f32.mrb[0].mxu0
        %v3972 = vadd.f32 %v3687, %v3971
        %v3973 = vpop.f32.mrb[0].mxu0
        %3974 = vmatprep.mubr.f32.mxu0 0.0
        %3975 = vmatmul.mubr.f32.gmra.mrb[0].mxu0 %v3765
        %v3976 = vpop.f32.mrb[0].mxu0
        %v3977 = vadd.f32 %v3687, %v3976
        %v3978 = vpop.f32.mrb[0].mxu0
        %3979 = vmatprep.mubr.f32.mxu0 0.0
        %3980 = vmatmul.mubr.f32.gmra.mrb[0].mxu0 %v3768
        %v3981 = vpop.f32.mrb[0].mxu0
        %v3982 = vadd.f32 %v3687, %v3981
        %v3983 = vpop.f32.mrb[0].mxu0
        %3984 = vmatprep.mubr.f32.mxu0 0.0
        %3985 = vmatmul.mubr.f32.gmra.mrb[0].mxu0 %v3771
        %v3986 = vpop.f32.mrb[0].mxu0
        %v3987 = vadd.f32 %v3687, %v3986
        %v3988 = vpop.f32.mrb[0].mxu0
        %3989 = vmatprep.mubr.f32.mxu0 0.0
        %3990 = vmatmul.mubr.f32.gmra.mrb[0].mxu0 %v3774
        %v3991 = vpop.f32.mrb[0].mxu0
        %v3992 = vadd.f32 %v3687, %v3991
        %v3993 = vpop.f32.mrb[0].mxu0
        %3994 = vmatprep.mubr.f32.mxu0 0.0
        %3995 = vmatmul.mubr.f32.gmra.mrb[0].mxu0 %v3777
        %v3996 = vpop.f32.mrb[0].mxu0
        %v3997 = vadd.f32 %v3687, %v3996
        %v3998 = vpop.f32.mrb[0].mxu0
        %3999 = vmatprep.mubr.f32.mxu0 0.0
        %4000 = vmatmul.mubr.f32.gmra.mrb[0].mxu0 %v3780
        %v4001 = vpop.f32.mrb[0].mxu0
        %v4002 = vadd.f32 %v3687, %v4001
        %v4003 = vpop.f32.mrb[0].mxu0
        %4004 = vmatprep.mubr.f32.mxu0 0.0
        %4005 = vmatmul.mubr.f32.gmra.mrb[0].mxu0 %v3783
        %v4006 = vpop.f32.mrb[0].mxu0
        %v4007 = vadd.f32 %v3687, %v4006
        %v4008 = vpop.f32.mrb[0].mxu0
        %4009 = vdwg.mxu0
        %4010 = vst.msk [vmem:[%s377] sm:$0xff] %vm1917, %v3852
        %4011 = vst.msk [vmem:[%s377 + $0x8] sm:$0xff] %vm1917, %v3857
        %4012 = vst.msk [vmem:[%s377 + $0x20] sm:$0xff] %vm1917, %v3862
        %4013 = vst.msk [vmem:[%s377 + $0x28] sm:$0xff] %vm1917, %v3867
        %4014 = vst.msk [vmem:[%s377 + $0x40] sm:$0xff] %vm1917, %v3872
        %4015 = vst.msk [vmem:[%s377 + $0x48] sm:$0xff] %vm1917, %v3877
        %4016 = vst.msk [vmem:[%s377 + $0x60] sm:$0xff] %vm1917, %v3882
        %4017 = vst.msk [vmem:[%s377 + $0x68] sm:$0xff] %vm1917, %v3887
        %4018 = vst.msk [vmem:[%s377 + $0x80] sm:$0xff] %vm1917, %v3892
        %4019 = vst.msk [vmem:[%s377 + $0x88] sm:$0xff] %vm1917, %v3897
        %4020 = vst.msk [vmem:[%s377 + $0xa0] sm:$0xff] %vm1917, %v3902
        %4021 = vst.msk [vmem:[%s377 + $0xa8] sm:$0xff] %vm1917, %v3907
        %4022 = vst.msk [vmem:[%s377 + $0xc0] sm:$0xff] %vm1917, %v3912
        %4023 = vst.msk [vmem:[%s377 + $0xc8] sm:$0xff] %vm1917, %v3917
        %4024 = vst.msk [vmem:[%s377 + $0xe0] sm:$0xff] %vm1917, %v3922
        %4025 = vst.msk [vmem:[%s377 + $0xe8] sm:$0xff] %vm1917, %v3927
        %4026 = vst.msk [vmem:[%s377 + $0x100] sm:$0xff] %vm1917, %v3932
        %4027 = vst.msk [vmem:[%s377 + $0x108] sm:$0xff] %vm1917, %v3937
        %4028 = vst.msk [vmem:[%s377 + $0x120] sm:$0xff] %vm1917, %v3942
        %4029 = vst.msk [vmem:[%s377 + $0x128] sm:$0xff] %vm1917, %v3947
        %4030 = vst.msk [vmem:[%s377 + $0x140] sm:$0xff] %vm1917, %v3952
        %4031 = vst.msk [vmem:[%s377 + $0x148] sm:$0xff] %vm1917, %v3957
        %4032 = vst.msk [vmem:[%s377 + $0x160] sm:$0xff] %vm1917, %v3962
        %4033 = vst.msk [vmem:[%s377 + $0x168] sm:$0xff] %vm1917, %v3967
        %4034 = vst.msk [vmem:[%s377 + $0x180] sm:$0xff] %vm1917, %v3972
        %4035 = vst.msk [vmem:[%s377 + $0x188] sm:$0xff] %vm1917, %v3977
        %4036 = vst.msk [vmem:[%s377 + $0x1a0] sm:$0xff] %vm1917, %v3982
        %4037 = vst.msk [vmem:[%s377 + $0x1a8] sm:$0xff] %vm1917, %v3987
        %4038 = vst.msk [vmem:[%s377 + $0x1c0] sm:$0xff] %vm1917, %v3992
        %4039 = vst.msk [vmem:[%s377 + $0x1c8] sm:$0xff] %vm1917, %v3997
        %4040 = vst.msk [vmem:[%s377 + $0x1e0] sm:$0xff] %vm1917, %v4002
        %4041 = vst.msk [vmem:[%s377 + $0x1e8] sm:$0xff] %vm1917, %v4007
        %s4042 = scalar_lea.vmem [#allocation12], 8
        %v4043 = vld [vmem:[%s4042] sm:$0xff]
        %v4044 = vld [vmem:[#allocation14] sm:$0x1]
        %v4046 = vlaneseq
        %v4047 = vshrl.u32 %v4046, 7
        %v4048 = vsub.s32 0, %v4047
        %v4049 = vrot.slane %v4044, %v4048
        %4051 = vmatprep.subr.mxu0 0.0
        %4052 = vmatpush1.msra.mxu0 %v4043
        %4053 = vmatprep.subr.mxu0 0.0
        %4054 = vmatpush1.msra.mxu0 0.0
        %4055 = vmatprep.subr.mxu0 0.0
        %4056 = vmatpush1.msra.mxu0 0.0
        %4057 = vmatprep.subr.mxu0 0.0
        %4058 = vmatpush1.msra.mxu0 0.0
        %4059 = vmatprep.subr.mxu0 0.0
        %4060 = vmatpush1.msra.mxu0 0.0
        %4061 = vmatprep.subr.mxu0 0.0
        %4062 = vmatpush1.msra.mxu0 0.0
        %4063 = vmatprep.subr.mxu0 0.0
        %4064 = vmatpush1.msra.mxu0 0.0
        %4065 = vmatprep.subr.mxu0 0.0
        %4066 = vmatpush1.msra.mxu0 0.0
        %4067 = vmatprep.subr.mxu0 0.0
        %4068 = vmatpush1.msra.mxu0 0.0
        %4069 = vmatprep.subr.mxu0 0.0
        %4070 = vmatpush1.msra.mxu0 0.0
        %4071 = vmatprep.subr.mxu0 0.0
        %4072 = vmatpush1.msra.mxu0 0.0
        %4073 = vmatprep.subr.mxu0 0.0
        %4074 = vmatpush1.msra.mxu0 0.0
        %4075 = vmatprep.subr.mxu0 0.0
        %4076 = vmatpush1.msra.mxu0 0.0
        %4077 = vmatprep.subr.mxu0 0.0
        %4078 = vmatpush1.msra.mxu0 0.0
        %4079 = vmatprep.subr.mxu0 0.0
        %4080 = vmatpush1.msra.mxu0 0.0
        %4081 = vmatprep.subr.mxu0 0.0
        %4082 = vmatpush1.msra.mxu0 0.0
        %4083 = vmatprep.subr.mxu0 0.0
        %4084 = vmatpush1.msra.mxu0 0.0
        %4085 = vmatprep.subr.mxu0 0.0
        %4086 = vmatpush1.msra.mxu0 0.0
        %4087 = vmatprep.subr.mxu0 0.0
        %4088 = vmatpush1.msra.mxu0 0.0
        %4089 = vmatprep.subr.mxu0 0.0
        %4090 = vmatpush1.msra.mxu0 0.0
        %4091 = vmatprep.subr.mxu0 0.0
        %4092 = vmatpush1.msra.mxu0 0.0
        %4093 = vmatprep.subr.mxu0 0.0
        %4094 = vmatpush1.msra.mxu0 0.0
        %4095 = vmatprep.subr.mxu0 0.0
        %4096 = vmatpush1.msra.mxu0 0.0
        %4097 = vmatprep.subr.mxu0 0.0
        %4098 = vmatpush1.msra.mxu0 0.0
        %4099 = vmatprep.subr.mxu0 0.0
        %4100 = vmatpush1.msra.mxu0 0.0
        %4101 = vmatprep.subr.mxu0 0.0
        %4102 = vmatpush1.msra.mxu0 0.0
        %4103 = vmatprep.subr.mxu0 0.0
        %4104 = vmatpush1.msra.mxu0 0.0
        %4105 = vmatprep.subr.mxu0 0.0
        %4106 = vmatpush1.msra.mxu0 0.0
        %4107 = vmatprep.subr.mxu0 0.0
        %4108 = vmatpush1.msra.mxu0 0.0
        %4109 = vmatprep.subr.mxu0 0.0
        %4110 = vmatpush1.msra.mxu0 0.0
        %4111 = vmatprep.subr.mxu0 0.0
        %4112 = vmatpush1.msra.mxu0 0.0
        %4113 = vmatprep.subr.mxu0 0.0
        %4114 = vmatpush1.msra.mxu0 0.0
        %4115 = vmatprep.mubr.f32.mxu0 0.0
        %4116 = vmatmul.mubr.f32.gmra.mrb[0].mxu0 %v3690
        %v4117 = vpop.f32.mrb[0].mxu0
        %v4118 = vadd.f32 %v4049, %v4117
        %v4119 = vpop.f32.mrb[0].mxu0
        %4120 = vmatprep.mubr.f32.mxu0 0.0
        %4121 = vmatmul.mubr.f32.gmra.mrb[0].mxu0 %v3693
        %v4122 = vpop.f32.mrb[0].mxu0
        %v4123 = vadd.f32 %v4049, %v4122
        %v4124 = vpop.f32.mrb[0].mxu0
        %4125 = vmatprep.mubr.f32.mxu0 0.0
        %4126 = vmatmul.mubr.f32.gmra.mrb[0].mxu0 %v3696
        %v4127 = vpop.f32.mrb[0].mxu0
        %v4128 = vadd.f32 %v4049, %v4127
        %v4129 = vpop.f32.mrb[0].mxu0
        %4130 = vmatprep.mubr.f32.mxu0 0.0
        %4131 = vmatmul.mubr.f32.gmra.mrb[0].mxu0 %v3699
        %v4132 = vpop.f32.mrb[0].mxu0
        %v4133 = vadd.f32 %v4049, %v4132
        %v4134 = vpop.f32.mrb[0].mxu0
        %4135 = vmatprep.mubr.f32.mxu0 0.0
        %4136 = vmatmul.mubr.f32.gmra.mrb[0].mxu0 %v3702
        %v4137 = vpop.f32.mrb[0].mxu0
        %v4138 = vadd.f32 %v4049, %v4137
        %v4139 = vpop.f32.mrb[0].mxu0
        %4140 = vmatprep.mubr.f32.mxu0 0.0
        %4141 = vmatmul.mubr.f32.gmra.mrb[0].mxu0 %v3705
        %v4142 = vpop.f32.mrb[0].mxu0
        %v4143 = vadd.f32 %v4049, %v4142
        %v4144 = vpop.f32.mrb[0].mxu0
        %4145 = vmatprep.mubr.f32.mxu0 0.0
        %4146 = vmatmul.mubr.f32.gmra.mrb[0].mxu0 %v3708
        %v4147 = vpop.f32.mrb[0].mxu0
        %v4148 = vadd.f32 %v4049, %v4147
        %v4149 = vpop.f32.mrb[0].mxu0
        %4150 = vmatprep.mubr.f32.mxu0 0.0
        %4151 = vmatmul.mubr.f32.gmra.mrb[0].mxu0 %v3711
        %v4152 = vpop.f32.mrb[0].mxu0
        %v4153 = vadd.f32 %v4049, %v4152
        %v4154 = vpop.f32.mrb[0].mxu0
        %4155 = vmatprep.mubr.f32.mxu0 0.0
        %4156 = vmatmul.mubr.f32.gmra.mrb[0].mxu0 %v3714
        %v4157 = vpop.f32.mrb[0].mxu0
        %v4158 = vadd.f32 %v4049, %v4157
        %v4159 = vpop.f32.mrb[0].mxu0
        %4160 = vmatprep.mubr.f32.mxu0 0.0
        %4161 = vmatmul.mubr.f32.gmra.mrb[0].mxu0 %v3717
        %v4162 = vpop.f32.mrb[0].mxu0
        %v4163 = vadd.f32 %v4049, %v4162
        %v4164 = vpop.f32.mrb[0].mxu0
        %4165 = vmatprep.mubr.f32.mxu0 0.0
        %4166 = vmatmul.mubr.f32.gmra.mrb[0].mxu0 %v3720
        %v4167 = vpop.f32.mrb[0].mxu0
        %v4168 = vadd.f32 %v4049, %v4167
        %v4169 = vpop.f32.mrb[0].mxu0
        %4170 = vmatprep.mubr.f32.mxu0 0.0
        %4171 = vmatmul.mubr.f32.gmra.mrb[0].mxu0 %v3723
        %v4172 = vpop.f32.mrb[0].mxu0
        %v4173 = vadd.f32 %v4049, %v4172
        %v4174 = vpop.f32.mrb[0].mxu0
        %4175 = vmatprep.mubr.f32.mxu0 0.0
        %4176 = vmatmul.mubr.f32.gmra.mrb[0].mxu0 %v3726
        %v4177 = vpop.f32.mrb[0].mxu0
        %v4178 = vadd.f32 %v4049, %v4177
        %v4179 = vpop.f32.mrb[0].mxu0
        %4180 = vmatprep.mubr.f32.mxu0 0.0
        %4181 = vmatmul.mubr.f32.gmra.mrb[0].mxu0 %v3729
        %v4182 = vpop.f32.mrb[0].mxu0
        %v4183 = vadd.f32 %v4049, %v4182
        %v4184 = vpop.f32.mrb[0].mxu0
        %4185 = vmatprep.mubr.f32.mxu0 0.0
        %4186 = vmatmul.mubr.f32.gmra.mrb[0].mxu0 %v3732
        %v4187 = vpop.f32.mrb[0].mxu0
        %v4188 = vadd.f32 %v4049, %v4187
        %v4189 = vpop.f32.mrb[0].mxu0
        %4190 = vmatprep.mubr.f32.mxu0 0.0
        %4191 = vmatmul.mubr.f32.gmra.mrb[0].mxu0 %v3735
        %v4192 = vpop.f32.mrb[0].mxu0
        %v4193 = vadd.f32 %v4049, %v4192
        %v4194 = vpop.f32.mrb[0].mxu0
        %4195 = vmatprep.mubr.f32.mxu0 0.0
        %4196 = vmatmul.mubr.f32.gmra.mrb[0].mxu0 %v3738
        %v4197 = vpop.f32.mrb[0].mxu0
        %v4198 = vadd.f32 %v4049, %v4197
        %v4199 = vpop.f32.mrb[0].mxu0
        %4200 = vmatprep.mubr.f32.mxu0 0.0
        %4201 = vmatmul.mubr.f32.gmra.mrb[0].mxu0 %v3741
        %v4202 = vpop.f32.mrb[0].mxu0
        %v4203 = vadd.f32 %v4049, %v4202
        %v4204 = vpop.f32.mrb[0].mxu0
        %4205 = vmatprep.mubr.f32.mxu0 0.0
        %4206 = vmatmul.mubr.f32.gmra.mrb[0].mxu0 %v3744
        %v4207 = vpop.f32.mrb[0].mxu0
        %v4208 = vadd.f32 %v4049, %v4207
        %v4209 = vpop.f32.mrb[0].mxu0
        %4210 = vmatprep.mubr.f32.mxu0 0.0
        %4211 = vmatmul.mubr.f32.gmra.mrb[0].mxu0 %v3747
        %v4212 = vpop.f32.mrb[0].mxu0
        %v4213 = vadd.f32 %v4049, %v4212
        %v4214 = vpop.f32.mrb[0].mxu0
        %4215 = vmatprep.mubr.f32.mxu0 0.0
        %4216 = vmatmul.mubr.f32.gmra.mrb[0].mxu0 %v3750
        %v4217 = vpop.f32.mrb[0].mxu0
        %v4218 = vadd.f32 %v4049, %v4217
        %v4219 = vpop.f32.mrb[0].mxu0
        %4220 = vmatprep.mubr.f32.mxu0 0.0
        %4221 = vmatmul.mubr.f32.gmra.mrb[0].mxu0 %v3753
        %v4222 = vpop.f32.mrb[0].mxu0
        %v4223 = vadd.f32 %v4049, %v4222
        %v4224 = vpop.f32.mrb[0].mxu0
        %4225 = vmatprep.mubr.f32.mxu0 0.0
        %4226 = vmatmul.mubr.f32.gmra.mrb[0].mxu0 %v3756
        %v4227 = vpop.f32.mrb[0].mxu0
        %v4228 = vadd.f32 %v4049, %v4227
        %v4229 = vpop.f32.mrb[0].mxu0
        %4230 = vmatprep.mubr.f32.mxu0 0.0
        %4231 = vmatmul.mubr.f32.gmra.mrb[0].mxu0 %v3759
        %v4232 = vpop.f32.mrb[0].mxu0
        %v4233 = vadd.f32 %v4049, %v4232
        %v4234 = vpop.f32.mrb[0].mxu0
        %4235 = vmatprep.mubr.f32.mxu0 0.0
        %4236 = vmatmul.mubr.f32.gmra.mrb[0].mxu0 %v3762
        %v4237 = vpop.f32.mrb[0].mxu0
        %v4238 = vadd.f32 %v4049, %v4237
        %v4239 = vpop.f32.mrb[0].mxu0
        %4240 = vmatprep.mubr.f32.mxu0 0.0
        %4241 = vmatmul.mubr.f32.gmra.mrb[0].mxu0 %v3765
        %v4242 = vpop.f32.mrb[0].mxu0
        %v4243 = vadd.f32 %v4049, %v4242
        %v4244 = vpop.f32.mrb[0].mxu0
        %4245 = vmatprep.mubr.f32.mxu0 0.0
        %4246 = vmatmul.mubr.f32.gmra.mrb[0].mxu0 %v3768
        %v4247 = vpop.f32.mrb[0].mxu0
        %v4248 = vadd.f32 %v4049, %v4247
        %v4249 = vpop.f32.mrb[0].mxu0
        %4250 = vmatprep.mubr.f32.mxu0 0.0
        %4251 = vmatmul.mubr.f32.gmra.mrb[0].mxu0 %v3771
        %v4252 = vpop.f32.mrb[0].mxu0
        %v4253 = vadd.f32 %v4049, %v4252
        %v4254 = vpop.f32.mrb[0].mxu0
        %4255 = vmatprep.mubr.f32.mxu0 0.0
        %4256 = vmatmul.mubr.f32.gmra.mrb[0].mxu0 %v3774
        %v4257 = vpop.f32.mrb[0].mxu0
        %v4258 = vadd.f32 %v4049, %v4257
        %v4259 = vpop.f32.mrb[0].mxu0
        %4260 = vmatprep.mubr.f32.mxu0 0.0
        %4261 = vmatmul.mubr.f32.gmra.mrb[0].mxu0 %v3777
        %v4262 = vpop.f32.mrb[0].mxu0
        %v4263 = vadd.f32 %v4049, %v4262
        %v4264 = vpop.f32.mrb[0].mxu0
        %4265 = vmatprep.mubr.f32.mxu0 0.0
        %4266 = vmatmul.mubr.f32.gmra.mrb[0].mxu0 %v3780
        %v4267 = vpop.f32.mrb[0].mxu0
        %v4268 = vadd.f32 %v4049, %v4267
        %v4269 = vpop.f32.mrb[0].mxu0
        %4270 = vmatprep.mubr.f32.mxu0 0.0
        %4271 = vmatmul.mubr.f32.gmra.mrb[0].mxu0 %v3783
        %v4272 = vpop.f32.mrb[0].mxu0
        %v4273 = vadd.f32 %v4049, %v4272
        %v4274 = vpop.f32.mrb[0].mxu0
        %4275 = vdwg.mxu0
        %s4276 = scalar_lea.vmem %s377, 16 [#allocation15]
        %4277 = vst.msk [vmem:[%s4276] sm:$0xff] %vm1917, %v4118
        %4278 = vst.msk [vmem:[%s4276 + $0x8] sm:$0xff] %vm1917, %v4123
        %4279 = vst.msk [vmem:[%s4276 + $0x20] sm:$0xff] %vm1917, %v4128
        %4280 = vst.msk [vmem:[%s4276 + $0x28] sm:$0xff] %vm1917, %v4133
        %4281 = vst.msk [vmem:[%s4276 + $0x40] sm:$0xff] %vm1917, %v4138
        %4282 = vst.msk [vmem:[%s4276 + $0x48] sm:$0xff] %vm1917, %v4143
        %4283 = vst.msk [vmem:[%s4276 + $0x60] sm:$0xff] %vm1917, %v4148
        %4284 = vst.msk [vmem:[%s4276 + $0x68] sm:$0xff] %vm1917, %v4153
        %4285 = vst.msk [vmem:[%s4276 + $0x80] sm:$0xff] %vm1917, %v4158
        %4286 = vst.msk [vmem:[%s4276 + $0x88] sm:$0xff] %vm1917, %v4163
        %4287 = vst.msk [vmem:[%s4276 + $0xa0] sm:$0xff] %vm1917, %v4168
        %4288 = vst.msk [vmem:[%s4276 + $0xa8] sm:$0xff] %vm1917, %v4173
        %4289 = vst.msk [vmem:[%s4276 + $0xc0] sm:$0xff] %vm1917, %v4178
        %4290 = vst.msk [vmem:[%s4276 + $0xc8] sm:$0xff] %vm1917, %v4183
        %4291 = vst.msk [vmem:[%s4276 + $0xe0] sm:$0xff] %vm1917, %v4188
        %4292 = vst.msk [vmem:[%s4276 + $0xe8] sm:$0xff] %vm1917, %v4193
        %4293 = vst.msk [vmem:[%s4276 + $0x100] sm:$0xff] %vm1917, %v4198
        %4294 = vst.msk [vmem:[%s4276 + $0x108] sm:$0xff] %vm1917, %v4203
        %4295 = vst.msk [vmem:[%s4276 + $0x120] sm:$0xff] %vm1917, %v4208
        %4296 = vst.msk [vmem:[%s4276 + $0x128] sm:$0xff] %vm1917, %v4213
        %4297 = vst.msk [vmem:[%s4276 + $0x140] sm:$0xff] %vm1917, %v4218
        %4298 = vst.msk [vmem:[%s4276 + $0x148] sm:$0xff] %vm1917, %v4223
        %4299 = vst.msk [vmem:[%s4276 + $0x160] sm:$0xff] %vm1917, %v4228
        %4300 = vst.msk [vmem:[%s4276 + $0x168] sm:$0xff] %vm1917, %v4233
        %4301 = vst.msk [vmem:[%s4276 + $0x180] sm:$0xff] %vm1917, %v4238
        %4302 = vst.msk [vmem:[%s4276 + $0x188] sm:$0xff] %vm1917, %v4243
        %4303 = vst.msk [vmem:[%s4276 + $0x1a0] sm:$0xff] %vm1917, %v4248
        %4304 = vst.msk [vmem:[%s4276 + $0x1a8] sm:$0xff] %vm1917, %v4253
        %4305 = vst.msk [vmem:[%s4276 + $0x1c0] sm:$0xff] %vm1917, %v4258
        %4306 = vst.msk [vmem:[%s4276 + $0x1c8] sm:$0xff] %vm1917, %v4263
        %4307 = vst.msk [vmem:[%s4276 + $0x1e0] sm:$0xff] %vm1917, %v4268
        %4308 = vst.msk [vmem:[%s4276 + $0x1e8] sm:$0xff] %vm1917, %v4273
        %s4309 = sand.u32 %s187, 1
        %s4310 = scalar_lea.sflag [#allocation5], %s4309
        %s4311 = sand.u32 %s187, 1
        %s4312 = smul.addr %s4311, 512
        %s4313 = scalar_lea.vmem [#allocation15], %s4312
        // Predicated region
        $region77: #{upblock_forward.1} parent=47 // pred_check
          %p4314 = pneg %p197
        $region78: #{upblock_forward.1} parent=47 // pred_check_branch
          %4316 = sbr.rel (%p4314) target = $region80
        $region79: #{upblock_forward.1} parent=47 // pred_region
          %s4318 = ssub.s32 8192, 8192
          %4319 = vsyncadd %s4310, %s4318
          %s4320 = smul.addr %s27, 64
          %s4321 = smul.addr %s4320, 128
          %s4322 = scalar_lea.hbm %s7, %s4321
          %s4323 = sshll.u32 %s4313, 4
          %s4324 = int_to_ptr.vmem [resolvable:$true] %s4323
          %4329 = dma.vmem_to_hbm [thread:$0]  %s4324, 8192, %s4322, %s4310, 128, 128, 8
        $region80: #{upblock_forward.1} parent=47 // pred_fallthru
          _
      $region48: #{upblock_forward.1} parent=5 // pred_fallthru
        _
      %p4330 = scmp.le.s32.totalorder 2, %s22
      // Predicated region
      $region81: #{upblock_forward.1} parent=5 // pred_check
        %p4331 = pneg %p4330
      $region82: #{upblock_forward.1} parent=5 // pred_check_branch
        %4333 = sbr.rel (%p4331) target = $region84
      $region83: #{upblock_forward.1} parent=5 // pred_region
        %s4334 = ssub.s32 %s22, 2
        // Predicated region
        $region85: #{upblock_forward.1} parent=83 // pred_check
          %p4335 = pneg %p203
        $region86: #{upblock_forward.1} parent=83 // pred_check_branch
          %4337 = sbr.rel (%p4335) target = $region88
        $region87: #{upblock_forward.1} parent=83 // pred_region
          %s4338 = sand.u32 %s188, 1
          %s4339 = scalar_lea.sflag [#allocation5], %s4338
          %s4340 = sand.u32 %s188, 1
          %s4341 = smul.addr %s4340, 512
          %s4342 = scalar_lea.vmem [#allocation15], %s4341
          %4343 = dma.done %s4339, 8192
        $region88: #{upblock_forward.1} parent=83 // pred_fallthru
          _
      $region84: #{upblock_forward.1} parent=5 // pred_fallthru
        _
    $region6: #{upblock_forward.1} parent=1 // loop_footer
      %s26 = sadd.s32 1, %s22
    $region7: #{upblock_forward.1} parent=1 // loop_footer_branch
      %21 = sbr.rel target = $region3
    $region8: #{upblock_forward.1} parent=1 // loop_exit
      _
    %4344 = vsyncpa [#allocation4], 1
    %s4345 = scalar_lea.sflag [#allocation4], 1
    %4346 = vsyncpa %s4345, 1
    %4347 = vsyncpa [#allocation7], 1
    %4348 = vsyncpa [#allocation10], 1
    %4349 = vsyncpa [#allocation13], 1
    %4350 = vsyncpa [#allocation5], 1
    %s4351 = scalar_lea.sflag [#allocation5], 1
    %4352 = vsyncpa %s4351, 1

</llo_original>
